<compile_context>
chip_gen: v7x
topology: tpu7x:2x2x1
jax: 0.10.0
libtpu: 0.0.40
codegen_flags: <defaults>
</compile_context>

<pallas_src>
import math

import jax
import jax.numpy as jnp
from jax.experimental import pallas as pl
from jax.experimental.pallas import tpu as pltpu

HIDDEN = 128

_VMEM = pl.BlockSpec(memory_space=pltpu.MemorySpace.VMEM)


def _round_up(x, m):
    return ((x + m - 1) // m) * m


# ---------------------------------------------------------------------------
# Fused kernel: (fc1-folded) LSTM stack -> (fc2-folded) value head
# ---------------------------------------------------------------------------
def _make_fused_kernel(num_layers, L, Bp, H, has_state):
    def kernel(*refs):
        it = iter(refs)
        s_ref = next(it)                       # (L*Bp, Dp) bf16, time-major rows
        lstm_refs = [(next(it), next(it), next(it)) for _ in range(num_layers)]
        #   layer 0: w_in (Dp, 4H) bf16 (fc1 folded in), others (H, 4H) bf16
        #   whh (H, 4H) bf16, b (1, 4H) f32, gate order i|f|o|g
        wh_ref = next(it)                      # (H, H) bf16  (col 0 = fused value head)
        bh_ref = next(it)                      # (1, H) f32
        if has_state:
            h0_ref = next(it)                  # (num_layers, Bp, H) f32
            c0_ref = next(it)                  # (num_layers, Bp, H) f32
        out_ref = next(it)                     # (Bp, H) f32
        h_out_ref = next(it)                   # (num_layers, Bp, H) f32
        c_out_ref = next(it)                   # (num_layers, Bp, H) f32
        seq_ref = next(it)                     # scratch (L*Bp, H) bf16

        layer_in = s_ref[...]                  # bf16, row = t*Bp + b

        h = None
        c = None
        for layer, (win_ref, whh_ref, b_ref) in enumerate(lstm_refs):
            # Hoisted input projection: one big matmul instead of L small ones.
            xproj = (
                jnp.dot(layer_in, win_ref[...], preferred_element_type=jnp.float32)
                + b_ref[...]
            )                                  # (L*Bp, 4H) f32
            whh = whh_ref[...]                 # bf16

            if has_state:
                h = h0_ref[layer]
                c = c0_ref[layer]

            for t in range(L):                 # static unroll (small L)
                x_part = xproj[t * Bp:(t + 1) * Bp, :]
                if (not has_state) and t == 0:
                    gates = x_part             # h0 == 0: skip h @ W_hh
                else:
                    gates = x_part + jnp.dot(
                        h.astype(jnp.bfloat16), whh,
                        preferred_element_type=jnp.float32)
                ifo = jax.nn.sigmoid(gates[:, : 3 * H])    # one EUP slab: i|f|o
                g = jnp.tanh(gates[:, 3 * H:])             # one EUP slab: g
                if (not has_state) and t == 0:
                    c = ifo[:, :H] * g                     # c0 == 0: skip f*c
                else:
                    c = ifo[:, H:2 * H] * c + ifo[:, :H] * g
                h = ifo[:, 2 * H:3 * H] * jnp.tanh(c)
                if layer + 1 < num_layers:
                    seq_ref[pl.ds(t * Bp, Bp), :] = h.astype(jnp.bfloat16)

            h_out_ref[layer] = h
            c_out_ref[layer] = c
            if layer + 1 < num_layers:
                layer_in = seq_ref[...]        # contiguous (L*Bp, H) bf16

        # Fused fc2 + value head (padded to 128 lanes; column 0 is real).
        out_ref[...] = (
            jnp.dot(h.astype(jnp.bfloat16), wh_ref[...],
                    preferred_element_type=jnp.float32)
            + bh_ref[...]
        )

    return kernel


# ---------------------------------------------------------------------------
# Parameter init (PyTorch-layout, gate order i|f|g|o) + kernel-ready prep
# ---------------------------------------------------------------------------
def init_raw_params(key, state_dim, layer_num, hidden=HIDDEN):
    ks = jax.random.split(key, 6 + 4 * layer_num)
    p = {}
    k1 = 1.0 / math.sqrt(state_dim)
    p["w1"] = jax.random.uniform(ks[0], (state_dim, hidden), jnp.float32, -k1, k1)
    p["b1"] = jax.random.uniform(ks[1], (hidden,), jnp.float32, -k1, k1)
    kh = 1.0 / math.sqrt(hidden)
    p["w2"] = jax.random.uniform(ks[2], (hidden, hidden), jnp.float32, -kh, kh)
    p["b2"] = jax.random.uniform(ks[3], (hidden,), jnp.float32, -kh, kh)
    p["wl"] = jax.random.uniform(ks[4], (hidden, 1), jnp.float32, -kh, kh)
    p["bl"] = jax.random.uniform(ks[5], (1,), jnp.float32, -kh, kh)
    p["lstm"] = []
    for layer in range(layer_num):
        kk = ks[6 + 4 * layer: 10 + 4 * layer]
        wih = jax.random.uniform(kk[0], (hidden, 4 * hidden), jnp.float32, -kh, kh)
        whh = jax.random.uniform(kk[1], (hidden, 4 * hidden), jnp.float32, -kh, kh)
        b_ih = jax.random.uniform(kk[2], (4 * hidden,), jnp.float32, -kh, kh)
        b_hh = jax.random.uniform(kk[3], (4 * hidden,), jnp.float32, -kh, kh)
        p["lstm"].append((wih, whh, b_ih, b_hh))
    return p


def _reorder_gates(w):
    # PyTorch gate order (i, f, g, o)  ->  kernel order (i, f, o, g)
    i, f, g, o = jnp.split(w, 4, axis=-1)
    return jnp.concatenate([i, f, o, g], axis=-1)


def prepare_kernel_params(raw):
    H = HIDDEN
    D = raw["w1"].shape[0]
    Dp = max(8, _round_up(D, 8))
    kp = {"lstm": []}
    for layer, (wih, whh, b_ih, b_hh) in enumerate(raw["lstm"]):
        wih_r = _reorder_gates(wih)
        whh_r = _reorder_gates(whh)
        b_r = _reorder_gates((b_ih + b_hh).reshape(1, 4 * H))
        if layer == 0:
            # Fold fc1: (x@w1+b1)@wih + b == x@(w1@wih) + (b1@wih + b)
            w_in = jnp.pad(raw["w1"], ((0, Dp - D), (0, 0))) @ wih_r   # (Dp, 4H)
            b_in = raw["b1"].reshape(1, H) @ wih_r + b_r               # (1, 4H)
        else:
            w_in = wih_r
            b_in = b_r
        kp["lstm"].append((
            w_in.astype(jnp.bfloat16),
            whh_r.astype(jnp.bfloat16),
            b_in.astype(jnp.float32),
        ))
    # Fold fc2 into value head: (h@w2+b2)@wl + bl == h@(w2@wl) + (b2@wl + bl).
    w_head = raw["w2"] @ raw["wl"]                                      # (H, 1)
    b_head = raw["b2"].reshape(1, H) @ raw["wl"] + raw["bl"].reshape(1, 1)
    # Pad the 1-wide head to a lane-dense 128-wide output (col 0 is real).
    kp["w_head"] = jnp.pad(w_head, ((0, 0), (0, H - 1))).astype(jnp.bfloat16)
    kp["b_head"] = jnp.pad(b_head, ((0, 0), (0, H - 1))).astype(jnp.float32)
    return kp


# ---------------------------------------------------------------------------
# Forward wrappers
# ---------------------------------------------------------------------------
def _forward_full_impl(kparams, s, state):
    s = jnp.asarray(s, jnp.float32)
    if s.ndim == 2:
        s = s[:, None, :]
    B, L, D = s.shape
    H = HIDDEN
    num_layers = len(kparams["lstm"])
    Bp = max(8, _round_up(B, 8))
    Dp = kparams["lstm"][0][0].shape[0]

    # time-major, zero-pad batch (to 8 sublanes) and feature (to Dp), flatten
    s_tm = jnp.transpose(s, (1, 0, 2))                            # (L, B, D)
    s_tm = jnp.pad(s_tm, ((0, 0), (0, Bp - B), (0, Dp - D)))
    s_flat = s_tm.reshape(L * Bp, Dp).astype(jnp.bfloat16)

    has_state = state is not None
    inputs = [s_flat]
    for (w_in, whh, b) in kparams["lstm"]:
        inputs += [w_in, whh, b]
    inputs += [kparams["w_head"], kparams["b_head"]]
    if has_state:
        h0 = jnp.pad(
            jnp.transpose(jnp.asarray(state["h"], jnp.float32), (1, 0, 2)),
            ((0, 0), (0, Bp - B), (0, 0)))
        c0 = jnp.pad(
            jnp.transpose(jnp.asarray(state["c"], jnp.float32), (1, 0, 2)),
            ((0, 0), (0, Bp - B), (0, 0)))
        inputs += [h0, c0]

    out, hT, cT = pl.pallas_call(
        _make_fused_kernel(num_layers, L, Bp, H, has_state),
        out_shape=(
            jax.ShapeDtypeStruct((Bp, H), jnp.float32),
            jax.ShapeDtypeStruct((num_layers, Bp, H), jnp.float32),
            jax.ShapeDtypeStruct((num_layers, Bp, H), jnp.float32),
        ),
        in_specs=[_VMEM] * len(inputs),
        out_specs=(_VMEM, _VMEM, _VMEM),
        scratch_shapes=[pltpu.VMEM((L * Bp, H), jnp.bfloat16)],
        compiler_params=pltpu.CompilerParams(vmem_limit_bytes=32 * 1024 * 1024),
    )(*inputs)

    value = out[:B, :1]                                           # (B, 1)
    h = jnp.transpose(hT, (1, 0, 2))[:B]                          # (B, layers, H)
    c = jnp.transpose(cT, (1, 0, 2))[:B]
    return value, h, c


_forward_full = jax.jit(_forward_full_impl)


def critic_forward(kparams, s, state=None):
    """Matches Critic.forward: returns only the value logits (B, 1)."""
    value, _, _ = _forward_full(kparams, s, state)
    return value


# ---------------------------------------------------------------------------
# Pure-JAX f32 reference (PyTorch gate order) for the sanity check
# ---------------------------------------------------------------------------
def critic_reference(raw, s, state=None):
    H = HIDDEN
    s = jnp.asarray(s, jnp.float32)
    if s.ndim == 2:
        s = s[:, None, :]
    B, L, D = s.shape
    x = s.reshape(B * L, D) @ raw["w1"] + raw["b1"]
    layer_in = x.reshape(B, L, H)
    hs, cs = [], []
    for layer, (wih, whh, b_ih, b_hh) in enumerate(raw["lstm"]):
        if state is None:
            h = jnp.zeros((B, H), jnp.float32)
            c = jnp.zeros((B, H), jnp.float32)
        else:
            h = state["h"][:, layer, :]
            c = state["c"][:, layer, :]
        ys = []
        for t in range(L):
            gates = layer_in[:, t, :] @ wih + h @ whh + b_ih + b_hh
            i = jax.nn.sigmoid(gates[:, 0:H])
            f = jax.nn.sigmoid(gates[:, H:2 * H])
            g = jnp.tanh(gates[:, 2 * H:3 * H])
            o = jax.nn.sigmoid(gates[:, 3 * H:4 * H])
            c = f * c + i * g
            h = o * jnp.tanh(c)
            ys.append(h)
        layer_in = jnp.stack(ys, axis=1)
        hs.append(h)
        cs.append(c)
    feat = hs[-1] @ raw["w2"] + raw["b2"]
    value = feat @ raw["wl"] + raw["bl"]
    return value, jnp.stack(hs, axis=1), jnp.stack(cs, axis=1)


if __name__ == "__main__":
    layer_num = 2
    state_dim = 4
    B, L = 2, 8

    key = jax.random.PRNGKey(0)
    kp_key, kx_key = jax.random.split(key)
    raw = init_raw_params(kp_key, state_dim, layer_num)
    kparams = prepare_kernel_params(raw)

    s = jax.random.normal(kx_key, (B, L, state_dim), jnp.float32)

    # bf16 matmuls -> looser tolerance than pure-f32 reference
    TOL = dict(atol=5e-2, rtol=5e-2)

    # step 1: no recurrent state
    value, h, c = _forward_full(kparams, s, None)
    jax.block_until_ready(value)

    ref_v, ref_h, ref_c = critic_reference(raw, s, None)
    assert value.shape == (B, 1)
    assert h.shape == (B, layer_num, HIDDEN)
    assert c.shape == (B, layer_num, HIDDEN)
    assert jnp.allclose(value, ref_v, **TOL)
    assert jnp.allclose(h, ref_h, **TOL)
    assert jnp.allclose(c, ref_c, **TOL)

    # step 2: carry the recurrent state forward (exercises the state path)
    state = {"h": h, "c": c}
    value2, h2, c2 = _forward_full(kparams, s, state)
    jax.block_until_ready(value2)
    ref_v2, ref_h2, ref_c2 = critic_reference(raw, s, state)
    assert jnp.allclose(value2, ref_v2, **TOL)
    assert jnp.allclose(h2, ref_h2, **TOL)
    assert jnp.allclose(c2, ref_c2, **TOL)

    # Critic.forward-equivalent API returns just the value
    v_only = critic_forward(kparams, s)
    jax.block_until_ready(v_only)
    assert jnp.allclose(v_only, ref_v, **TOL)

    print("KERNEL_OK")
</pallas_src>

<mosaic_0001>
module attributes {stable_mosaic.version = 11 : i64} {
  func.func @kernel(%arg0: memref<64x8xbf16, #tpu.memory_space<vmem>>, %arg1: memref<8x512xbf16, #tpu.memory_space<vmem>>, %arg2: memref<128x512xbf16, #tpu.memory_space<vmem>>, %arg3: memref<1x512xf32, #tpu.memory_space<vmem>>, %arg4: memref<128x512xbf16, #tpu.memory_space<vmem>>, %arg5: memref<128x512xbf16, #tpu.memory_space<vmem>>, %arg6: memref<1x512xf32, #tpu.memory_space<vmem>>, %arg7: memref<128x128xbf16, #tpu.memory_space<vmem>>, %arg8: memref<1x128xf32, #tpu.memory_space<vmem>>, %arg9: memref<8x128xf32, #tpu.memory_space<vmem>>, %arg10: memref<2x8x128xf32, #tpu.memory_space<vmem>>, %arg11: memref<2x8x128xf32, #tpu.memory_space<vmem>>, %arg12: memref<64x128xbf16, #tpu.memory_space<vmem>>) attributes {dimension_semantics = [], scalar_prefetch = 0 : i64, scratch_operands = 1 : i64, tpu.core_type = #tpu.core_type<tc>} {
    %c0 = arith.constant 0 : index
    %c0_0 = arith.constant 0 : index
    %0 = vector.load %arg0[%c0, %c0_0] : memref<64x8xbf16, #tpu.memory_space<vmem>>, vector<64x8xbf16>
    %c0_1 = arith.constant 0 : index
    %c0_2 = arith.constant 0 : index
    %1 = vector.load %arg1[%c0_1, %c0_2] : memref<8x512xbf16, #tpu.memory_space<vmem>>, vector<8x512xbf16>
    %cst = arith.constant dense<0.000000e+00> : vector<64x512xf32>
    %2 = tpu.matmul %0, %1, %cst {dimension_numbers = #tpu.dot_dimension_numbers<[1], [0], [0], [1], [0, 0, 1, 1], [], []>} : vector<64x8xbf16>, vector<8x512xbf16>, vector<64x512xf32> -> vector<64x512xf32>
    %c0_3 = arith.constant 0 : index
    %c0_4 = arith.constant 0 : index
    %3 = vector.load %arg3[%c0_3, %c0_4] : memref<1x512xf32, #tpu.memory_space<vmem>>, vector<1x512xf32>
    %4 = vector.broadcast %3 : vector<1x512xf32> to vector<64x512xf32>
    %5 = arith.addf %2, %4 : vector<64x512xf32>
    %c0_5 = arith.constant 0 : index
    %c0_6 = arith.constant 0 : index
    %6 = vector.load %arg2[%c0_5, %c0_6] : memref<128x512xbf16, #tpu.memory_space<vmem>>, vector<128x512xbf16>
    %7 = vector.extract_strided_slice %5 {offsets = [0, 0], sizes = [8, 512], strides = [1, 1]} : vector<64x512xf32> to vector<8x512xf32>
    %8 = vector.extract_strided_slice %7 {offsets = [0, 0], sizes = [8, 384], strides = [1, 1]} : vector<8x512xf32> to vector<8x384xf32>
    %9 = arith.negf %8 : vector<8x384xf32>
    %10 = math.exp %9 : vector<8x384xf32>
    %cst_7 = arith.constant 1.000000e+00 : f32
    %11 = vector.broadcast %cst_7 : f32 to vector<8x384xf32>
    %12 = arith.addf %11, %10 : vector<8x384xf32>
    %13 = arith.divf %11, %12 : vector<8x384xf32>
    %14 = vector.extract_strided_slice %7 {offsets = [0, 384], sizes = [8, 128], strides = [1, 1]} : vector<8x512xf32> to vector<8x128xf32>
    %15 = math.tanh %14 : vector<8x128xf32>
    %16 = vector.extract_strided_slice %13 {offsets = [0, 0], sizes = [8, 128], strides = [1, 1]} : vector<8x384xf32> to vector<8x128xf32>
    %17 = arith.mulf %16, %15 : vector<8x128xf32>
    %18 = vector.extract_strided_slice %13 {offsets = [0, 256], sizes = [8, 128], strides = [1, 1]} : vector<8x384xf32> to vector<8x128xf32>
    %19 = math.tanh %17 : vector<8x128xf32>
    %20 = arith.mulf %18, %19 : vector<8x128xf32>
    %21 = arith.truncf %20 : vector<8x128xf32> to vector<8x128xbf16>
    %c0_8 = arith.constant 0 : index
    %c0_9 = arith.constant 0 : index
    %22 = vector.load %arg12[%c0_8, %c0_9] : memref<64x128xbf16, #tpu.memory_space<vmem>>, vector<8x128xbf16>
    tpu.vector_store %arg12[%c0_8, %c0_9], %21 {strides = array<i32>} : memref<64x128xbf16, #tpu.memory_space<vmem>>, vector<8x128xbf16>,
    %23 = vector.extract_strided_slice %5 {offsets = [8, 0], sizes = [8, 512], strides = [1, 1]} : vector<64x512xf32> to vector<8x512xf32>
    %24 = arith.truncf %20 : vector<8x128xf32> to vector<8x128xbf16>
    %cst_10 = arith.constant dense<0.000000e+00> : vector<8x512xf32>
    %25 = tpu.matmul %24, %6, %cst_10 {dimension_numbers = #tpu.dot_dimension_numbers<[1], [0], [0], [1], [0, 0, 1, 1], [], []>} : vector<8x128xbf16>, vector<128x512xbf16>, vector<8x512xf32> -> vector<8x512xf32>
    %26 = arith.addf %23, %25 : vector<8x512xf32>
    %27 = vector.extract_strided_slice %26 {offsets = [0, 0], sizes = [8, 384], strides = [1, 1]} : vector<8x512xf32> to vector<8x384xf32>
    %28 = arith.negf %27 : vector<8x384xf32>
    %29 = math.exp %28 : vector<8x384xf32>
    %cst_11 = arith.constant 1.000000e+00 : f32
    %30 = vector.broadcast %cst_11 : f32 to vector<8x384xf32>
    %31 = arith.addf %30, %29 : vector<8x384xf32>
    %32 = arith.divf %30, %31 : vector<8x384xf32>
    %33 = vector.extract_strided_slice %26 {offsets = [0, 384], sizes = [8, 128], strides = [1, 1]} : vector<8x512xf32> to vector<8x128xf32>
    %34 = math.tanh %33 : vector<8x128xf32>
    %35 = vector.extract_strided_slice %32 {offsets = [0, 128], sizes = [8, 128], strides = [1, 1]} : vector<8x384xf32> to vector<8x128xf32>
    %36 = arith.mulf %35, %17 : vector<8x128xf32>
    %37 = vector.extract_strided_slice %32 {offsets = [0, 0], sizes = [8, 128], strides = [1, 1]} : vector<8x384xf32> to vector<8x128xf32>
    %38 = arith.mulf %37, %34 : vector<8x128xf32>
    %39 = arith.addf %36, %38 : vector<8x128xf32>
    %40 = vector.extract_strided_slice %32 {offsets = [0, 256], sizes = [8, 128], strides = [1, 1]} : vector<8x384xf32> to vector<8x128xf32>
    %41 = math.tanh %39 : vector<8x128xf32>
    %42 = arith.mulf %40, %41 : vector<8x128xf32>
    %43 = arith.truncf %42 : vector<8x128xf32> to vector<8x128xbf16>
    %c8 = arith.constant 8 : index
    %c0_12 = arith.constant 0 : index
    %44 = vector.load %arg12[%c8, %c0_12] : memref<64x128xbf16, #tpu.memory_space<vmem>>, vector<8x128xbf16>
    tpu.vector_store %arg12[%c8, %c0_12], %43 {strides = array<i32>} : memref<64x128xbf16, #tpu.memory_space<vmem>>, vector<8x128xbf16>,
    %45 = vector.extract_strided_slice %5 {offsets = [16, 0], sizes = [8, 512], strides = [1, 1]} : vector<64x512xf32> to vector<8x512xf32>
    %46 = arith.truncf %42 : vector<8x128xf32> to vector<8x128xbf16>
    %cst_13 = arith.constant dense<0.000000e+00> : vector<8x512xf32>
    %47 = tpu.matmul %46, %6, %cst_13 {dimension_numbers = #tpu.dot_dimension_numbers<[1], [0], [0], [1], [0, 0, 1, 1], [], []>} : vector<8x128xbf16>, vector<128x512xbf16>, vector<8x512xf32> -> vector<8x512xf32>
    %48 = arith.addf %45, %47 : vector<8x512xf32>
    %49 = vector.extract_strided_slice %48 {offsets = [0, 0], sizes = [8, 384], strides = [1, 1]} : vector<8x512xf32> to vector<8x384xf32>
    %50 = arith.negf %49 : vector<8x384xf32>
    %51 = math.exp %50 : vector<8x384xf32>
    %cst_14 = arith.constant 1.000000e+00 : f32
    %52 = vector.broadcast %cst_14 : f32 to vector<8x384xf32>
    %53 = arith.addf %52, %51 : vector<8x384xf32>
    %54 = arith.divf %52, %53 : vector<8x384xf32>
    %55 = vector.extract_strided_slice %48 {offsets = [0, 384], sizes = [8, 128], strides = [1, 1]} : vector<8x512xf32> to vector<8x128xf32>
    %56 = math.tanh %55 : vector<8x128xf32>
    %57 = vector.extract_strided_slice %54 {offsets = [0, 128], sizes = [8, 128], strides = [1, 1]} : vector<8x384xf32> to vector<8x128xf32>
    %58 = arith.mulf %57, %39 : vector<8x128xf32>
    %59 = vector.extract_strided_slice %54 {offsets = [0, 0], sizes = [8, 128], strides = [1, 1]} : vector<8x384xf32> to vector<8x128xf32>
    %60 = arith.mulf %59, %56 : vector<8x128xf32>
    %61 = arith.addf %58, %60 : vector<8x128xf32>
    %62 = vector.extract_strided_slice %54 {offsets = [0, 256], sizes = [8, 128], strides = [1, 1]} : vector<8x384xf32> to vector<8x128xf32>
    %63 = math.tanh %61 : vector<8x128xf32>
    %64 = arith.mulf %62, %63 : vector<8x128xf32>
    %65 = arith.truncf %64 : vector<8x128xf32> to vector<8x128xbf16>
    %c16 = arith.constant 16 : index
    %c0_15 = arith.constant 0 : index
    %66 = vector.load %arg12[%c16, %c0_15] : memref<64x128xbf16, #tpu.memory_space<vmem>>, vector<8x128xbf16>
    tpu.vector_store %arg12[%c16, %c0_15], %65 {strides = array<i32>} : memref<64x128xbf16, #tpu.memory_space<vmem>>, vector<8x128xbf16>,
    %67 = vector.extract_strided_slice %5 {offsets = [24, 0], sizes = [8, 512], strides = [1, 1]} : vector<64x512xf32> to vector<8x512xf32>
    %68 = arith.truncf %64 : vector<8x128xf32> to vector<8x128xbf16>
    %cst_16 = arith.constant dense<0.000000e+00> : vector<8x512xf32>
    %69 = tpu.matmul %68, %6, %cst_16 {dimension_numbers = #tpu.dot_dimension_numbers<[1], [0], [0], [1], [0, 0, 1, 1], [], []>} : vector<8x128xbf16>, vector<128x512xbf16>, vector<8x512xf32> -> vector<8x512xf32>
    %70 = arith.addf %67, %69 : vector<8x512xf32>
    %71 = vector.extract_strided_slice %70 {offsets = [0, 0], sizes = [8, 384], strides = [1, 1]} : vector<8x512xf32> to vector<8x384xf32>
    %72 = arith.negf %71 : vector<8x384xf32>
    %73 = math.exp %72 : vector<8x384xf32>
    %cst_17 = arith.constant 1.000000e+00 : f32
    %74 = vector.broadcast %cst_17 : f32 to vector<8x384xf32>
    %75 = arith.addf %74, %73 : vector<8x384xf32>
    %76 = arith.divf %74, %75 : vector<8x384xf32>
    %77 = vector.extract_strided_slice %70 {offsets = [0, 384], sizes = [8, 128], strides = [1, 1]} : vector<8x512xf32> to vector<8x128xf32>
    %78 = math.tanh %77 : vector<8x128xf32>
    %79 = vector.extract_strided_slice %76 {offsets = [0, 128], sizes = [8, 128], strides = [1, 1]} : vector<8x384xf32> to vector<8x128xf32>
    %80 = arith.mulf %79, %61 : vector<8x128xf32>
    %81 = vector.extract_strided_slice %76 {offsets = [0, 0], sizes = [8, 128], strides = [1, 1]} : vector<8x384xf32> to vector<8x128xf32>
    %82 = arith.mulf %81, %78 : vector<8x128xf32>
    %83 = arith.addf %80, %82 : vector<8x128xf32>
    %84 = vector.extract_strided_slice %76 {offsets = [0, 256], sizes = [8, 128], strides = [1, 1]} : vector<8x384xf32> to vector<8x128xf32>
    %85 = math.tanh %83 : vector<8x128xf32>
    %86 = arith.mulf %84, %85 : vector<8x128xf32>
    %87 = arith.truncf %86 : vector<8x128xf32> to vector<8x128xbf16>
    %c24 = arith.constant 24 : index
    %c0_18 = arith.constant 0 : index
    %88 = vector.load %arg12[%c24, %c0_18] : memref<64x128xbf16, #tpu.memory_space<vmem>>, vector<8x128xbf16>
    tpu.vector_store %arg12[%c24, %c0_18], %87 {strides = array<i32>} : memref<64x128xbf16, #tpu.memory_space<vmem>>, vector<8x128xbf16>,
    %89 = vector.extract_strided_slice %5 {offsets = [32, 0], sizes = [8, 512], strides = [1, 1]} : vector<64x512xf32> to vector<8x512xf32>
    %90 = arith.truncf %86 : vector<8x128xf32> to vector<8x128xbf16>
    %cst_19 = arith.constant dense<0.000000e+00> : vector<8x512xf32>
    %91 = tpu.matmul %90, %6, %cst_19 {dimension_numbers = #tpu.dot_dimension_numbers<[1], [0], [0], [1], [0, 0, 1, 1], [], []>} : vector<8x128xbf16>, vector<128x512xbf16>, vector<8x512xf32> -> vector<8x512xf32>
    %92 = arith.addf %89, %91 : vector<8x512xf32>
    %93 = vector.extract_strided_slice %92 {offsets = [0, 0], sizes = [8, 384], strides = [1, 1]} : vector<8x512xf32> to vector<8x384xf32>
    %94 = arith.negf %93 : vector<8x384xf32>
    %95 = math.exp %94 : vector<8x384xf32>
    %cst_20 = arith.constant 1.000000e+00 : f32
    %96 = vector.broadcast %cst_20 : f32 to vector<8x384xf32>
    %97 = arith.addf %96, %95 : vector<8x384xf32>
    %98 = arith.divf %96, %97 : vector<8x384xf32>
    %99 = vector.extract_strided_slice %92 {offsets = [0, 384], sizes = [8, 128], strides = [1, 1]} : vector<8x512xf32> to vector<8x128xf32>
    %100 = math.tanh %99 : vector<8x128xf32>
    %101 = vector.extract_strided_slice %98 {offsets = [0, 128], sizes = [8, 128], strides = [1, 1]} : vector<8x384xf32> to vector<8x128xf32>
    %102 = arith.mulf %101, %83 : vector<8x128xf32>
    %103 = vector.extract_strided_slice %98 {offsets = [0, 0], sizes = [8, 128], strides = [1, 1]} : vector<8x384xf32> to vector<8x128xf32>
    %104 = arith.mulf %103, %100 : vector<8x128xf32>
    %105 = arith.addf %102, %104 : vector<8x128xf32>
    %106 = vector.extract_strided_slice %98 {offsets = [0, 256], sizes = [8, 128], strides = [1, 1]} : vector<8x384xf32> to vector<8x128xf32>
    %107 = math.tanh %105 : vector<8x128xf32>
    %108 = arith.mulf %106, %107 : vector<8x128xf32>
    %109 = arith.truncf %108 : vector<8x128xf32> to vector<8x128xbf16>
    %c32 = arith.constant 32 : index
    %c0_21 = arith.constant 0 : index
    %110 = vector.load %arg12[%c32, %c0_21] : memref<64x128xbf16, #tpu.memory_space<vmem>>, vector<8x128xbf16>
    tpu.vector_store %arg12[%c32, %c0_21], %109 {strides = array<i32>} : memref<64x128xbf16, #tpu.memory_space<vmem>>, vector<8x128xbf16>,
    %111 = vector.extract_strided_slice %5 {offsets = [40, 0], sizes = [8, 512], strides = [1, 1]} : vector<64x512xf32> to vector<8x512xf32>
    %112 = arith.truncf %108 : vector<8x128xf32> to vector<8x128xbf16>
    %cst_22 = arith.constant dense<0.000000e+00> : vector<8x512xf32>
    %113 = tpu.matmul %112, %6, %cst_22 {dimension_numbers = #tpu.dot_dimension_numbers<[1], [0], [0], [1], [0, 0, 1, 1], [], []>} : vector<8x128xbf16>, vector<128x512xbf16>, vector<8x512xf32> -> vector<8x512xf32>
    %114 = arith.addf %111, %113 : vector<8x512xf32>
    %115 = vector.extract_strided_slice %114 {offsets = [0, 0], sizes = [8, 384], strides = [1, 1]} : vector<8x512xf32> to vector<8x384xf32>
    %116 = arith.negf %115 : vector<8x384xf32>
    %117 = math.exp %116 : vector<8x384xf32>
    %cst_23 = arith.constant 1.000000e+00 : f32
    %118 = vector.broadcast %cst_23 : f32 to vector<8x384xf32>
    %119 = arith.addf %118, %117 : vector<8x384xf32>
    %120 = arith.divf %118, %119 : vector<8x384xf32>
    %121 = vector.extract_strided_slice %114 {offsets = [0, 384], sizes = [8, 128], strides = [1, 1]} : vector<8x512xf32> to vector<8x128xf32>
    %122 = math.tanh %121 : vector<8x128xf32>
    %123 = vector.extract_strided_slice %120 {offsets = [0, 128], sizes = [8, 128], strides = [1, 1]} : vector<8x384xf32> to vector<8x128xf32>
    %124 = arith.mulf %123, %105 : vector<8x128xf32>
    %125 = vector.extract_strided_slice %120 {offsets = [0, 0], sizes = [8, 128], strides = [1, 1]} : vector<8x384xf32> to vector<8x128xf32>
    %126 = arith.mulf %125, %122 : vector<8x128xf32>
    %127 = arith.addf %124, %126 : vector<8x128xf32>
    %128 = vector.extract_strided_slice %120 {offsets = [0, 256], sizes = [8, 128], strides = [1, 1]} : vector<8x384xf32> to vector<8x128xf32>
    %129 = math.tanh %127 : vector<8x128xf32>
    %130 = arith.mulf %128, %129 : vector<8x128xf32>
    %131 = arith.truncf %130 : vector<8x128xf32> to vector<8x128xbf16>
    %c40 = arith.constant 40 : index
    %c0_24 = arith.constant 0 : index
    %132 = vector.load %arg12[%c40, %c0_24] : memref<64x128xbf16, #tpu.memory_space<vmem>>, vector<8x128xbf16>
    tpu.vector_store %arg12[%c40, %c0_24], %131 {strides = array<i32>} : memref<64x128xbf16, #tpu.memory_space<vmem>>, vector<8x128xbf16>,
    %133 = vector.extract_strided_slice %5 {offsets = [48, 0], sizes = [8, 512], strides = [1, 1]} : vector<64x512xf32> to vector<8x512xf32>
    %134 = arith.truncf %130 : vector<8x128xf32> to vector<8x128xbf16>
    %cst_25 = arith.constant dense<0.000000e+00> : vector<8x512xf32>
    %135 = tpu.matmul %134, %6, %cst_25 {dimension_numbers = #tpu.dot_dimension_numbers<[1], [0], [0], [1], [0, 0, 1, 1], [], []>} : vector<8x128xbf16>, vector<128x512xbf16>, vector<8x512xf32> -> vector<8x512xf32>
    %136 = arith.addf %133, %135 : vector<8x512xf32>
    %137 = vector.extract_strided_slice %136 {offsets = [0, 0], sizes = [8, 384], strides = [1, 1]} : vector<8x512xf32> to vector<8x384xf32>
    %138 = arith.negf %137 : vector<8x384xf32>
    %139 = math.exp %138 : vector<8x384xf32>
    %cst_26 = arith.constant 1.000000e+00 : f32
    %140 = vector.broadcast %cst_26 : f32 to vector<8x384xf32>
    %141 = arith.addf %140, %139 : vector<8x384xf32>
    %142 = arith.divf %140, %141 : vector<8x384xf32>
    %143 = vector.extract_strided_slice %136 {offsets = [0, 384], sizes = [8, 128], strides = [1, 1]} : vector<8x512xf32> to vector<8x128xf32>
    %144 = math.tanh %143 : vector<8x128xf32>
    %145 = vector.extract_strided_slice %142 {offsets = [0, 128], sizes = [8, 128], strides = [1, 1]} : vector<8x384xf32> to vector<8x128xf32>
    %146 = arith.mulf %145, %127 : vector<8x128xf32>
    %147 = vector.extract_strided_slice %142 {offsets = [0, 0], sizes = [8, 128], strides = [1, 1]} : vector<8x384xf32> to vector<8x128xf32>
    %148 = arith.mulf %147, %144 : vector<8x128xf32>
    %149 = arith.addf %146, %148 : vector<8x128xf32>
    %150 = vector.extract_strided_slice %142 {offsets = [0, 256], sizes = [8, 128], strides = [1, 1]} : vector<8x384xf32> to vector<8x128xf32>
    %151 = math.tanh %149 : vector<8x128xf32>
    %152 = arith.mulf %150, %151 : vector<8x128xf32>
    %153 = arith.truncf %152 : vector<8x128xf32> to vector<8x128xbf16>
    %c48 = arith.constant 48 : index
    %c0_27 = arith.constant 0 : index
    %154 = vector.load %arg12[%c48, %c0_27] : memref<64x128xbf16, #tpu.memory_space<vmem>>, vector<8x128xbf16>
    tpu.vector_store %arg12[%c48, %c0_27], %153 {strides = array<i32>} : memref<64x128xbf16, #tpu.memory_space<vmem>>, vector<8x128xbf16>,
    %155 = vector.extract_strided_slice %5 {offsets = [56, 0], sizes = [8, 512], strides = [1, 1]} : vector<64x512xf32> to vector<8x512xf32>
    %156 = arith.truncf %152 : vector<8x128xf32> to vector<8x128xbf16>
    %cst_28 = arith.constant dense<0.000000e+00> : vector<8x512xf32>
    %157 = tpu.matmul %156, %6, %cst_28 {dimension_numbers = #tpu.dot_dimension_numbers<[1], [0], [0], [1], [0, 0, 1, 1], [], []>} : vector<8x128xbf16>, vector<128x512xbf16>, vector<8x512xf32> -> vector<8x512xf32>
    %158 = arith.addf %155, %157 : vector<8x512xf32>
    %159 = vector.extract_strided_slice %158 {offsets = [0, 0], sizes = [8, 384], strides = [1, 1]} : vector<8x512xf32> to vector<8x384xf32>
    %160 = arith.negf %159 : vector<8x384xf32>
    %161 = math.exp %160 : vector<8x384xf32>
    %cst_29 = arith.constant 1.000000e+00 : f32
    %162 = vector.broadcast %cst_29 : f32 to vector<8x384xf32>
    %163 = arith.addf %162, %161 : vector<8x384xf32>
    %164 = arith.divf %162, %163 : vector<8x384xf32>
    %165 = vector.extract_strided_slice %158 {offsets = [0, 384], sizes = [8, 128], strides = [1, 1]} : vector<8x512xf32> to vector<8x128xf32>
    %166 = math.tanh %165 : vector<8x128xf32>
    %167 = vector.extract_strided_slice %164 {offsets = [0, 128], sizes = [8, 128], strides = [1, 1]} : vector<8x384xf32> to vector<8x128xf32>
    %168 = arith.mulf %167, %149 : vector<8x128xf32>
    %169 = vector.extract_strided_slice %164 {offsets = [0, 0], sizes = [8, 128], strides = [1, 1]} : vector<8x384xf32> to vector<8x128xf32>
    %170 = arith.mulf %169, %166 : vector<8x128xf32>
    %171 = arith.addf %168, %170 : vector<8x128xf32>
    %172 = vector.extract_strided_slice %164 {offsets = [0, 256], sizes = [8, 128], strides = [1, 1]} : vector<8x384xf32> to vector<8x128xf32>
    %173 = math.tanh %171 : vector<8x128xf32>
    %174 = arith.mulf %172, %173 : vector<8x128xf32>
    %175 = arith.truncf %174 : vector<8x128xf32> to vector<8x128xbf16>
    %c56 = arith.constant 56 : index
    %c0_30 = arith.constant 0 : index
    %176 = vector.load %arg12[%c56, %c0_30] : memref<64x128xbf16, #tpu.memory_space<vmem>>, vector<8x128xbf16>
    tpu.vector_store %arg12[%c56, %c0_30], %175 {strides = array<i32>} : memref<64x128xbf16, #tpu.memory_space<vmem>>, vector<8x128xbf16>,
    %c0_31 = arith.constant 0 : index
    %c0_32 = arith.constant 0 : index
    %c0_33 = arith.constant 0 : index
    %177 = vector.load %arg10[%c0_31, %c0_32, %c0_33] : memref<2x8x128xf32, #tpu.memory_space<vmem>>, vector<1x8x128xf32>
    %178 = vector.shape_cast %177 : vector<1x8x128xf32> to vector<8x128xf32>
    %179 = vector.shape_cast %174 : vector<8x128xf32> to vector<1x8x128xf32>
    tpu.vector_store %arg10[%c0_31, %c0_32, %c0_33], %179 {strides = array<i32>} : memref<2x8x128xf32, #tpu.memory_space<vmem>>, vector<1x8x128xf32>,
    %c0_34 = arith.constant 0 : index
    %c0_35 = arith.constant 0 : index
    %c0_36 = arith.constant 0 : index
    %180 = vector.load %arg11[%c0_34, %c0_35, %c0_36] : memref<2x8x128xf32, #tpu.memory_space<vmem>>, vector<1x8x128xf32>
    %181 = vector.shape_cast %180 : vector<1x8x128xf32> to vector<8x128xf32>
    %182 = vector.shape_cast %171 : vector<8x128xf32> to vector<1x8x128xf32>
    tpu.vector_store %arg11[%c0_34, %c0_35, %c0_36], %182 {strides = array<i32>} : memref<2x8x128xf32, #tpu.memory_space<vmem>>, vector<1x8x128xf32>,
    %c0_37 = arith.constant 0 : index
    %c0_38 = arith.constant 0 : index
    %183 = vector.load %arg12[%c0_37, %c0_38] : memref<64x128xbf16, #tpu.memory_space<vmem>>, vector<64x128xbf16>
    %c0_39 = arith.constant 0 : index
    %c0_40 = arith.constant 0 : index
    %184 = vector.load %arg4[%c0_39, %c0_40] : memref<128x512xbf16, #tpu.memory_space<vmem>>, vector<128x512xbf16>
    %cst_41 = arith.constant dense<0.000000e+00> : vector<64x512xf32>
    %185 = tpu.matmul %183, %184, %cst_41 {dimension_numbers = #tpu.dot_dimension_numbers<[1], [0], [0], [1], [0, 0, 1, 1], [], []>} : vector<64x128xbf16>, vector<128x512xbf16>, vector<64x512xf32> -> vector<64x512xf32>
    %c0_42 = arith.constant 0 : index
    %c0_43 = arith.constant 0 : index
    %186 = vector.load %arg6[%c0_42, %c0_43] : memref<1x512xf32, #tpu.memory_space<vmem>>, vector<1x512xf32>
    %187 = vector.broadcast %186 : vector<1x512xf32> to vector<64x512xf32>
    %188 = arith.addf %185, %187 : vector<64x512xf32>
    %c0_44 = arith.constant 0 : index
    %c0_45 = arith.constant 0 : index
    %189 = vector.load %arg5[%c0_44, %c0_45] : memref<128x512xbf16, #tpu.memory_space<vmem>>, vector<128x512xbf16>
    %190 = vector.extract_strided_slice %188 {offsets = [0, 0], sizes = [8, 512], strides = [1, 1]} : vector<64x512xf32> to vector<8x512xf32>
    %191 = vector.extract_strided_slice %190 {offsets = [0, 0], sizes = [8, 384], strides = [1, 1]} : vector<8x512xf32> to vector<8x384xf32>
    %192 = arith.negf %191 : vector<8x384xf32>
    %193 = math.exp %192 : vector<8x384xf32>
    %cst_46 = arith.constant 1.000000e+00 : f32
    %194 = vector.broadcast %cst_46 : f32 to vector<8x384xf32>
    %195 = arith.addf %194, %193 : vector<8x384xf32>
    %196 = arith.divf %194, %195 : vector<8x384xf32>
    %197 = vector.extract_strided_slice %190 {offsets = [0, 384], sizes = [8, 128], strides = [1, 1]} : vector<8x512xf32> to vector<8x128xf32>
    %198 = math.tanh %197 : vector<8x128xf32>
    %199 = vector.extract_strided_slice %196 {offsets = [0, 0], sizes = [8, 128], strides = [1, 1]} : vector<8x384xf32> to vector<8x128xf32>
    %200 = arith.mulf %199, %198 : vector<8x128xf32>
    %201 = vector.extract_strided_slice %196 {offsets = [0, 256], sizes = [8, 128], strides = [1, 1]} : vector<8x384xf32> to vector<8x128xf32>
    %202 = math.tanh %200 : vector<8x128xf32>
    %203 = arith.mulf %201, %202 : vector<8x128xf32>
    %204 = vector.extract_strided_slice %188 {offsets = [8, 0], sizes = [8, 512], strides = [1, 1]} : vector<64x512xf32> to vector<8x512xf32>
    %205 = arith.truncf %203 : vector<8x128xf32> to vector<8x128xbf16>
    %cst_47 = arith.constant dense<0.000000e+00> : vector<8x512xf32>
    %206 = tpu.matmul %205, %189, %cst_47 {dimension_numbers = #tpu.dot_dimension_numbers<[1], [0], [0], [1], [0, 0, 1, 1], [], []>} : vector<8x128xbf16>, vector<128x512xbf16>, vector<8x512xf32> -> vector<8x512xf32>
    %207 = arith.addf %204, %206 : vector<8x512xf32>
    %208 = vector.extract_strided_slice %207 {offsets = [0, 0], sizes = [8, 384], strides = [1, 1]} : vector<8x512xf32> to vector<8x384xf32>
    %209 = arith.negf %208 : vector<8x384xf32>
    %210 = math.exp %209 : vector<8x384xf32>
    %cst_48 = arith.constant 1.000000e+00 : f32
    %211 = vector.broadcast %cst_48 : f32 to vector<8x384xf32>
    %212 = arith.addf %211, %210 : vector<8x384xf32>
    %213 = arith.divf %211, %212 : vector<8x384xf32>
    %214 = vector.extract_strided_slice %207 {offsets = [0, 384], sizes = [8, 128], strides = [1, 1]} : vector<8x512xf32> to vector<8x128xf32>
    %215 = math.tanh %214 : vector<8x128xf32>
    %216 = vector.extract_strided_slice %213 {offsets = [0, 128], sizes = [8, 128], strides = [1, 1]} : vector<8x384xf32> to vector<8x128xf32>
    %217 = arith.mulf %216, %200 : vector<8x128xf32>
    %218 = vector.extract_strided_slice %213 {offsets = [0, 0], sizes = [8, 128], strides = [1, 1]} : vector<8x384xf32> to vector<8x128xf32>
    %219 = arith.mulf %218, %215 : vector<8x128xf32>
    %220 = arith.addf %217, %219 : vector<8x128xf32>
    %221 = vector.extract_strided_slice %213 {offsets = [0, 256], sizes = [8, 128], strides = [1, 1]} : vector<8x384xf32> to vector<8x128xf32>
    %222 = math.tanh %220 : vector<8x128xf32>
    %223 = arith.mulf %221, %222 : vector<8x128xf32>
    %224 = vector.extract_strided_slice %188 {offsets = [16, 0], sizes = [8, 512], strides = [1, 1]} : vector<64x512xf32> to vector<8x512xf32>
    %225 = arith.truncf %223 : vector<8x128xf32> to vector<8x128xbf16>
    %cst_49 = arith.constant dense<0.000000e+00> : vector<8x512xf32>
    %226 = tpu.matmul %225, %189, %cst_49 {dimension_numbers = #tpu.dot_dimension_numbers<[1], [0], [0], [1], [0, 0, 1, 1], [], []>} : vector<8x128xbf16>, vector<128x512xbf16>, vector<8x512xf32> -> vector<8x512xf32>
    %227 = arith.addf %224, %226 : vector<8x512xf32>
    %228 = vector.extract_strided_slice %227 {offsets = [0, 0], sizes = [8, 384], strides = [1, 1]} : vector<8x512xf32> to vector<8x384xf32>
    %229 = arith.negf %228 : vector<8x384xf32>
    %230 = math.exp %229 : vector<8x384xf32>
    %cst_50 = arith.constant 1.000000e+00 : f32
    %231 = vector.broadcast %cst_50 : f32 to vector<8x384xf32>
    %232 = arith.addf %231, %230 : vector<8x384xf32>
    %233 = arith.divf %231, %232 : vector<8x384xf32>
    %234 = vector.extract_strided_slice %227 {offsets = [0, 384], sizes = [8, 128], strides = [1, 1]} : vector<8x512xf32> to vector<8x128xf32>
    %235 = math.tanh %234 : vector<8x128xf32>
    %236 = vector.extract_strided_slice %233 {offsets = [0, 128], sizes = [8, 128], strides = [1, 1]} : vector<8x384xf32> to vector<8x128xf32>
    %237 = arith.mulf %236, %220 : vector<8x128xf32>
    %238 = vector.extract_strided_slice %233 {offsets = [0, 0], sizes = [8, 128], strides = [1, 1]} : vector<8x384xf32> to vector<8x128xf32>
    %239 = arith.mulf %238, %235 : vector<8x128xf32>
    %240 = arith.addf %237, %239 : vector<8x128xf32>
    %241 = vector.extract_strided_slice %233 {offsets = [0, 256], sizes = [8, 128], strides = [1, 1]} : vector<8x384xf32> to vector<8x128xf32>
    %242 = math.tanh %240 : vector<8x128xf32>
    %243 = arith.mulf %241, %242 : vector<8x128xf32>
    %244 = vector.extract_strided_slice %188 {offsets = [24, 0], sizes = [8, 512], strides = [1, 1]} : vector<64x512xf32> to vector<8x512xf32>
    %245 = arith.truncf %243 : vector<8x128xf32> to vector<8x128xbf16>
    %cst_51 = arith.constant dense<0.000000e+00> : vector<8x512xf32>
    %246 = tpu.matmul %245, %189, %cst_51 {dimension_numbers = #tpu.dot_dimension_numbers<[1], [0], [0], [1], [0, 0, 1, 1], [], []>} : vector<8x128xbf16>, vector<128x512xbf16>, vector<8x512xf32> -> vector<8x512xf32>
    %247 = arith.addf %244, %246 : vector<8x512xf32>
    %248 = vector.extract_strided_slice %247 {offsets = [0, 0], sizes = [8, 384], strides = [1, 1]} : vector<8x512xf32> to vector<8x384xf32>
    %249 = arith.negf %248 : vector<8x384xf32>
    %250 = math.exp %249 : vector<8x384xf32>
    %cst_52 = arith.constant 1.000000e+00 : f32
    %251 = vector.broadcast %cst_52 : f32 to vector<8x384xf32>
    %252 = arith.addf %251, %250 : vector<8x384xf32>
    %253 = arith.divf %251, %252 : vector<8x384xf32>
    %254 = vector.extract_strided_slice %247 {offsets = [0, 384], sizes = [8, 128], strides = [1, 1]} : vector<8x512xf32> to vector<8x128xf32>
    %255 = math.tanh %254 : vector<8x128xf32>
    %256 = vector.extract_strided_slice %253 {offsets = [0, 128], sizes = [8, 128], strides = [1, 1]} : vector<8x384xf32> to vector<8x128xf32>
    %257 = arith.mulf %256, %240 : vector<8x128xf32>
    %258 = vector.extract_strided_slice %253 {offsets = [0, 0], sizes = [8, 128], strides = [1, 1]} : vector<8x384xf32> to vector<8x128xf32>
    %259 = arith.mulf %258, %255 : vector<8x128xf32>
    %260 = arith.addf %257, %259 : vector<8x128xf32>
    %261 = vector.extract_strided_slice %253 {offsets = [0, 256], sizes = [8, 128], strides = [1, 1]} : vector<8x384xf32> to vector<8x128xf32>
    %262 = math.tanh %260 : vector<8x128xf32>
    %263 = arith.mulf %261, %262 : vector<8x128xf32>
    %264 = vector.extract_strided_slice %188 {offsets = [32, 0], sizes = [8, 512], strides = [1, 1]} : vector<64x512xf32> to vector<8x512xf32>
    %265 = arith.truncf %263 : vector<8x128xf32> to vector<8x128xbf16>
    %cst_53 = arith.constant dense<0.000000e+00> : vector<8x512xf32>
    %266 = tpu.matmul %265, %189, %cst_53 {dimension_numbers = #tpu.dot_dimension_numbers<[1], [0], [0], [1], [0, 0, 1, 1], [], []>} : vector<8x128xbf16>, vector<128x512xbf16>, vector<8x512xf32> -> vector<8x512xf32>
    %267 = arith.addf %264, %266 : vector<8x512xf32>
    %268 = vector.extract_strided_slice %267 {offsets = [0, 0], sizes = [8, 384], strides = [1, 1]} : vector<8x512xf32> to vector<8x384xf32>
    %269 = arith.negf %268 : vector<8x384xf32>
    %270 = math.exp %269 : vector<8x384xf32>
    %cst_54 = arith.constant 1.000000e+00 : f32
    %271 = vector.broadcast %cst_54 : f32 to vector<8x384xf32>
    %272 = arith.addf %271, %270 : vector<8x384xf32>
    %273 = arith.divf %271, %272 : vector<8x384xf32>
    %274 = vector.extract_strided_slice %267 {offsets = [0, 384], sizes = [8, 128], strides = [1, 1]} : vector<8x512xf32> to vector<8x128xf32>
    %275 = math.tanh %274 : vector<8x128xf32>
    %276 = vector.extract_strided_slice %273 {offsets = [0, 128], sizes = [8, 128], strides = [1, 1]} : vector<8x384xf32> to vector<8x128xf32>
    %277 = arith.mulf %276, %260 : vector<8x128xf32>
    %278 = vector.extract_strided_slice %273 {offsets = [0, 0], sizes = [8, 128], strides = [1, 1]} : vector<8x384xf32> to vector<8x128xf32>
    %279 = arith.mulf %278, %275 : vector<8x128xf32>
    %280 = arith.addf %277, %279 : vector<8x128xf32>
    %281 = vector.extract_strided_slice %273 {offsets = [0, 256], sizes = [8, 128], strides = [1, 1]} : vector<8x384xf32> to vector<8x128xf32>
    %282 = math.tanh %280 : vector<8x128xf32>
    %283 = arith.mulf %281, %282 : vector<8x128xf32>
    %284 = vector.extract_strided_slice %188 {offsets = [40, 0], sizes = [8, 512], strides = [1, 1]} : vector<64x512xf32> to vector<8x512xf32>
    %285 = arith.truncf %283 : vector<8x128xf32> to vector<8x128xbf16>
    %cst_55 = arith.constant dense<0.000000e+00> : vector<8x512xf32>
    %286 = tpu.matmul %285, %189, %cst_55 {dimension_numbers = #tpu.dot_dimension_numbers<[1], [0], [0], [1], [0, 0, 1, 1], [], []>} : vector<8x128xbf16>, vector<128x512xbf16>, vector<8x512xf32> -> vector<8x512xf32>
    %287 = arith.addf %284, %286 : vector<8x512xf32>
    %288 = vector.extract_strided_slice %287 {offsets = [0, 0], sizes = [8, 384], strides = [1, 1]} : vector<8x512xf32> to vector<8x384xf32>
    %289 = arith.negf %288 : vector<8x384xf32>
    %290 = math.exp %289 : vector<8x384xf32>
    %cst_56 = arith.constant 1.000000e+00 : f32
    %291 = vector.broadcast %cst_56 : f32 to vector<8x384xf32>
    %292 = arith.addf %291, %290 : vector<8x384xf32>
    %293 = arith.divf %291, %292 : vector<8x384xf32>
    %294 = vector.extract_strided_slice %287 {offsets = [0, 384], sizes = [8, 128], strides = [1, 1]} : vector<8x512xf32> to vector<8x128xf32>
    %295 = math.tanh %294 : vector<8x128xf32>
    %296 = vector.extract_strided_slice %293 {offsets = [0, 128], sizes = [8, 128], strides = [1, 1]} : vector<8x384xf32> to vector<8x128xf32>
    %297 = arith.mulf %296, %280 : vector<8x128xf32>
    %298 = vector.extract_strided_slice %293 {offsets = [0, 0], sizes = [8, 128], strides = [1, 1]} : vector<8x384xf32> to vector<8x128xf32>
    %299 = arith.mulf %298, %295 : vector<8x128xf32>
    %300 = arith.addf %297, %299 : vector<8x128xf32>
    %301 = vector.extract_strided_slice %293 {offsets = [0, 256], sizes = [8, 128], strides = [1, 1]} : vector<8x384xf32> to vector<8x128xf32>
    %302 = math.tanh %300 : vector<8x128xf32>
    %303 = arith.mulf %301, %302 : vector<8x128xf32>
    %304 = vector.extract_strided_slice %188 {offsets = [48, 0], sizes = [8, 512], strides = [1, 1]} : vector<64x512xf32> to vector<8x512xf32>
    %305 = arith.truncf %303 : vector<8x128xf32> to vector<8x128xbf16>
    %cst_57 = arith.constant dense<0.000000e+00> : vector<8x512xf32>
    %306 = tpu.matmul %305, %189, %cst_57 {dimension_numbers = #tpu.dot_dimension_numbers<[1], [0], [0], [1], [0, 0, 1, 1], [], []>} : vector<8x128xbf16>, vector<128x512xbf16>, vector<8x512xf32> -> vector<8x512xf32>
    %307 = arith.addf %304, %306 : vector<8x512xf32>
    %308 = vector.extract_strided_slice %307 {offsets = [0, 0], sizes = [8, 384], strides = [1, 1]} : vector<8x512xf32> to vector<8x384xf32>
    %309 = arith.negf %308 : vector<8x384xf32>
    %310 = math.exp %309 : vector<8x384xf32>
    %cst_58 = arith.constant 1.000000e+00 : f32
    %311 = vector.broadcast %cst_58 : f32 to vector<8x384xf32>
    %312 = arith.addf %311, %310 : vector<8x384xf32>
    %313 = arith.divf %311, %312 : vector<8x384xf32>
    %314 = vector.extract_strided_slice %307 {offsets = [0, 384], sizes = [8, 128], strides = [1, 1]} : vector<8x512xf32> to vector<8x128xf32>
    %315 = math.tanh %314 : vector<8x128xf32>
    %316 = vector.extract_strided_slice %313 {offsets = [0, 128], sizes = [8, 128], strides = [1, 1]} : vector<8x384xf32> to vector<8x128xf32>
    %317 = arith.mulf %316, %300 : vector<8x128xf32>
    %318 = vector.extract_strided_slice %313 {offsets = [0, 0], sizes = [8, 128], strides = [1, 1]} : vector<8x384xf32> to vector<8x128xf32>
    %319 = arith.mulf %318, %315 : vector<8x128xf32>
    %320 = arith.addf %317, %319 : vector<8x128xf32>
    %321 = vector.extract_strided_slice %313 {offsets = [0, 256], sizes = [8, 128], strides = [1, 1]} : vector<8x384xf32> to vector<8x128xf32>
    %322 = math.tanh %320 : vector<8x128xf32>
    %323 = arith.mulf %321, %322 : vector<8x128xf32>
    %324 = vector.extract_strided_slice %188 {offsets = [56, 0], sizes = [8, 512], strides = [1, 1]} : vector<64x512xf32> to vector<8x512xf32>
    %325 = arith.truncf %323 : vector<8x128xf32> to vector<8x128xbf16>
    %cst_59 = arith.constant dense<0.000000e+00> : vector<8x512xf32>
    %326 = tpu.matmul %325, %189, %cst_59 {dimension_numbers = #tpu.dot_dimension_numbers<[1], [0], [0], [1], [0, 0, 1, 1], [], []>} : vector<8x128xbf16>, vector<128x512xbf16>, vector<8x512xf32> -> vector<8x512xf32>
    %327 = arith.addf %324, %326 : vector<8x512xf32>
    %328 = vector.extract_strided_slice %327 {offsets = [0, 0], sizes = [8, 384], strides = [1, 1]} : vector<8x512xf32> to vector<8x384xf32>
    %329 = arith.negf %328 : vector<8x384xf32>
    %330 = math.exp %329 : vector<8x384xf32>
    %cst_60 = arith.constant 1.000000e+00 : f32
    %331 = vector.broadcast %cst_60 : f32 to vector<8x384xf32>
    %332 = arith.addf %331, %330 : vector<8x384xf32>
    %333 = arith.divf %331, %332 : vector<8x384xf32>
    %334 = vector.extract_strided_slice %327 {offsets = [0, 384], sizes = [8, 128], strides = [1, 1]} : vector<8x512xf32> to vector<8x128xf32>
    %335 = math.tanh %334 : vector<8x128xf32>
    %336 = vector.extract_strided_slice %333 {offsets = [0, 128], sizes = [8, 128], strides = [1, 1]} : vector<8x384xf32> to vector<8x128xf32>
    %337 = arith.mulf %336, %320 : vector<8x128xf32>
    %338 = vector.extract_strided_slice %333 {offsets = [0, 0], sizes = [8, 128], strides = [1, 1]} : vector<8x384xf32> to vector<8x128xf32>
    %339 = arith.mulf %338, %335 : vector<8x128xf32>
    %340 = arith.addf %337, %339 : vector<8x128xf32>
    %341 = vector.extract_strided_slice %333 {offsets = [0, 256], sizes = [8, 128], strides = [1, 1]} : vector<8x384xf32> to vector<8x128xf32>
    %342 = math.tanh %340 : vector<8x128xf32>
    %343 = arith.mulf %341, %342 : vector<8x128xf32>
    %c1 = arith.constant 1 : index
    %c0_61 = arith.constant 0 : index
    %c0_62 = arith.constant 0 : index
    %344 = vector.load %arg10[%c1, %c0_61, %c0_62] : memref<2x8x128xf32, #tpu.memory_space<vmem>>, vector<1x8x128xf32>
    %345 = vector.shape_cast %344 : vector<1x8x128xf32> to vector<8x128xf32>
    %346 = vector.shape_cast %343 : vector<8x128xf32> to vector<1x8x128xf32>
    tpu.vector_store %arg10[%c1, %c0_61, %c0_62], %346 {strides = array<i32>} : memref<2x8x128xf32, #tpu.memory_space<vmem>>, vector<1x8x128xf32>,
    %c1_63 = arith.constant 1 : index
    %c0_64 = arith.constant 0 : index
    %c0_65 = arith.constant 0 : index
    %347 = vector.load %arg11[%c1_63, %c0_64, %c0_65] : memref<2x8x128xf32, #tpu.memory_space<vmem>>, vector<1x8x128xf32>
    %348 = vector.shape_cast %347 : vector<1x8x128xf32> to vector<8x128xf32>
    %349 = vector.shape_cast %340 : vector<8x128xf32> to vector<1x8x128xf32>
    tpu.vector_store %arg11[%c1_63, %c0_64, %c0_65], %349 {strides = array<i32>} : memref<2x8x128xf32, #tpu.memory_space<vmem>>, vector<1x8x128xf32>,
    %350 = arith.truncf %343 : vector<8x128xf32> to vector<8x128xbf16>
    %c0_66 = arith.constant 0 : index
    %c0_67 = arith.constant 0 : index
    %351 = vector.load %arg7[%c0_66, %c0_67] : memref<128x128xbf16, #tpu.memory_space<vmem>>, vector<128x128xbf16>
    %cst_68 = arith.constant dense<0.000000e+00> : vector<8x128xf32>
    %352 = tpu.matmul %350, %351, %cst_68 {dimension_numbers = #tpu.dot_dimension_numbers<[1], [0], [0], [1], [0, 0, 1, 1], [], []>} : vector<8x128xbf16>, vector<128x128xbf16>, vector<8x128xf32> -> vector<8x128xf32>
    %c0_69 = arith.constant 0 : index
    %c0_70 = arith.constant 0 : index
    %353 = vector.load %arg8[%c0_69, %c0_70] : memref<1x128xf32, #tpu.memory_space<vmem>>, vector<1x128xf32>
    %354 = vector.broadcast %353 : vector<1x128xf32> to vector<8x128xf32>
    %355 = arith.addf %352, %354 : vector<8x128xf32>
    %c0_71 = arith.constant 0 : index
    %c0_72 = arith.constant 0 : index
    %356 = vector.load %arg9[%c0_71, %c0_72] : memref<8x128xf32, #tpu.memory_space<vmem>>, vector<8x128xf32>
    tpu.vector_store %arg9[%c0_71, %c0_72], %355 {strides = array<i32>} : memref<8x128xf32, #tpu.memory_space<vmem>>, vector<8x128xf32>,
    return
  }
}

</mosaic_0001>

<llo_original>
// kernel: _forward_full_impl.1
$region0: #{_forward_full_impl.1}
  #allocation0 [shape = 'u32[]', space=smem, size = 0x4, offset = 0x4, fixed_abs, tag = 'smem constant byte address 0x4 - core index']
  #allocation1 [shape = 'u32[144,128]{1,0:T(1,128)}', space=vmem, size = 0x12000, scoped, tag = 'internal scratch']
  #allocation2 [shape = 'bf16[64,128]{1,0:T(16,128)(2,1)}', space=vmem, size = 0x4000, scoped, tag = 'scratch operand']
  %s0 = inlined_call_operand.vmem [shape: bf16[64,8], index: 0, kind: input, shape index: {}]
  %s1 = inlined_call_operand.vmem [shape: bf16[8,512], index: 1, kind: input, shape index: {}]
  %s2 = inlined_call_operand.hbm [shape: bf16[128,512], index: 2, kind: input, shape index: {}]
  %s3 = inlined_call_operand.vmem [shape: f32[1,512], index: 3, kind: input, shape index: {}]
  %s4 = inlined_call_operand.hbm [shape: bf16[128,512], index: 4, kind: input, shape index: {}]
  %s5 = inlined_call_operand.hbm [shape: bf16[128,512], index: 5, kind: input, shape index: {}]
  %s6 = inlined_call_operand.hbm [shape: f32[1,512], index: 6, kind: input, shape index: {}]
  %s7 = inlined_call_operand.vmem [shape: bf16[128,128], index: 7, kind: input, shape index: {}]
  %s8 = inlined_call_operand.vmem [shape: f32[1,128], index: 8, kind: input, shape index: {}]
  %s9 = inlined_call_operand.vmem [shape: f32[8,128], index: 9, kind: output, shape index: {0}]
  %s10 = inlined_call_operand.vmem [shape: f32[2,8,128], index: 10, kind: output, shape index: {1}]
  %s11 = inlined_call_operand.vmem [shape: f32[2,8,128], index: 11, kind: output, shape index: {2}]
  %12 = xla_tuple %s9, %s10, %s11
  %s13 = sld [smem:[#allocation0]]
  $region78: #{_forward_full_impl.1} parent=0
    _
  %s15 = ssub.s32 1, %s13
  %s16 = scalar_select 0, %s15, %s13
  $region1: #{_forward_full_impl.1} parent=0
    #allocation3 [shape = 'u8[131072]{0}', space=vmem, size = 0x20000, scoped, tag = 'input window, operand 2, single buffered']
    #allocation4 [shape = 's32[1]{0}', space=sflag, size = 0x4, scoped, tag = 'scoped memory for _forward_full_impl.1']
    #allocation5 [shape = 'u8[131072]{0}', space=vmem, size = 0x20000, scoped, tag = 'input window, operand 4, single buffered']
    #allocation6 [shape = 's32[1]{0}', space=sflag, size = 0x4, scoped, tag = 'scoped memory for _forward_full_impl.1']
    #allocation7 [shape = 'u8[131072]{0}', space=vmem, size = 0x20000, scoped, tag = 'input window, operand 5, single buffered']
    #allocation8 [shape = 'u8[2048]{0}', space=vmem, size = 0x800, scoped, tag = 'input window, operand 6, single buffered']
    #allocation9 [shape = 's32[1]{0}', space=sflag, size = 0x4, scoped, tag = 'scoped memory for _forward_full_impl.1']
    %17 = vsyncpa [#allocation4], 0
    %18 = vsyncpa [#allocation6], 0
    %19 = vsyncpa [#allocation9], 0
    // Predicated region
    $region2: #{_forward_full_impl.1} parent=1 // pred_check
      _
    $region3: #{_forward_full_impl.1} parent=1 // pred_check_branch
      %21 = sbr.rel (0) target = $region5
    $region4: #{_forward_full_impl.1} parent=1 // pred_region
      _
    $region5: #{_forward_full_impl.1} parent=1 // pred_fallthru
      _
    // Predicated region
    $region6: #{_forward_full_impl.1} parent=1 // pred_check
      _
    $region7: #{_forward_full_impl.1} parent=1 // pred_check_branch
      %23 = sbr.rel (0) target = $region9
    $region8: #{_forward_full_impl.1} parent=1 // pred_region
      _
    $region9: #{_forward_full_impl.1} parent=1 // pred_fallthru
      _
    // Predicated region
    $region10: #{_forward_full_impl.1} parent=1 // pred_check
      _
    $region11: #{_forward_full_impl.1} parent=1 // pred_check_branch
      %25 = sbr.rel (0) target = $region13
    $region12: #{_forward_full_impl.1} parent=1 // pred_region
      %s27 = ssub.s32 4096, 4096
      %28 = vsyncadd [#allocation4], %s27
      %s29 = sshll.u32 [#allocation3], 4
      %s30 = int_to_ptr.vmem [resolvable:$true] %s29
      %35 = dma.hbm_to_vmem [thread:$0]  %s2, 4096, %s30, [#allocation4], 256, 256, 16
    $region13: #{_forward_full_impl.1} parent=1 // pred_fallthru
      _
    // Predicated region
    $region14: #{_forward_full_impl.1} parent=1 // pred_check
      _
    $region15: #{_forward_full_impl.1} parent=1 // pred_check_branch
      %37 = sbr.rel (0) target = $region17
    $region16: #{_forward_full_impl.1} parent=1 // pred_region
      _
    $region17: #{_forward_full_impl.1} parent=1 // pred_fallthru
      _
    // Predicated region
    $region18: #{_forward_full_impl.1} parent=1 // pred_check
      _
    $region19: #{_forward_full_impl.1} parent=1 // pred_check_branch
      %39 = sbr.rel (0) target = $region21
    $region20: #{_forward_full_impl.1} parent=1 // pred_region
      %s41 = ssub.s32 4096, 4096
      %42 = vsyncadd [#allocation6], %s41
      %s43 = sshll.u32 [#allocation5], 4
      %s44 = int_to_ptr.vmem [resolvable:$true] %s43
      %49 = dma.hbm_to_vmem [thread:$0]  %s4, 4096, %s44, [#allocation6], 256, 256, 16
    $region21: #{_forward_full_impl.1} parent=1 // pred_fallthru
      _
    // Predicated region
    $region22: #{_forward_full_impl.1} parent=1 // pred_check
      _
    $region23: #{_forward_full_impl.1} parent=1 // pred_check_branch
      %51 = sbr.rel (0) target = $region25
    $region24: #{_forward_full_impl.1} parent=1 // pred_region
      %s53 = ssub.s32 4096, 4096
      %54 = vsyncadd [#allocation6], %s53
      %s55 = sshll.u32 [#allocation7], 4
      %s56 = int_to_ptr.vmem [resolvable:$true] %s55
      %61 = dma.hbm_to_vmem [thread:$0]  %s5, 4096, %s56, [#allocation6], 256, 256, 16
    $region25: #{_forward_full_impl.1} parent=1 // pred_fallthru
      _
    // Predicated region
    $region26: #{_forward_full_impl.1} parent=1 // pred_check
      _
    $region27: #{_forward_full_impl.1} parent=1 // pred_check_branch
      %63 = sbr.rel (0) target = $region29
    $region28: #{_forward_full_impl.1} parent=1 // pred_region
      %s65 = ssub.s32 64, 64
      %66 = vsyncadd [#allocation9], %s65
      %s68 = sshll.u32 [#allocation8], 4
      %s69 = int_to_ptr.vmem [resolvable:$true] %s68
      %71 = dma.hbm_to_vmem [thread:$0]  %s6, 64, %s69, [#allocation9]
    $region29: #{_forward_full_impl.1} parent=1 // pred_fallthru
      _
    // Predicated region
    $region30: #{_forward_full_impl.1} parent=1 // pred_check
      _
    $region31: #{_forward_full_impl.1} parent=1 // pred_check_branch
      %73 = sbr.rel (0) target = $region33
    $region32: #{_forward_full_impl.1} parent=1 // pred_region
      _
    $region33: #{_forward_full_impl.1} parent=1 // pred_fallthru
      _
    // Predicated region
    $region34: #{_forward_full_impl.1} parent=1 // pred_check
      _
    $region35: #{_forward_full_impl.1} parent=1 // pred_check_branch
      %75 = sbr.rel (0) target = $region37
    $region36: #{_forward_full_impl.1} parent=1 // pred_region
      _
    $region37: #{_forward_full_impl.1} parent=1 // pred_fallthru
      _
    // Predicated region
    $region38: #{_forward_full_impl.1} parent=1 // pred_check
      _
    $region39: #{_forward_full_impl.1} parent=1 // pred_check_branch
      %77 = sbr.rel (0) target = $region41
    $region40: #{_forward_full_impl.1} parent=1 // pred_region
      %78 = dma.done [#allocation4], 4096
    $region41: #{_forward_full_impl.1} parent=1 // pred_fallthru
      _
    // Predicated region
    $region42: #{_forward_full_impl.1} parent=1 // pred_check
      _
    $region43: #{_forward_full_impl.1} parent=1 // pred_check_branch
      %80 = sbr.rel (0) target = $region45
    $region44: #{_forward_full_impl.1} parent=1 // pred_region
      %81 = dma.done [#allocation6], 4096
    $region45: #{_forward_full_impl.1} parent=1 // pred_fallthru
      _
    // Predicated region
    $region46: #{_forward_full_impl.1} parent=1 // pred_check
      _
    $region47: #{_forward_full_impl.1} parent=1 // pred_check_branch
      %83 = sbr.rel (0) target = $region49
    $region48: #{_forward_full_impl.1} parent=1 // pred_region
      %84 = dma.done [#allocation6], 4096
    $region49: #{_forward_full_impl.1} parent=1 // pred_fallthru
      _
    // Predicated region
    $region50: #{_forward_full_impl.1} parent=1 // pred_check
      _
    $region51: #{_forward_full_impl.1} parent=1 // pred_check_branch
      %86 = sbr.rel (0) target = $region53
    $region52: #{_forward_full_impl.1} parent=1 // pred_region
      %87 = dma.done [#allocation9], 64
    $region53: #{_forward_full_impl.1} parent=1 // pred_fallthru
      _
    %v89 = vld [vmem:[%s0] sm:$0xf]
    %v90 = vld [vmem:[%s0 + $0x4] sm:$0xf]
    %v91 = vld [vmem:[%s0 + $0x8] sm:$0xf]
    %v92 = vld [vmem:[%s0 + $0xc] sm:$0xf]
    %v93 = vld [vmem:[%s0 + $0x10] sm:$0xf]
    %v94 = vld [vmem:[%s0 + $0x14] sm:$0xf]
    %v95 = vld [vmem:[%s0 + $0x18] sm:$0xf]
    %v96 = vld [vmem:[%s0 + $0x1c] sm:$0xf]
    %v97 = vld [vmem:[%s1] sm:$0xff]
    %v98 = vld [vmem:[%s1 + $0x8] sm:$0xff]
    %v99 = vld [vmem:[%s3] sm:$0xf]
    %v101 = vlaneseq
    %v102 = vshrl.u32 %v101, 7
    %v103 = vsub.s32 0, %v102
    %v104 = vrot.slane %v99, %v103
    %v105 = vlaneseq
    %v106 = vshrl.u32 %v105, 7
    %v107 = vsub.s32 1, %v106
    %v108 = vrot.slane %v99, %v107
    %v109 = vlaneseq
    %v110 = vshrl.u32 %v109, 7
    %v111 = vsub.s32 2, %v110
    %v112 = vrot.slane %v99, %v111
    %v113 = vlaneseq
    %v114 = vshrl.u32 %v113, 7
    %v115 = vsub.s32 3, %v114
    %v116 = vrot.slane %v99, %v115
    %v129 = vunpack.c.l.b16 %v89
    %v130 = vunpack.c.l.b16 %v90
    %v131 = vunpack.c.l.b16 %v91
    %v132 = vunpack.c.l.b16 %v92
    %v133 = vunpack.c.l.b16 %v93
    %v134 = vunpack.c.l.b16 %v94
    %v135 = vunpack.c.l.b16 %v95
    %v136 = vunpack.c.l.b16 %v96
    %v137 = vpack.c.b16 %v130, %v129
    %v138 = vpack.c.b16 %v132, %v131
    %v139 = vpack.c.b16 %v134, %v133
    %v140 = vpack.c.b16 %v136, %v135
    %v143 = vunpack.c.l.b16 %v97
    %v144 = vunpack.c.h.b16 %v97
    %v145 = vunpack.c.l.b16 %v98
    %v146 = vunpack.c.h.b16 %v98
    %v147 = vpack.c.b16 %v143, %v143
    %v148 = vpack.c.b16 %v144, %v144
    %v149 = vpack.c.b16 %v145, %v145
    %v150 = vpack.c.b16 %v146, %v146
    %vm151 = vcmask 64512
    %v153 = vsel %vm151, %v137, 0
    %v156 = vsel %vm151, %v138, 0
    %v159 = vsel %vm151, %v139, 0
    %v162 = vsel %vm151, %v140, 0
    %vm164 = vcmask 1043456
    %v166 = vsel %vm164, %v147, 0
    %v169 = vsel %vm164, %v148, 0
    %v172 = vsel %vm164, %v149, 0
    %v175 = vsel %vm164, %v150, 0
    %177 = vmatprep.subr.bf16.mxu0 %v169
    %178 = vmatpush1.bf16.msra.mxu0 %v166
    %179 = vmatprep.subr.bf16.mxu0 0
    %180 = vmatpush1.bf16.msra.mxu0 0
    %181 = vmatprep.subr.bf16.mxu0 0
    %182 = vmatpush1.bf16.msra.mxu0 0
    %183 = vmatprep.subr.bf16.mxu0 0
    %184 = vmatpush1.bf16.msra.mxu0 0
    %185 = vmatprep.subr.bf16.mxu0 0
    %186 = vmatpush1.bf16.msra.mxu0 0
    %187 = vmatprep.subr.bf16.mxu0 0
    %188 = vmatpush1.bf16.msra.mxu0 0
    %189 = vmatprep.subr.bf16.mxu0 0
    %190 = vmatpush1.bf16.msra.mxu0 0
    %191 = vmatprep.subr.bf16.mxu0 0
    %192 = vmatpush1.bf16.msra.mxu0 0
    %193 = vmatprep.subr.bf16.mxu0 0
    %194 = vmatpush1.bf16.msra.mxu0 0
    %195 = vmatprep.subr.bf16.mxu0 0
    %196 = vmatpush1.bf16.msra.mxu0 0
    %197 = vmatprep.subr.bf16.mxu0 0
    %198 = vmatpush1.bf16.msra.mxu0 0
    %199 = vmatprep.subr.bf16.mxu0 0
    %200 = vmatpush1.bf16.msra.mxu0 0
    %201 = vmatprep.subr.bf16.mxu0 0
    %202 = vmatpush1.bf16.msra.mxu0 0
    %203 = vmatprep.subr.bf16.mxu0 0
    %204 = vmatpush1.bf16.msra.mxu0 0
    %205 = vmatprep.subr.bf16.mxu0 0
    %206 = vmatpush1.bf16.msra.mxu0 0
    %207 = vmatprep.subr.bf16.mxu0 0
    %208 = vmatpush1.bf16.msra.mxu0 0
    %209 = vmatprep.mubr.bf16.mxu0 0
    %210 = vmatmul.mubr.bf16.gmra.mrb[0].mxu0 %v153
    %v211 = vpop.f32.mrb[0].mxu0
    %v212 = vadd.f32 %v104, %v211
    %v213 = vpop.f32.mrb[0].mxu0
    %v214 = vpop.f32.mrb[0].mxu0
    %v215 = vadd.f32 %v104, %v214
    %v216 = vpop.f32.mrb[0].mxu0
    %v217 = vadd.f32 %v108, %v216
    %218 = vmatprep.mubr.bf16.mxu0 0
    %219 = vmatmul.mubr.bf16.gmra.mrb[0].mxu0 %v156
    %v220 = vpop.f32.mrb[0].mxu0
    %v221 = vadd.f32 %v104, %v220
    %v222 = vpop.f32.mrb[0].mxu0
    %v223 = vadd.f32 %v108, %v222
    %v224 = vpop.f32.mrb[0].mxu0
    %v225 = vadd.f32 %v104, %v224
    %v226 = vpop.f32.mrb[0].mxu0
    %v227 = vadd.f32 %v108, %v226
    %228 = vmatprep.mubr.bf16.mxu0 0
    %229 = vmatmul.mubr.bf16.gmra.mrb[0].mxu0 %v159
    %v230 = vpop.f32.mrb[0].mxu0
    %v231 = vadd.f32 %v104, %v230
    %v232 = vpop.f32.mrb[0].mxu0
    %v233 = vadd.f32 %v108, %v232
    %v234 = vpop.f32.mrb[0].mxu0
    %v235 = vadd.f32 %v104, %v234
    %v236 = vpop.f32.mrb[0].mxu0
    %v237 = vadd.f32 %v108, %v236
    %238 = vmatprep.mubr.bf16.mxu0 0
    %239 = vmatmul.mubr.bf16.gmra.mrb[0].mxu0 %v162
    %v240 = vpop.f32.mrb[0].mxu0
    %v241 = vadd.f32 %v104, %v240
    %v242 = vpop.f32.mrb[0].mxu0
    %v243 = vadd.f32 %v108, %v242
    %v244 = vpop.f32.mrb[0].mxu0
    %v245 = vadd.f32 %v104, %v244
    %v246 = vpop.f32.mrb[0].mxu0
    %v247 = vadd.f32 %v108, %v246
    %248 = vdwg.mxu0
    %249 = vmatprep.subr.bf16.mxu0 %v175
    %250 = vmatpush1.bf16.msra.mxu0 %v172
    %251 = vmatprep.subr.bf16.mxu0 0
    %252 = vmatpush1.bf16.msra.mxu0 0
    %253 = vmatprep.subr.bf16.mxu0 0
    %254 = vmatpush1.bf16.msra.mxu0 0
    %255 = vmatprep.subr.bf16.mxu0 0
    %256 = vmatpush1.bf16.msra.mxu0 0
    %257 = vmatprep.subr.bf16.mxu0 0
    %258 = vmatpush1.bf16.msra.mxu0 0
    %259 = vmatprep.subr.bf16.mxu0 0
    %260 = vmatpush1.bf16.msra.mxu0 0
    %261 = vmatprep.subr.bf16.mxu0 0
    %262 = vmatpush1.bf16.msra.mxu0 0
    %263 = vmatprep.subr.bf16.mxu0 0
    %264 = vmatpush1.bf16.msra.mxu0 0
    %265 = vmatprep.subr.bf16.mxu0 0
    %266 = vmatpush1.bf16.msra.mxu0 0
    %267 = vmatprep.subr.bf16.mxu0 0
    %268 = vmatpush1.bf16.msra.mxu0 0
    %269 = vmatprep.subr.bf16.mxu0 0
    %270 = vmatpush1.bf16.msra.mxu0 0
    %271 = vmatprep.subr.bf16.mxu0 0
    %272 = vmatpush1.bf16.msra.mxu0 0
    %273 = vmatprep.subr.bf16.mxu0 0
    %274 = vmatpush1.bf16.msra.mxu0 0
    %275 = vmatprep.subr.bf16.mxu0 0
    %276 = vmatpush1.bf16.msra.mxu0 0
    %277 = vmatprep.subr.bf16.mxu0 0
    %278 = vmatpush1.bf16.msra.mxu0 0
    %279 = vmatprep.subr.bf16.mxu0 0
    %280 = vmatpush1.bf16.msra.mxu0 0
    %281 = vmatprep.mubr.bf16.mxu0 0
    %282 = vmatmul.mubr.bf16.gmra.mrb[0].mxu0 %v153
    %v283 = vpop.f32.mrb[0].mxu0
    %v284 = vadd.f32 %v112, %v283
    %v285 = vpop.f32.mrb[0].mxu0
    %v286 = vadd.f32 %v116, %v285
    %v287 = vpop.f32.mrb[0].mxu0
    %v288 = vadd.f32 %v112, %v287
    %v289 = vpop.f32.mrb[0].mxu0
    %v290 = vadd.f32 %v116, %v289
    %291 = vmatprep.mubr.bf16.mxu0 0
    %292 = vmatmul.mubr.bf16.gmra.mrb[0].mxu0 %v156
    %v293 = vpop.f32.mrb[0].mxu0
    %v294 = vadd.f32 %v112, %v293
    %v295 = vpop.f32.mrb[0].mxu0
    %v296 = vadd.f32 %v116, %v295
    %v297 = vpop.f32.mrb[0].mxu0
    %v298 = vadd.f32 %v112, %v297
    %v299 = vpop.f32.mrb[0].mxu0
    %v300 = vadd.f32 %v116, %v299
    %301 = vmatprep.mubr.bf16.mxu0 0
    %302 = vmatmul.mubr.bf16.gmra.mrb[0].mxu0 %v159
    %v303 = vpop.f32.mrb[0].mxu0
    %v304 = vadd.f32 %v112, %v303
    %v305 = vpop.f32.mrb[0].mxu0
    %v306 = vadd.f32 %v116, %v305
    %v307 = vpop.f32.mrb[0].mxu0
    %v308 = vadd.f32 %v112, %v307
    %v309 = vpop.f32.mrb[0].mxu0
    %v310 = vadd.f32 %v116, %v309
    %311 = vmatprep.mubr.bf16.mxu0 0
    %312 = vmatmul.mubr.bf16.gmra.mrb[0].mxu0 %v162
    %v313 = vpop.f32.mrb[0].mxu0
    %v314 = vadd.f32 %v112, %v313
    %v315 = vpop.f32.mrb[0].mxu0
    %v316 = vadd.f32 %v116, %v315
    %v317 = vpop.f32.mrb[0].mxu0
    %v318 = vadd.f32 %v112, %v317
    %v319 = vpop.f32.mrb[0].mxu0
    %v320 = vadd.f32 %v116, %v319
    %321 = vdwg.mxu0
    %v322 = vld [vmem:[#allocation3] sm:$0xff]
    %v323 = vld [vmem:[#allocation3 + $0x8] sm:$0xff]
    %v324 = vld [vmem:[#allocation3 + $0x10] sm:$0xff]
    %v325 = vld [vmem:[#allocation3 + $0x18] sm:$0xff]
    %v326 = vld [vmem:[#allocation3 + $0x20] sm:$0xff]
    %v327 = vld [vmem:[#allocation3 + $0x28] sm:$0xff]
    %v328 = vld [vmem:[#allocation3 + $0x30] sm:$0xff]
    %v329 = vld [vmem:[#allocation3 + $0x38] sm:$0xff]
    %v330 = vld [vmem:[#allocation3 + $0x40] sm:$0xff]
    %v331 = vld [vmem:[#allocation3 + $0x48] sm:$0xff]
    %v332 = vld [vmem:[#allocation3 + $0x50] sm:$0xff]
    %v333 = vld [vmem:[#allocation3 + $0x58] sm:$0xff]
    %v334 = vld [vmem:[#allocation3 + $0x60] sm:$0xff]
    %v335 = vld [vmem:[#allocation3 + $0x68] sm:$0xff]
    %v336 = vld [vmem:[#allocation3 + $0x70] sm:$0xff]
    %v337 = vld [vmem:[#allocation3 + $0x78] sm:$0xff]
    %v338 = vld [vmem:[#allocation3 + $0x80] sm:$0xff]
    %v339 = vld [vmem:[#allocation3 + $0x88] sm:$0xff]
    %v340 = vld [vmem:[#allocation3 + $0x90] sm:$0xff]
    %v341 = vld [vmem:[#allocation3 + $0x98] sm:$0xff]
    %v342 = vld [vmem:[#allocation3 + $0xa0] sm:$0xff]
    %v343 = vld [vmem:[#allocation3 + $0xa8] sm:$0xff]
    %v344 = vld [vmem:[#allocation3 + $0xb0] sm:$0xff]
    %v345 = vld [vmem:[#allocation3 + $0xb8] sm:$0xff]
    %v346 = vld [vmem:[#allocation3 + $0xc0] sm:$0xff]
    %v347 = vld [vmem:[#allocation3 + $0xc8] sm:$0xff]
    %v348 = vld [vmem:[#allocation3 + $0xd0] sm:$0xff]
    %v349 = vld [vmem:[#allocation3 + $0xd8] sm:$0xff]
    %v350 = vld [vmem:[#allocation3 + $0xe0] sm:$0xff]
    %v351 = vld [vmem:[#allocation3 + $0xe8] sm:$0xff]
    %v352 = vld [vmem:[#allocation3 + $0xf0] sm:$0xff]
    %v353 = vld [vmem:[#allocation3 + $0xf8] sm:$0xff]
    %v354 = vxor.u32 %v212, 2147483648
    %v355 = vxor.u32 %v284, 2147483648
    %v356 = vmul.f32 %v354, 1.442695
    %v357 = vpow.pop %v356
    %v358 = vmul.f32 %v355, 1.442695
    %v359 = vpow.pop %v358
    %v360 = vadd.f32 %v357, 1.0
    %v361 = vadd.f32 %v359, 1.0
    %v362 = vrcp.pop %v360
    %v363 = vmul.f32 1.0, %v362
    %v364 = vrcp.pop %v361
    %v365 = vmul.f32 1.0, %v364
    %v366 = vtanh.pop %v286
    %v367 = vmul.f32 %v363, %v366
    %v368 = vtanh.pop %v367
    %v369 = vmul.f32 %v365, %v368
    %v370 = vpack.c.bf16 %v369, %v369
    %371 = vst [vmem:[#allocation2] sm:$0xf] %v370
    %v404 = vunpack.c.l.b16 %v322
    %v405 = vunpack.c.h.b16 %v322
    %v406 = vunpack.c.l.b16 %v323
    %v407 = vunpack.c.h.b16 %v323
    %v408 = vunpack.c.l.b16 %v324
    %v409 = vunpack.c.h.b16 %v324
    %v410 = vunpack.c.l.b16 %v325
    %v411 = vunpack.c.h.b16 %v325
    %v412 = vunpack.c.l.b16 %v326
    %v413 = vunpack.c.h.b16 %v326
    %v414 = vunpack.c.l.b16 %v327
    %v415 = vunpack.c.h.b16 %v327
    %v416 = vunpack.c.l.b16 %v328
    %v417 = vunpack.c.h.b16 %v328
    %v418 = vunpack.c.l.b16 %v329
    %v419 = vunpack.c.h.b16 %v329
    %v420 = vunpack.c.l.b16 %v330
    %v421 = vunpack.c.h.b16 %v330
    %v422 = vunpack.c.l.b16 %v331
    %v423 = vunpack.c.h.b16 %v331
    %v424 = vunpack.c.l.b16 %v332
    %v425 = vunpack.c.h.b16 %v332
    %v426 = vunpack.c.l.b16 %v333
    %v427 = vunpack.c.h.b16 %v333
    %v428 = vunpack.c.l.b16 %v334
    %v429 = vunpack.c.h.b16 %v334
    %v430 = vunpack.c.l.b16 %v335
    %v431 = vunpack.c.h.b16 %v335
    %v432 = vunpack.c.l.b16 %v336
    %v433 = vunpack.c.h.b16 %v336
    %v434 = vunpack.c.l.b16 %v337
    %v435 = vunpack.c.h.b16 %v337
    %v436 = vunpack.c.l.b16 %v338
    %v437 = vunpack.c.h.b16 %v338
    %v438 = vunpack.c.l.b16 %v339
    %v439 = vunpack.c.h.b16 %v339
    %v440 = vunpack.c.l.b16 %v340
    %v441 = vunpack.c.h.b16 %v340
    %v442 = vunpack.c.l.b16 %v341
    %v443 = vunpack.c.h.b16 %v341
    %v444 = vunpack.c.l.b16 %v342
    %v445 = vunpack.c.h.b16 %v342
    %v446 = vunpack.c.l.b16 %v343
    %v447 = vunpack.c.h.b16 %v343
    %v448 = vunpack.c.l.b16 %v344
    %v449 = vunpack.c.h.b16 %v344
    %v450 = vunpack.c.l.b16 %v345
    %v451 = vunpack.c.h.b16 %v345
    %v452 = vunpack.c.l.b16 %v346
    %v453 = vunpack.c.h.b16 %v346
    %v454 = vunpack.c.l.b16 %v347
    %v455 = vunpack.c.h.b16 %v347
    %v456 = vunpack.c.l.b16 %v348
    %v457 = vunpack.c.h.b16 %v348
    %v458 = vunpack.c.l.b16 %v349
    %v459 = vunpack.c.h.b16 %v349
    %v460 = vunpack.c.l.b16 %v350
    %v461 = vunpack.c.h.b16 %v350
    %v462 = vunpack.c.l.b16 %v351
    %v463 = vunpack.c.h.b16 %v351
    %v464 = vunpack.c.l.b16 %v352
    %v465 = vunpack.c.h.b16 %v352
    %v466 = vunpack.c.l.b16 %v353
    %v467 = vunpack.c.h.b16 %v353
    %v468 = vpack.c.b16 %v408, %v404
    %v469 = vpack.c.b16 %v409, %v405
    %v470 = vpack.c.b16 %v410, %v406
    %v471 = vpack.c.b16 %v411, %v407
    %v472 = vpack.c.b16 %v416, %v412
    %v473 = vpack.c.b16 %v417, %v413
    %v474 = vpack.c.b16 %v418, %v414
    %v475 = vpack.c.b16 %v419, %v415
    %v476 = vpack.c.b16 %v424, %v420
    %v477 = vpack.c.b16 %v425, %v421
    %v478 = vpack.c.b16 %v426, %v422
    %v479 = vpack.c.b16 %v427, %v423
    %v480 = vpack.c.b16 %v432, %v428
    %v481 = vpack.c.b16 %v433, %v429
    %v482 = vpack.c.b16 %v434, %v430
    %v483 = vpack.c.b16 %v435, %v431
    %v484 = vpack.c.b16 %v440, %v436
    %v485 = vpack.c.b16 %v441, %v437
    %v486 = vpack.c.b16 %v442, %v438
    %v487 = vpack.c.b16 %v443, %v439
    %v488 = vpack.c.b16 %v448, %v444
    %v489 = vpack.c.b16 %v449, %v445
    %v490 = vpack.c.b16 %v450, %v446
    %v491 = vpack.c.b16 %v451, %v447
    %v492 = vpack.c.b16 %v456, %v452
    %v493 = vpack.c.b16 %v457, %v453
    %v494 = vpack.c.b16 %v458, %v454
    %v495 = vpack.c.b16 %v459, %v455
    %v496 = vpack.c.b16 %v464, %v460
    %v497 = vpack.c.b16 %v465, %v461
    %v498 = vpack.c.b16 %v466, %v462
    %v499 = vpack.c.b16 %v467, %v463
    %532 = vmatprep.subr.bf16.mxu0 %v469
    %533 = vmatpush1.bf16.msra.mxu0 %v468
    %534 = vmatprep.subr.bf16.mxu0 %v473
    %535 = vmatpush1.bf16.msra.mxu0 %v472
    %536 = vmatprep.subr.bf16.mxu0 %v477
    %537 = vmatpush1.bf16.msra.mxu0 %v476
    %538 = vmatprep.subr.bf16.mxu0 %v481
    %539 = vmatpush1.bf16.msra.mxu0 %v480
    %540 = vmatprep.subr.bf16.mxu0 %v485
    %541 = vmatpush1.bf16.msra.mxu0 %v484
    %542 = vmatprep.subr.bf16.mxu0 %v489
    %543 = vmatpush1.bf16.msra.mxu0 %v488
    %544 = vmatprep.subr.bf16.mxu0 %v493
    %545 = vmatpush1.bf16.msra.mxu0 %v492
    %546 = vmatprep.subr.bf16.mxu0 %v497
    %547 = vmatpush1.bf16.msra.mxu0 %v496
    %548 = vmatprep.subr.bf16.mxu0 0
    %549 = vmatpush1.bf16.msra.mxu0 0
    %550 = vmatprep.subr.bf16.mxu0 0
    %551 = vmatpush1.bf16.msra.mxu0 0
    %552 = vmatprep.subr.bf16.mxu0 0
    %553 = vmatpush1.bf16.msra.mxu0 0
    %554 = vmatprep.subr.bf16.mxu0 0
    %555 = vmatpush1.bf16.msra.mxu0 0
    %556 = vmatprep.subr.bf16.mxu0 0
    %557 = vmatpush1.bf16.msra.mxu0 0
    %558 = vmatprep.subr.bf16.mxu0 0
    %559 = vmatpush1.bf16.msra.mxu0 0
    %560 = vmatprep.subr.bf16.mxu0 0
    %561 = vmatpush1.bf16.msra.mxu0 0
    %562 = vmatprep.subr.bf16.mxu0 0
    %563 = vmatpush1.bf16.msra.mxu0 0
    %564 = vmatprep.mubr.bf16.mxu0 0
    %565 = vmatmul.mubr.bf16.gmra.mrb[0].mxu0 %v370
    %v566 = vpop.f32.mrb[0].mxu0
    %v567 = vadd.f32 0.0, %v566
    %v568 = vpop.f32.mrb[0].mxu0
    %v569 = vadd.f32 0.0, %v568
    %v570 = vpop.f32.mrb[0].mxu0
    %v571 = vpop.f32.mrb[0].mxu0
    %572 = vdwg.mxu0
    %573 = vmatprep.subr.bf16.mxu0 %v471
    %574 = vmatpush1.bf16.msra.mxu0 %v470
    %575 = vmatprep.subr.bf16.mxu0 %v475
    %576 = vmatpush1.bf16.msra.mxu0 %v474
    %577 = vmatprep.subr.bf16.mxu0 %v479
    %578 = vmatpush1.bf16.msra.mxu0 %v478
    %579 = vmatprep.subr.bf16.mxu0 %v483
    %580 = vmatpush1.bf16.msra.mxu0 %v482
    %581 = vmatprep.subr.bf16.mxu0 %v487
    %582 = vmatpush1.bf16.msra.mxu0 %v486
    %583 = vmatprep.subr.bf16.mxu0 %v491
    %584 = vmatpush1.bf16.msra.mxu0 %v490
    %585 = vmatprep.subr.bf16.mxu0 %v495
    %586 = vmatpush1.bf16.msra.mxu0 %v494
    %587 = vmatprep.subr.bf16.mxu0 %v499
    %588 = vmatpush1.bf16.msra.mxu0 %v498
    %589 = vmatprep.subr.bf16.mxu0 0
    %590 = vmatpush1.bf16.msra.mxu0 0
    %591 = vmatprep.subr.bf16.mxu0 0
    %592 = vmatpush1.bf16.msra.mxu0 0
    %593 = vmatprep.subr.bf16.mxu0 0
    %594 = vmatpush1.bf16.msra.mxu0 0
    %595 = vmatprep.subr.bf16.mxu0 0
    %596 = vmatpush1.bf16.msra.mxu0 0
    %597 = vmatprep.subr.bf16.mxu0 0
    %598 = vmatpush1.bf16.msra.mxu0 0
    %599 = vmatprep.subr.bf16.mxu0 0
    %600 = vmatpush1.bf16.msra.mxu0 0
    %601 = vmatprep.subr.bf16.mxu0 0
    %602 = vmatpush1.bf16.msra.mxu0 0
    %603 = vmatprep.subr.bf16.mxu0 0
    %604 = vmatpush1.bf16.msra.mxu0 0
    %605 = vmatprep.mubr.bf16.mxu0 0
    %606 = vmatmul.mubr.bf16.gmra.mrb[0].mxu0 %v370
    %v607 = vpop.f32.mrb[0].mxu0
    %v608 = vadd.f32 0.0, %v607
    %v609 = vpop.f32.mrb[0].mxu0
    %v610 = vadd.f32 0.0, %v609
    %v611 = vpop.f32.mrb[0].mxu0
    %v612 = vpop.f32.mrb[0].mxu0
    %613 = vdwg.mxu0
    %v614 = vadd.f32 %v215, %v567
    %v615 = vadd.f32 %v217, %v569
    %v616 = vadd.f32 %v288, %v608
    %v617 = vadd.f32 %v290, %v610
    %v618 = vxor.u32 %v614, 2147483648
    %v619 = vxor.u32 %v615, 2147483648
    %v620 = vxor.u32 %v616, 2147483648
    %v621 = vmul.f32 %v618, 1.442695
    %v622 = vpow.pop %v621
    %v623 = vmul.f32 %v619, 1.442695
    %v624 = vpow.pop %v623
    %v625 = vmul.f32 %v620, 1.442695
    %v626 = vpow.pop %v625
    %v627 = vadd.f32 %v622, 1.0
    %v628 = vadd.f32 %v624, 1.0
    %v629 = vadd.f32 %v626, 1.0
    %v630 = vrcp.pop %v627
    %v631 = vmul.f32 1.0, %v630
    %v632 = vrcp.pop %v628
    %v633 = vmul.f32 1.0, %v632
    %v634 = vrcp.pop %v629
    %v635 = vmul.f32 1.0, %v634
    %v636 = vtanh.pop %v617
    %v637 = vmul.f32 %v633, %v367
    %v638 = vmul.f32 %v631, %v636
    %v639 = vadd.f32 %v637, %v638
    %v640 = vtanh.pop %v639
    %v641 = vmul.f32 %v635, %v640
    %v642 = vpack.c.bf16 %v641, %v641
    %v644 = vrot.slane %v642, 4
    %646 = vst [vmem:[#allocation2] sm:$0xf0] %v644
    %647 = vmatprep.subr.bf16.mxu0 %v469
    %648 = vmatpush1.bf16.msra.mxu0 %v468
    %649 = vmatprep.subr.bf16.mxu0 %v473
    %650 = vmatpush1.bf16.msra.mxu0 %v472
    %651 = vmatprep.subr.bf16.mxu0 %v477
    %652 = vmatpush1.bf16.msra.mxu0 %v476
    %653 = vmatprep.subr.bf16.mxu0 %v481
    %654 = vmatpush1.bf16.msra.mxu0 %v480
    %655 = vmatprep.subr.bf16.mxu0 %v485
    %656 = vmatpush1.bf16.msra.mxu0 %v484
    %657 = vmatprep.subr.bf16.mxu0 %v489
    %658 = vmatpush1.bf16.msra.mxu0 %v488
    %659 = vmatprep.subr.bf16.mxu0 %v493
    %660 = vmatpush1.bf16.msra.mxu0 %v492
    %661 = vmatprep.subr.bf16.mxu0 %v497
    %662 = vmatpush1.bf16.msra.mxu0 %v496
    %663 = vmatprep.subr.bf16.mxu0 0
    %664 = vmatpush1.bf16.msra.mxu0 0
    %665 = vmatprep.subr.bf16.mxu0 0
    %666 = vmatpush1.bf16.msra.mxu0 0
    %667 = vmatprep.subr.bf16.mxu0 0
    %668 = vmatpush1.bf16.msra.mxu0 0
    %669 = vmatprep.subr.bf16.mxu0 0
    %670 = vmatpush1.bf16.msra.mxu0 0
    %671 = vmatprep.subr.bf16.mxu0 0
    %672 = vmatpush1.bf16.msra.mxu0 0
    %673 = vmatprep.subr.bf16.mxu0 0
    %674 = vmatpush1.bf16.msra.mxu0 0
    %675 = vmatprep.subr.bf16.mxu0 0
    %676 = vmatpush1.bf16.msra.mxu0 0
    %677 = vmatprep.subr.bf16.mxu0 0
    %678 = vmatpush1.bf16.msra.mxu0 0
    %679 = vmatprep.mubr.bf16.mxu0 0
    %680 = vmatmul.mubr.bf16.gmra.mrb[0].mxu0 %v642
    %v681 = vpop.f32.mrb[0].mxu0
    %v682 = vadd.f32 0.0, %v681
    %v683 = vpop.f32.mrb[0].mxu0
    %v684 = vadd.f32 0.0, %v683
    %v685 = vpop.f32.mrb[0].mxu0
    %v686 = vpop.f32.mrb[0].mxu0
    %687 = vdwg.mxu0
    %688 = vmatprep.subr.bf16.mxu0 %v471
    %689 = vmatpush1.bf16.msra.mxu0 %v470
    %690 = vmatprep.subr.bf16.mxu0 %v475
    %691 = vmatpush1.bf16.msra.mxu0 %v474
    %692 = vmatprep.subr.bf16.mxu0 %v479
    %693 = vmatpush1.bf16.msra.mxu0 %v478
    %694 = vmatprep.subr.bf16.mxu0 %v483
    %695 = vmatpush1.bf16.msra.mxu0 %v482
    %696 = vmatprep.subr.bf16.mxu0 %v487
    %697 = vmatpush1.bf16.msra.mxu0 %v486
    %698 = vmatprep.subr.bf16.mxu0 %v491
    %699 = vmatpush1.bf16.msra.mxu0 %v490
    %700 = vmatprep.subr.bf16.mxu0 %v495
    %701 = vmatpush1.bf16.msra.mxu0 %v494
    %702 = vmatprep.subr.bf16.mxu0 %v499
    %703 = vmatpush1.bf16.msra.mxu0 %v498
    %704 = vmatprep.subr.bf16.mxu0 0
    %705 = vmatpush1.bf16.msra.mxu0 0
    %706 = vmatprep.subr.bf16.mxu0 0
    %707 = vmatpush1.bf16.msra.mxu0 0
    %708 = vmatprep.subr.bf16.mxu0 0
    %709 = vmatpush1.bf16.msra.mxu0 0
    %710 = vmatprep.subr.bf16.mxu0 0
    %711 = vmatpush1.bf16.msra.mxu0 0
    %712 = vmatprep.subr.bf16.mxu0 0
    %713 = vmatpush1.bf16.msra.mxu0 0
    %714 = vmatprep.subr.bf16.mxu0 0
    %715 = vmatpush1.bf16.msra.mxu0 0
    %716 = vmatprep.subr.bf16.mxu0 0
    %717 = vmatpush1.bf16.msra.mxu0 0
    %718 = vmatprep.subr.bf16.mxu0 0
    %719 = vmatpush1.bf16.msra.mxu0 0
    %720 = vmatprep.mubr.bf16.mxu0 0
    %721 = vmatmul.mubr.bf16.gmra.mrb[0].mxu0 %v642
    %v722 = vpop.f32.mrb[0].mxu0
    %v723 = vadd.f32 0.0, %v722
    %v724 = vpop.f32.mrb[0].mxu0
    %v725 = vadd.f32 0.0, %v724
    %v726 = vpop.f32.mrb[0].mxu0
    %v727 = vpop.f32.mrb[0].mxu0
    %728 = vdwg.mxu0
    %v729 = vadd.f32 %v221, %v682
    %v730 = vadd.f32 %v223, %v684
    %v731 = vadd.f32 %v294, %v723
    %v732 = vadd.f32 %v296, %v725
    %v733 = vxor.u32 %v729, 2147483648
    %v734 = vxor.u32 %v730, 2147483648
    %v735 = vxor.u32 %v731, 2147483648
    %v736 = vmul.f32 %v733, 1.442695
    %v737 = vpow.pop %v736
    %v738 = vmul.f32 %v734, 1.442695
    %v739 = vpow.pop %v738
    %v740 = vmul.f32 %v735, 1.442695
    %v741 = vpow.pop %v740
    %v742 = vadd.f32 %v737, 1.0
    %v743 = vadd.f32 %v739, 1.0
    %v744 = vadd.f32 %v741, 1.0
    %v745 = vrcp.pop %v742
    %v746 = vmul.f32 1.0, %v745
    %v747 = vrcp.pop %v743
    %v748 = vmul.f32 1.0, %v747
    %v749 = vrcp.pop %v744
    %v750 = vmul.f32 1.0, %v749
    %v751 = vtanh.pop %v732
    %v752 = vmul.f32 %v748, %v639
    %v753 = vmul.f32 %v746, %v751
    %v754 = vadd.f32 %v752, %v753
    %v755 = vtanh.pop %v754
    %v756 = vmul.f32 %v750, %v755
    %v757 = vpack.c.bf16 %v756, %v756
    %758 = vst [vmem:[#allocation2 + $0x8] sm:$0xf] %v757
    %759 = vmatprep.subr.bf16.mxu0 %v469
    %760 = vmatpush1.bf16.msra.mxu0 %v468
    %761 = vmatprep.subr.bf16.mxu0 %v473
    %762 = vmatpush1.bf16.msra.mxu0 %v472
    %763 = vmatprep.subr.bf16.mxu0 %v477
    %764 = vmatpush1.bf16.msra.mxu0 %v476
    %765 = vmatprep.subr.bf16.mxu0 %v481
    %766 = vmatpush1.bf16.msra.mxu0 %v480
    %767 = vmatprep.subr.bf16.mxu0 %v485
    %768 = vmatpush1.bf16.msra.mxu0 %v484
    %769 = vmatprep.subr.bf16.mxu0 %v489
    %770 = vmatpush1.bf16.msra.mxu0 %v488
    %771 = vmatprep.subr.bf16.mxu0 %v493
    %772 = vmatpush1.bf16.msra.mxu0 %v492
    %773 = vmatprep.subr.bf16.mxu0 %v497
    %774 = vmatpush1.bf16.msra.mxu0 %v496
    %775 = vmatprep.subr.bf16.mxu0 0
    %776 = vmatpush1.bf16.msra.mxu0 0
    %777 = vmatprep.subr.bf16.mxu0 0
    %778 = vmatpush1.bf16.msra.mxu0 0
    %779 = vmatprep.subr.bf16.mxu0 0
    %780 = vmatpush1.bf16.msra.mxu0 0
    %781 = vmatprep.subr.bf16.mxu0 0
    %782 = vmatpush1.bf16.msra.mxu0 0
    %783 = vmatprep.subr.bf16.mxu0 0
    %784 = vmatpush1.bf16.msra.mxu0 0
    %785 = vmatprep.subr.bf16.mxu0 0
    %786 = vmatpush1.bf16.msra.mxu0 0
    %787 = vmatprep.subr.bf16.mxu0 0
    %788 = vmatpush1.bf16.msra.mxu0 0
    %789 = vmatprep.subr.bf16.mxu0 0
    %790 = vmatpush1.bf16.msra.mxu0 0
    %791 = vmatprep.mubr.bf16.mxu0 0
    %792 = vmatmul.mubr.bf16.gmra.mrb[0].mxu0 %v757
    %v793 = vpop.f32.mrb[0].mxu0
    %v794 = vadd.f32 0.0, %v793
    %v795 = vpop.f32.mrb[0].mxu0
    %v796 = vadd.f32 0.0, %v795
    %v797 = vpop.f32.mrb[0].mxu0
    %v798 = vpop.f32.mrb[0].mxu0
    %799 = vdwg.mxu0
    %800 = vmatprep.subr.bf16.mxu0 %v471
    %801 = vmatpush1.bf16.msra.mxu0 %v470
    %802 = vmatprep.subr.bf16.mxu0 %v475
    %803 = vmatpush1.bf16.msra.mxu0 %v474
    %804 = vmatprep.subr.bf16.mxu0 %v479
    %805 = vmatpush1.bf16.msra.mxu0 %v478
    %806 = vmatprep.subr.bf16.mxu0 %v483
    %807 = vmatpush1.bf16.msra.mxu0 %v482
    %808 = vmatprep.subr.bf16.mxu0 %v487
    %809 = vmatpush1.bf16.msra.mxu0 %v486
    %810 = vmatprep.subr.bf16.mxu0 %v491
    %811 = vmatpush1.bf16.msra.mxu0 %v490
    %812 = vmatprep.subr.bf16.mxu0 %v495
    %813 = vmatpush1.bf16.msra.mxu0 %v494
    %814 = vmatprep.subr.bf16.mxu0 %v499
    %815 = vmatpush1.bf16.msra.mxu0 %v498
    %816 = vmatprep.subr.bf16.mxu0 0
    %817 = vmatpush1.bf16.msra.mxu0 0
    %818 = vmatprep.subr.bf16.mxu0 0
    %819 = vmatpush1.bf16.msra.mxu0 0
    %820 = vmatprep.subr.bf16.mxu0 0
    %821 = vmatpush1.bf16.msra.mxu0 0
    %822 = vmatprep.subr.bf16.mxu0 0
    %823 = vmatpush1.bf16.msra.mxu0 0
    %824 = vmatprep.subr.bf16.mxu0 0
    %825 = vmatpush1.bf16.msra.mxu0 0
    %826 = vmatprep.subr.bf16.mxu0 0
    %827 = vmatpush1.bf16.msra.mxu0 0
    %828 = vmatprep.subr.bf16.mxu0 0
    %829 = vmatpush1.bf16.msra.mxu0 0
    %830 = vmatprep.subr.bf16.mxu0 0
    %831 = vmatpush1.bf16.msra.mxu0 0
    %832 = vmatprep.mubr.bf16.mxu0 0
    %833 = vmatmul.mubr.bf16.gmra.mrb[0].mxu0 %v757
    %v834 = vpop.f32.mrb[0].mxu0
    %v835 = vadd.f32 0.0, %v834
    %v836 = vpop.f32.mrb[0].mxu0
    %v837 = vadd.f32 0.0, %v836
    %v838 = vpop.f32.mrb[0].mxu0
    %v839 = vpop.f32.mrb[0].mxu0
    %840 = vdwg.mxu0
    %v841 = vadd.f32 %v225, %v794
    %v842 = vadd.f32 %v227, %v796
    %v843 = vadd.f32 %v298, %v835
    %v844 = vadd.f32 %v300, %v837
    %v845 = vxor.u32 %v841, 2147483648
    %v846 = vxor.u32 %v842, 2147483648
    %v847 = vxor.u32 %v843, 2147483648
    %v848 = vmul.f32 %v845, 1.442695
    %v849 = vpow.pop %v848
    %v850 = vmul.f32 %v846, 1.442695
    %v851 = vpow.pop %v850
    %v852 = vmul.f32 %v847, 1.442695
    %v853 = vpow.pop %v852
    %v854 = vadd.f32 %v849, 1.0
    %v855 = vadd.f32 %v851, 1.0
    %v856 = vadd.f32 %v853, 1.0
    %v857 = vrcp.pop %v854
    %v858 = vmul.f32 1.0, %v857
    %v859 = vrcp.pop %v855
    %v860 = vmul.f32 1.0, %v859
    %v861 = vrcp.pop %v856
    %v862 = vmul.f32 1.0, %v861
    %v863 = vtanh.pop %v844
    %v864 = vmul.f32 %v860, %v754
    %v865 = vmul.f32 %v858, %v863
    %v866 = vadd.f32 %v864, %v865
    %v867 = vtanh.pop %v866
    %v868 = vmul.f32 %v862, %v867
    %v869 = vpack.c.bf16 %v868, %v868
    %v871 = vrot.slane %v869, 4
    %873 = vst [vmem:[#allocation2 + $0x8] sm:$0xf0] %v871
    %874 = vmatprep.subr.bf16.mxu0 %v469
    %875 = vmatpush1.bf16.msra.mxu0 %v468
    %876 = vmatprep.subr.bf16.mxu0 %v473
    %877 = vmatpush1.bf16.msra.mxu0 %v472
    %878 = vmatprep.subr.bf16.mxu0 %v477
    %879 = vmatpush1.bf16.msra.mxu0 %v476
    %880 = vmatprep.subr.bf16.mxu0 %v481
    %881 = vmatpush1.bf16.msra.mxu0 %v480
    %882 = vmatprep.subr.bf16.mxu0 %v485
    %883 = vmatpush1.bf16.msra.mxu0 %v484
    %884 = vmatprep.subr.bf16.mxu0 %v489
    %885 = vmatpush1.bf16.msra.mxu0 %v488
    %886 = vmatprep.subr.bf16.mxu0 %v493
    %887 = vmatpush1.bf16.msra.mxu0 %v492
    %888 = vmatprep.subr.bf16.mxu0 %v497
    %889 = vmatpush1.bf16.msra.mxu0 %v496
    %890 = vmatprep.subr.bf16.mxu0 0
    %891 = vmatpush1.bf16.msra.mxu0 0
    %892 = vmatprep.subr.bf16.mxu0 0
    %893 = vmatpush1.bf16.msra.mxu0 0
    %894 = vmatprep.subr.bf16.mxu0 0
    %895 = vmatpush1.bf16.msra.mxu0 0
    %896 = vmatprep.subr.bf16.mxu0 0
    %897 = vmatpush1.bf16.msra.mxu0 0
    %898 = vmatprep.subr.bf16.mxu0 0
    %899 = vmatpush1.bf16.msra.mxu0 0
    %900 = vmatprep.subr.bf16.mxu0 0
    %901 = vmatpush1.bf16.msra.mxu0 0
    %902 = vmatprep.subr.bf16.mxu0 0
    %903 = vmatpush1.bf16.msra.mxu0 0
    %904 = vmatprep.subr.bf16.mxu0 0
    %905 = vmatpush1.bf16.msra.mxu0 0
    %906 = vmatprep.mubr.bf16.mxu0 0
    %907 = vmatmul.mubr.bf16.gmra.mrb[0].mxu0 %v869
    %v908 = vpop.f32.mrb[0].mxu0
    %v909 = vadd.f32 0.0, %v908
    %v910 = vpop.f32.mrb[0].mxu0
    %v911 = vadd.f32 0.0, %v910
    %v912 = vpop.f32.mrb[0].mxu0
    %v913 = vpop.f32.mrb[0].mxu0
    %914 = vdwg.mxu0
    %915 = vmatprep.subr.bf16.mxu0 %v471
    %916 = vmatpush1.bf16.msra.mxu0 %v470
    %917 = vmatprep.subr.bf16.mxu0 %v475
    %918 = vmatpush1.bf16.msra.mxu0 %v474
    %919 = vmatprep.subr.bf16.mxu0 %v479
    %920 = vmatpush1.bf16.msra.mxu0 %v478
    %921 = vmatprep.subr.bf16.mxu0 %v483
    %922 = vmatpush1.bf16.msra.mxu0 %v482
    %923 = vmatprep.subr.bf16.mxu0 %v487
    %924 = vmatpush1.bf16.msra.mxu0 %v486
    %925 = vmatprep.subr.bf16.mxu0 %v491
    %926 = vmatpush1.bf16.msra.mxu0 %v490
    %927 = vmatprep.subr.bf16.mxu0 %v495
    %928 = vmatpush1.bf16.msra.mxu0 %v494
    %929 = vmatprep.subr.bf16.mxu0 %v499
    %930 = vmatpush1.bf16.msra.mxu0 %v498
    %931 = vmatprep.subr.bf16.mxu0 0
    %932 = vmatpush1.bf16.msra.mxu0 0
    %933 = vmatprep.subr.bf16.mxu0 0
    %934 = vmatpush1.bf16.msra.mxu0 0
    %935 = vmatprep.subr.bf16.mxu0 0
    %936 = vmatpush1.bf16.msra.mxu0 0
    %937 = vmatprep.subr.bf16.mxu0 0
    %938 = vmatpush1.bf16.msra.mxu0 0
    %939 = vmatprep.subr.bf16.mxu0 0
    %940 = vmatpush1.bf16.msra.mxu0 0
    %941 = vmatprep.subr.bf16.mxu0 0
    %942 = vmatpush1.bf16.msra.mxu0 0
    %943 = vmatprep.subr.bf16.mxu0 0
    %944 = vmatpush1.bf16.msra.mxu0 0
    %945 = vmatprep.subr.bf16.mxu0 0
    %946 = vmatpush1.bf16.msra.mxu0 0
    %947 = vmatprep.mubr.bf16.mxu0 0
    %948 = vmatmul.mubr.bf16.gmra.mrb[0].mxu0 %v869
    %v949 = vpop.f32.mrb[0].mxu0
    %v950 = vadd.f32 0.0, %v949
    %v951 = vpop.f32.mrb[0].mxu0
    %v952 = vadd.f32 0.0, %v951
    %v953 = vpop.f32.mrb[0].mxu0
    %v954 = vpop.f32.mrb[0].mxu0
    %955 = vdwg.mxu0
    %v956 = vadd.f32 %v231, %v909
    %v957 = vadd.f32 %v233, %v911
    %v958 = vadd.f32 %v304, %v950
    %v959 = vadd.f32 %v306, %v952
    %v960 = vxor.u32 %v956, 2147483648
    %v961 = vxor.u32 %v957, 2147483648
    %v962 = vxor.u32 %v958, 2147483648
    %v963 = vmul.f32 %v960, 1.442695
    %v964 = vpow.pop %v963
    %v965 = vmul.f32 %v961, 1.442695
    %v966 = vpow.pop %v965
    %v967 = vmul.f32 %v962, 1.442695
    %v968 = vpow.pop %v967
    %v969 = vadd.f32 %v964, 1.0
    %v970 = vadd.f32 %v966, 1.0
    %v971 = vadd.f32 %v968, 1.0
    %v972 = vrcp.pop %v969
    %v973 = vmul.f32 1.0, %v972
    %v974 = vrcp.pop %v970
    %v975 = vmul.f32 1.0, %v974
    %v976 = vrcp.pop %v971
    %v977 = vmul.f32 1.0, %v976
    %v978 = vtanh.pop %v959
    %v979 = vmul.f32 %v975, %v866
    %v980 = vmul.f32 %v973, %v978
    %v981 = vadd.f32 %v979, %v980
    %v982 = vtanh.pop %v981
    %v983 = vmul.f32 %v977, %v982
    %v984 = vpack.c.bf16 %v983, %v983
    %985 = vst [vmem:[#allocation2 + $0x10] sm:$0xf] %v984
    %986 = vmatprep.subr.bf16.mxu0 %v469
    %987 = vmatpush1.bf16.msra.mxu0 %v468
    %988 = vmatprep.subr.bf16.mxu0 %v473
    %989 = vmatpush1.bf16.msra.mxu0 %v472
    %990 = vmatprep.subr.bf16.mxu0 %v477
    %991 = vmatpush1.bf16.msra.mxu0 %v476
    %992 = vmatprep.subr.bf16.mxu0 %v481
    %993 = vmatpush1.bf16.msra.mxu0 %v480
    %994 = vmatprep.subr.bf16.mxu0 %v485
    %995 = vmatpush1.bf16.msra.mxu0 %v484
    %996 = vmatprep.subr.bf16.mxu0 %v489
    %997 = vmatpush1.bf16.msra.mxu0 %v488
    %998 = vmatprep.subr.bf16.mxu0 %v493
    %999 = vmatpush1.bf16.msra.mxu0 %v492
    %1000 = vmatprep.subr.bf16.mxu0 %v497
    %1001 = vmatpush1.bf16.msra.mxu0 %v496
    %1002 = vmatprep.subr.bf16.mxu0 0
    %1003 = vmatpush1.bf16.msra.mxu0 0
    %1004 = vmatprep.subr.bf16.mxu0 0
    %1005 = vmatpush1.bf16.msra.mxu0 0
    %1006 = vmatprep.subr.bf16.mxu0 0
    %1007 = vmatpush1.bf16.msra.mxu0 0
    %1008 = vmatprep.subr.bf16.mxu0 0
    %1009 = vmatpush1.bf16.msra.mxu0 0
    %1010 = vmatprep.subr.bf16.mxu0 0
    %1011 = vmatpush1.bf16.msra.mxu0 0
    %1012 = vmatprep.subr.bf16.mxu0 0
    %1013 = vmatpush1.bf16.msra.mxu0 0
    %1014 = vmatprep.subr.bf16.mxu0 0
    %1015 = vmatpush1.bf16.msra.mxu0 0
    %1016 = vmatprep.subr.bf16.mxu0 0
    %1017 = vmatpush1.bf16.msra.mxu0 0
    %1018 = vmatprep.mubr.bf16.mxu0 0
    %1019 = vmatmul.mubr.bf16.gmra.mrb[0].mxu0 %v984
    %v1020 = vpop.f32.mrb[0].mxu0
    %v1021 = vadd.f32 0.0, %v1020
    %v1022 = vpop.f32.mrb[0].mxu0
    %v1023 = vadd.f32 0.0, %v1022
    %v1024 = vpop.f32.mrb[0].mxu0
    %v1025 = vpop.f32.mrb[0].mxu0
    %1026 = vdwg.mxu0
    %1027 = vmatprep.subr.bf16.mxu0 %v471
    %1028 = vmatpush1.bf16.msra.mxu0 %v470
    %1029 = vmatprep.subr.bf16.mxu0 %v475
    %1030 = vmatpush1.bf16.msra.mxu0 %v474
    %1031 = vmatprep.subr.bf16.mxu0 %v479
    %1032 = vmatpush1.bf16.msra.mxu0 %v478
    %1033 = vmatprep.subr.bf16.mxu0 %v483
    %1034 = vmatpush1.bf16.msra.mxu0 %v482
    %1035 = vmatprep.subr.bf16.mxu0 %v487
    %1036 = vmatpush1.bf16.msra.mxu0 %v486
    %1037 = vmatprep.subr.bf16.mxu0 %v491
    %1038 = vmatpush1.bf16.msra.mxu0 %v490
    %1039 = vmatprep.subr.bf16.mxu0 %v495
    %1040 = vmatpush1.bf16.msra.mxu0 %v494
    %1041 = vmatprep.subr.bf16.mxu0 %v499
    %1042 = vmatpush1.bf16.msra.mxu0 %v498
    %1043 = vmatprep.subr.bf16.mxu0 0
    %1044 = vmatpush1.bf16.msra.mxu0 0
    %1045 = vmatprep.subr.bf16.mxu0 0
    %1046 = vmatpush1.bf16.msra.mxu0 0
    %1047 = vmatprep.subr.bf16.mxu0 0
    %1048 = vmatpush1.bf16.msra.mxu0 0
    %1049 = vmatprep.subr.bf16.mxu0 0
    %1050 = vmatpush1.bf16.msra.mxu0 0
    %1051 = vmatprep.subr.bf16.mxu0 0
    %1052 = vmatpush1.bf16.msra.mxu0 0
    %1053 = vmatprep.subr.bf16.mxu0 0
    %1054 = vmatpush1.bf16.msra.mxu0 0
    %1055 = vmatprep.subr.bf16.mxu0 0
    %1056 = vmatpush1.bf16.msra.mxu0 0
    %1057 = vmatprep.subr.bf16.mxu0 0
    %1058 = vmatpush1.bf16.msra.mxu0 0
    %1059 = vmatprep.mubr.bf16.mxu0 0
    %1060 = vmatmul.mubr.bf16.gmra.mrb[0].mxu0 %v984
    %v1061 = vpop.f32.mrb[0].mxu0
    %v1062 = vadd.f32 0.0, %v1061
    %v1063 = vpop.f32.mrb[0].mxu0
    %v1064 = vadd.f32 0.0, %v1063
    %v1065 = vpop.f32.mrb[0].mxu0
    %v1066 = vpop.f32.mrb[0].mxu0
    %1067 = vdwg.mxu0
    %v1068 = vadd.f32 %v235, %v1021
    %v1069 = vadd.f32 %v237, %v1023
    %v1070 = vadd.f32 %v308, %v1062
    %v1071 = vadd.f32 %v310, %v1064
    %v1072 = vxor.u32 %v1068, 2147483648
    %v1073 = vxor.u32 %v1069, 2147483648
    %v1074 = vxor.u32 %v1070, 2147483648
    %v1075 = vmul.f32 %v1072, 1.442695
    %v1076 = vpow.pop %v1075
    %v1077 = vmul.f32 %v1073, 1.442695
    %v1078 = vpow.pop %v1077
    %v1079 = vmul.f32 %v1074, 1.442695
    %v1080 = vpow.pop %v1079
    %v1081 = vadd.f32 %v1076, 1.0
    %v1082 = vadd.f32 %v1078, 1.0
    %v1083 = vadd.f32 %v1080, 1.0
    %v1084 = vrcp.pop %v1081
    %v1085 = vmul.f32 1.0, %v1084
    %v1086 = vrcp.pop %v1082
    %v1087 = vmul.f32 1.0, %v1086
    %v1088 = vrcp.pop %v1083
    %v1089 = vmul.f32 1.0, %v1088
    %v1090 = vtanh.pop %v1071
    %v1091 = vmul.f32 %v1087, %v981
    %v1092 = vmul.f32 %v1085, %v1090
    %v1093 = vadd.f32 %v1091, %v1092
    %v1094 = vtanh.pop %v1093
    %v1095 = vmul.f32 %v1089, %v1094
    %v1096 = vpack.c.bf16 %v1095, %v1095
    %v1098 = vrot.slane %v1096, 4
    %1100 = vst [vmem:[#allocation2 + $0x10] sm:$0xf0] %v1098
    %1101 = vmatprep.subr.bf16.mxu0 %v469
    %1102 = vmatpush1.bf16.msra.mxu0 %v468
    %1103 = vmatprep.subr.bf16.mxu0 %v473
    %1104 = vmatpush1.bf16.msra.mxu0 %v472
    %1105 = vmatprep.subr.bf16.mxu0 %v477
    %1106 = vmatpush1.bf16.msra.mxu0 %v476
    %1107 = vmatprep.subr.bf16.mxu0 %v481
    %1108 = vmatpush1.bf16.msra.mxu0 %v480
    %1109 = vmatprep.subr.bf16.mxu0 %v485
    %1110 = vmatpush1.bf16.msra.mxu0 %v484
    %1111 = vmatprep.subr.bf16.mxu0 %v489
    %1112 = vmatpush1.bf16.msra.mxu0 %v488
    %1113 = vmatprep.subr.bf16.mxu0 %v493
    %1114 = vmatpush1.bf16.msra.mxu0 %v492
    %1115 = vmatprep.subr.bf16.mxu0 %v497
    %1116 = vmatpush1.bf16.msra.mxu0 %v496
    %1117 = vmatprep.subr.bf16.mxu0 0
    %1118 = vmatpush1.bf16.msra.mxu0 0
    %1119 = vmatprep.subr.bf16.mxu0 0
    %1120 = vmatpush1.bf16.msra.mxu0 0
    %1121 = vmatprep.subr.bf16.mxu0 0
    %1122 = vmatpush1.bf16.msra.mxu0 0
    %1123 = vmatprep.subr.bf16.mxu0 0
    %1124 = vmatpush1.bf16.msra.mxu0 0
    %1125 = vmatprep.subr.bf16.mxu0 0
    %1126 = vmatpush1.bf16.msra.mxu0 0
    %1127 = vmatprep.subr.bf16.mxu0 0
    %1128 = vmatpush1.bf16.msra.mxu0 0
    %1129 = vmatprep.subr.bf16.mxu0 0
    %1130 = vmatpush1.bf16.msra.mxu0 0
    %1131 = vmatprep.subr.bf16.mxu0 0
    %1132 = vmatpush1.bf16.msra.mxu0 0
    %1133 = vmatprep.mubr.bf16.mxu0 0
    %1134 = vmatmul.mubr.bf16.gmra.mrb[0].mxu0 %v1096
    %v1135 = vpop.f32.mrb[0].mxu0
    %v1136 = vadd.f32 0.0, %v1135
    %v1137 = vpop.f32.mrb[0].mxu0
    %v1138 = vadd.f32 0.0, %v1137
    %v1139 = vpop.f32.mrb[0].mxu0
    %v1140 = vpop.f32.mrb[0].mxu0
    %1141 = vdwg.mxu0
    %1142 = vmatprep.subr.bf16.mxu0 %v471
    %1143 = vmatpush1.bf16.msra.mxu0 %v470
    %1144 = vmatprep.subr.bf16.mxu0 %v475
    %1145 = vmatpush1.bf16.msra.mxu0 %v474
    %1146 = vmatprep.subr.bf16.mxu0 %v479
    %1147 = vmatpush1.bf16.msra.mxu0 %v478
    %1148 = vmatprep.subr.bf16.mxu0 %v483
    %1149 = vmatpush1.bf16.msra.mxu0 %v482
    %1150 = vmatprep.subr.bf16.mxu0 %v487
    %1151 = vmatpush1.bf16.msra.mxu0 %v486
    %1152 = vmatprep.subr.bf16.mxu0 %v491
    %1153 = vmatpush1.bf16.msra.mxu0 %v490
    %1154 = vmatprep.subr.bf16.mxu0 %v495
    %1155 = vmatpush1.bf16.msra.mxu0 %v494
    %1156 = vmatprep.subr.bf16.mxu0 %v499
    %1157 = vmatpush1.bf16.msra.mxu0 %v498
    %1158 = vmatprep.subr.bf16.mxu0 0
    %1159 = vmatpush1.bf16.msra.mxu0 0
    %1160 = vmatprep.subr.bf16.mxu0 0
    %1161 = vmatpush1.bf16.msra.mxu0 0
    %1162 = vmatprep.subr.bf16.mxu0 0
    %1163 = vmatpush1.bf16.msra.mxu0 0
    %1164 = vmatprep.subr.bf16.mxu0 0
    %1165 = vmatpush1.bf16.msra.mxu0 0
    %1166 = vmatprep.subr.bf16.mxu0 0
    %1167 = vmatpush1.bf16.msra.mxu0 0
    %1168 = vmatprep.subr.bf16.mxu0 0
    %1169 = vmatpush1.bf16.msra.mxu0 0
    %1170 = vmatprep.subr.bf16.mxu0 0
    %1171 = vmatpush1.bf16.msra.mxu0 0
    %1172 = vmatprep.subr.bf16.mxu0 0
    %1173 = vmatpush1.bf16.msra.mxu0 0
    %1174 = vmatprep.mubr.bf16.mxu0 0
    %1175 = vmatmul.mubr.bf16.gmra.mrb[0].mxu0 %v1096
    %v1176 = vpop.f32.mrb[0].mxu0
    %v1177 = vadd.f32 0.0, %v1176
    %v1178 = vpop.f32.mrb[0].mxu0
    %v1179 = vadd.f32 0.0, %v1178
    %v1180 = vpop.f32.mrb[0].mxu0
    %v1181 = vpop.f32.mrb[0].mxu0
    %1182 = vdwg.mxu0
    %v1183 = vadd.f32 %v241, %v1136
    %v1184 = vadd.f32 %v243, %v1138
    %v1185 = vadd.f32 %v314, %v1177
    %v1186 = vadd.f32 %v316, %v1179
    %v1187 = vxor.u32 %v1183, 2147483648
    %v1188 = vxor.u32 %v1184, 2147483648
    %v1189 = vxor.u32 %v1185, 2147483648
    %v1190 = vmul.f32 %v1187, 1.442695
    %v1191 = vpow.pop %v1190
    %v1192 = vmul.f32 %v1188, 1.442695
    %v1193 = vpow.pop %v1192
    %v1194 = vmul.f32 %v1189, 1.442695
    %v1195 = vpow.pop %v1194
    %v1196 = vadd.f32 %v1191, 1.0
    %v1197 = vadd.f32 %v1193, 1.0
    %v1198 = vadd.f32 %v1195, 1.0
    %v1199 = vrcp.pop %v1196
    %v1200 = vmul.f32 1.0, %v1199
    %v1201 = vrcp.pop %v1197
    %v1202 = vmul.f32 1.0, %v1201
    %v1203 = vrcp.pop %v1198
    %v1204 = vmul.f32 1.0, %v1203
    %v1205 = vtanh.pop %v1186
    %v1206 = vmul.f32 %v1202, %v1093
    %v1207 = vmul.f32 %v1200, %v1205
    %v1208 = vadd.f32 %v1206, %v1207
    %v1209 = vtanh.pop %v1208
    %v1210 = vmul.f32 %v1204, %v1209
    %v1211 = vpack.c.bf16 %v1210, %v1210
    %1212 = vst [vmem:[#allocation2 + $0x18] sm:$0xf] %v1211
    %1213 = vmatprep.subr.bf16.mxu0 %v469
    %1214 = vmatpush1.bf16.msra.mxu0 %v468
    %1215 = vmatprep.subr.bf16.mxu0 %v473
    %1216 = vmatpush1.bf16.msra.mxu0 %v472
    %1217 = vmatprep.subr.bf16.mxu0 %v477
    %1218 = vmatpush1.bf16.msra.mxu0 %v476
    %1219 = vmatprep.subr.bf16.mxu0 %v481
    %1220 = vmatpush1.bf16.msra.mxu0 %v480
    %1221 = vmatprep.subr.bf16.mxu0 %v485
    %1222 = vmatpush1.bf16.msra.mxu0 %v484
    %1223 = vmatprep.subr.bf16.mxu0 %v489
    %1224 = vmatpush1.bf16.msra.mxu0 %v488
    %1225 = vmatprep.subr.bf16.mxu0 %v493
    %1226 = vmatpush1.bf16.msra.mxu0 %v492
    %1227 = vmatprep.subr.bf16.mxu0 %v497
    %1228 = vmatpush1.bf16.msra.mxu0 %v496
    %1229 = vmatprep.subr.bf16.mxu0 0
    %1230 = vmatpush1.bf16.msra.mxu0 0
    %1231 = vmatprep.subr.bf16.mxu0 0
    %1232 = vmatpush1.bf16.msra.mxu0 0
    %1233 = vmatprep.subr.bf16.mxu0 0
    %1234 = vmatpush1.bf16.msra.mxu0 0
    %1235 = vmatprep.subr.bf16.mxu0 0
    %1236 = vmatpush1.bf16.msra.mxu0 0
    %1237 = vmatprep.subr.bf16.mxu0 0
    %1238 = vmatpush1.bf16.msra.mxu0 0
    %1239 = vmatprep.subr.bf16.mxu0 0
    %1240 = vmatpush1.bf16.msra.mxu0 0
    %1241 = vmatprep.subr.bf16.mxu0 0
    %1242 = vmatpush1.bf16.msra.mxu0 0
    %1243 = vmatprep.subr.bf16.mxu0 0
    %1244 = vmatpush1.bf16.msra.mxu0 0
    %1245 = vmatprep.mubr.bf16.mxu0 0
    %1246 = vmatmul.mubr.bf16.gmra.mrb[0].mxu0 %v1211
    %v1247 = vpop.f32.mrb[0].mxu0
    %v1248 = vadd.f32 0.0, %v1247
    %v1249 = vpop.f32.mrb[0].mxu0
    %v1250 = vadd.f32 0.0, %v1249
    %v1251 = vpop.f32.mrb[0].mxu0
    %v1252 = vpop.f32.mrb[0].mxu0
    %1253 = vdwg.mxu0
    %1254 = vmatprep.subr.bf16.mxu0 %v471
    %1255 = vmatpush1.bf16.msra.mxu0 %v470
    %1256 = vmatprep.subr.bf16.mxu0 %v475
    %1257 = vmatpush1.bf16.msra.mxu0 %v474
    %1258 = vmatprep.subr.bf16.mxu0 %v479
    %1259 = vmatpush1.bf16.msra.mxu0 %v478
    %1260 = vmatprep.subr.bf16.mxu0 %v483
    %1261 = vmatpush1.bf16.msra.mxu0 %v482
    %1262 = vmatprep.subr.bf16.mxu0 %v487
    %1263 = vmatpush1.bf16.msra.mxu0 %v486
    %1264 = vmatprep.subr.bf16.mxu0 %v491
    %1265 = vmatpush1.bf16.msra.mxu0 %v490
    %1266 = vmatprep.subr.bf16.mxu0 %v495
    %1267 = vmatpush1.bf16.msra.mxu0 %v494
    %1268 = vmatprep.subr.bf16.mxu0 %v499
    %1269 = vmatpush1.bf16.msra.mxu0 %v498
    %1270 = vmatprep.subr.bf16.mxu0 0
    %1271 = vmatpush1.bf16.msra.mxu0 0
    %1272 = vmatprep.subr.bf16.mxu0 0
    %1273 = vmatpush1.bf16.msra.mxu0 0
    %1274 = vmatprep.subr.bf16.mxu0 0
    %1275 = vmatpush1.bf16.msra.mxu0 0
    %1276 = vmatprep.subr.bf16.mxu0 0
    %1277 = vmatpush1.bf16.msra.mxu0 0
    %1278 = vmatprep.subr.bf16.mxu0 0
    %1279 = vmatpush1.bf16.msra.mxu0 0
    %1280 = vmatprep.subr.bf16.mxu0 0
    %1281 = vmatpush1.bf16.msra.mxu0 0
    %1282 = vmatprep.subr.bf16.mxu0 0
    %1283 = vmatpush1.bf16.msra.mxu0 0
    %1284 = vmatprep.subr.bf16.mxu0 0
    %1285 = vmatpush1.bf16.msra.mxu0 0
    %1286 = vmatprep.mubr.bf16.mxu0 0
    %1287 = vmatmul.mubr.bf16.gmra.mrb[0].mxu0 %v1211
    %v1288 = vpop.f32.mrb[0].mxu0
    %v1289 = vadd.f32 0.0, %v1288
    %v1290 = vpop.f32.mrb[0].mxu0
    %v1291 = vadd.f32 0.0, %v1290
    %v1292 = vpop.f32.mrb[0].mxu0
    %v1293 = vpop.f32.mrb[0].mxu0
    %1294 = vdwg.mxu0
    %v1295 = vadd.f32 %v245, %v1248
    %v1296 = vadd.f32 %v247, %v1250
    %v1297 = vadd.f32 %v318, %v1289
    %v1298 = vadd.f32 %v320, %v1291
    %v1299 = vxor.u32 %v1295, 2147483648
    %v1300 = vxor.u32 %v1296, 2147483648
    %v1301 = vxor.u32 %v1297, 2147483648
    %v1302 = vmul.f32 %v1299, 1.442695
    %v1303 = vpow.pop %v1302
    %v1304 = vmul.f32 %v1300, 1.442695
    %v1305 = vpow.pop %v1304
    %v1306 = vmul.f32 %v1301, 1.442695
    %v1307 = vpow.pop %v1306
    %v1308 = vadd.f32 %v1303, 1.0
    %v1309 = vadd.f32 %v1305, 1.0
    %v1310 = vadd.f32 %v1307, 1.0
    %v1311 = vrcp.pop %v1308
    %v1312 = vmul.f32 1.0, %v1311
    %v1313 = vrcp.pop %v1309
    %v1314 = vmul.f32 1.0, %v1313
    %v1315 = vrcp.pop %v1310
    %v1316 = vmul.f32 1.0, %v1315
    %v1317 = vtanh.pop %v1298
    %v1318 = vmul.f32 %v1314, %v1208
    %v1319 = vmul.f32 %v1312, %v1317
    %v1320 = vadd.f32 %v1318, %v1319
    %v1321 = vtanh.pop %v1320
    %v1322 = vmul.f32 %v1316, %v1321
    %v1323 = vpack.c.bf16 %v1322, %v1322
    %v1325 = vrot.slane %v1323, 4
    %1327 = vst [vmem:[#allocation2 + $0x18] sm:$0xf0] %v1325
    %1328 = vst [vmem:[%s10] sm:$0xff] %v1322
    %1329 = vst [vmem:[%s11] sm:$0xff] %v1320
    %v1330 = vld [vmem:[#allocation2] sm:$0xff]
    %v1331 = vld [vmem:[#allocation2 + $0x8] sm:$0xff]
    %v1332 = vld [vmem:[#allocation2 + $0x10] sm:$0xff]
    %v1333 = vld [vmem:[#allocation2 + $0x18] sm:$0xff]
    %v1334 = vld [vmem:[#allocation5] sm:$0xff]
    %v1335 = vld [vmem:[#allocation5 + $0x8] sm:$0xff]
    %v1336 = vld [vmem:[#allocation5 + $0x10] sm:$0xff]
    %v1337 = vld [vmem:[#allocation5 + $0x18] sm:$0xff]
    %v1338 = vld [vmem:[#allocation5 + $0x20] sm:$0xff]
    %v1339 = vld [vmem:[#allocation5 + $0x28] sm:$0xff]
    %v1340 = vld [vmem:[#allocation5 + $0x30] sm:$0xff]
    %v1341 = vld [vmem:[#allocation5 + $0x38] sm:$0xff]
    %v1342 = vld [vmem:[#allocation5 + $0x40] sm:$0xff]
    %v1343 = vld [vmem:[#allocation5 + $0x48] sm:$0xff]
    %v1344 = vld [vmem:[#allocation5 + $0x50] sm:$0xff]
    %v1345 = vld [vmem:[#allocation5 + $0x58] sm:$0xff]
    %v1346 = vld [vmem:[#allocation5 + $0x60] sm:$0xff]
    %v1347 = vld [vmem:[#allocation5 + $0x68] sm:$0xff]
    %v1348 = vld [vmem:[#allocation5 + $0x70] sm:$0xff]
    %v1349 = vld [vmem:[#allocation5 + $0x78] sm:$0xff]
    %v1350 = vld [vmem:[#allocation5 + $0x80] sm:$0xff]
    %v1351 = vld [vmem:[#allocation5 + $0x88] sm:$0xff]
    %v1352 = vld [vmem:[#allocation5 + $0x90] sm:$0xff]
    %v1353 = vld [vmem:[#allocation5 + $0x98] sm:$0xff]
    %v1354 = vld [vmem:[#allocation5 + $0xa0] sm:$0xff]
    %v1355 = vld [vmem:[#allocation5 + $0xa8] sm:$0xff]
    %v1356 = vld [vmem:[#allocation5 + $0xb0] sm:$0xff]
    %v1357 = vld [vmem:[#allocation5 + $0xb8] sm:$0xff]
    %v1358 = vld [vmem:[#allocation5 + $0xc0] sm:$0xff]
    %v1359 = vld [vmem:[#allocation5 + $0xc8] sm:$0xff]
    %v1360 = vld [vmem:[#allocation5 + $0xd0] sm:$0xff]
    %v1361 = vld [vmem:[#allocation5 + $0xd8] sm:$0xff]
    %v1362 = vld [vmem:[#allocation5 + $0xe0] sm:$0xff]
    %v1363 = vld [vmem:[#allocation5 + $0xe8] sm:$0xff]
    %v1364 = vld [vmem:[#allocation5 + $0xf0] sm:$0xff]
    %v1365 = vld [vmem:[#allocation5 + $0xf8] sm:$0xff]
    %v1366 = vld [vmem:[#allocation8] sm:$0xf]
    %v1368 = vlaneseq
    %v1369 = vshrl.u32 %v1368, 7
    %v1370 = vsub.s32 0, %v1369
    %v1371 = vrot.slane %v1366, %v1370
    %v1372 = vlaneseq
    %v1373 = vshrl.u32 %v1372, 7
    %v1374 = vsub.s32 1, %v1373
    %v1375 = vrot.slane %v1366, %v1374
    %v1376 = vlaneseq
    %v1377 = vshrl.u32 %v1376, 7
    %v1378 = vsub.s32 2, %v1377
    %v1379 = vrot.slane %v1366, %v1378
    %v1380 = vlaneseq
    %v1381 = vshrl.u32 %v1380, 7
    %v1382 = vsub.s32 3, %v1381
    %v1383 = vrot.slane %v1366, %v1382
    %v1420 = vunpack.c.l.b16 %v1334
    %v1421 = vunpack.c.h.b16 %v1334
    %v1422 = vunpack.c.l.b16 %v1335
    %v1423 = vunpack.c.h.b16 %v1335
    %v1424 = vunpack.c.l.b16 %v1336
    %v1425 = vunpack.c.h.b16 %v1336
    %v1426 = vunpack.c.l.b16 %v1337
    %v1427 = vunpack.c.h.b16 %v1337
    %v1428 = vunpack.c.l.b16 %v1338
    %v1429 = vunpack.c.h.b16 %v1338
    %v1430 = vunpack.c.l.b16 %v1339
    %v1431 = vunpack.c.h.b16 %v1339
    %v1432 = vunpack.c.l.b16 %v1340
    %v1433 = vunpack.c.h.b16 %v1340
    %v1434 = vunpack.c.l.b16 %v1341
    %v1435 = vunpack.c.h.b16 %v1341
    %v1436 = vunpack.c.l.b16 %v1342
    %v1437 = vunpack.c.h.b16 %v1342
    %v1438 = vunpack.c.l.b16 %v1343
    %v1439 = vunpack.c.h.b16 %v1343
    %v1440 = vunpack.c.l.b16 %v1344
    %v1441 = vunpack.c.h.b16 %v1344
    %v1442 = vunpack.c.l.b16 %v1345
    %v1443 = vunpack.c.h.b16 %v1345
    %v1444 = vunpack.c.l.b16 %v1346
    %v1445 = vunpack.c.h.b16 %v1346
    %v1446 = vunpack.c.l.b16 %v1347
    %v1447 = vunpack.c.h.b16 %v1347
    %v1448 = vunpack.c.l.b16 %v1348
    %v1449 = vunpack.c.h.b16 %v1348
    %v1450 = vunpack.c.l.b16 %v1349
    %v1451 = vunpack.c.h.b16 %v1349
    %v1452 = vunpack.c.l.b16 %v1350
    %v1453 = vunpack.c.h.b16 %v1350
    %v1454 = vunpack.c.l.b16 %v1351
    %v1455 = vunpack.c.h.b16 %v1351
    %v1456 = vunpack.c.l.b16 %v1352
    %v1457 = vunpack.c.h.b16 %v1352
    %v1458 = vunpack.c.l.b16 %v1353
    %v1459 = vunpack.c.h.b16 %v1353
    %v1460 = vunpack.c.l.b16 %v1354
    %v1461 = vunpack.c.h.b16 %v1354
    %v1462 = vunpack.c.l.b16 %v1355
    %v1463 = vunpack.c.h.b16 %v1355
    %v1464 = vunpack.c.l.b16 %v1356
    %v1465 = vunpack.c.h.b16 %v1356
    %v1466 = vunpack.c.l.b16 %v1357
    %v1467 = vunpack.c.h.b16 %v1357
    %v1468 = vunpack.c.l.b16 %v1358
    %v1469 = vunpack.c.h.b16 %v1358
    %v1470 = vunpack.c.l.b16 %v1359
    %v1471 = vunpack.c.h.b16 %v1359
    %v1472 = vunpack.c.l.b16 %v1360
    %v1473 = vunpack.c.h.b16 %v1360
    %v1474 = vunpack.c.l.b16 %v1361
    %v1475 = vunpack.c.h.b16 %v1361
    %v1476 = vunpack.c.l.b16 %v1362
    %v1477 = vunpack.c.h.b16 %v1362
    %v1478 = vunpack.c.l.b16 %v1363
    %v1479 = vunpack.c.h.b16 %v1363
    %v1480 = vunpack.c.l.b16 %v1364
    %v1481 = vunpack.c.h.b16 %v1364
    %v1482 = vunpack.c.l.b16 %v1365
    %v1483 = vunpack.c.h.b16 %v1365
    %v1484 = vpack.c.b16 %v1424, %v1420
    %v1485 = vpack.c.b16 %v1425, %v1421
    %v1486 = vpack.c.b16 %v1426, %v1422
    %v1487 = vpack.c.b16 %v1427, %v1423
    %v1488 = vpack.c.b16 %v1432, %v1428
    %v1489 = vpack.c.b16 %v1433, %v1429
    %v1490 = vpack.c.b16 %v1434, %v1430
    %v1491 = vpack.c.b16 %v1435, %v1431
    %v1492 = vpack.c.b16 %v1440, %v1436
    %v1493 = vpack.c.b16 %v1441, %v1437
    %v1494 = vpack.c.b16 %v1442, %v1438
    %v1495 = vpack.c.b16 %v1443, %v1439
    %v1496 = vpack.c.b16 %v1448, %v1444
    %v1497 = vpack.c.b16 %v1449, %v1445
    %v1498 = vpack.c.b16 %v1450, %v1446
    %v1499 = vpack.c.b16 %v1451, %v1447
    %v1500 = vpack.c.b16 %v1456, %v1452
    %v1501 = vpack.c.b16 %v1457, %v1453
    %v1502 = vpack.c.b16 %v1458, %v1454
    %v1503 = vpack.c.b16 %v1459, %v1455
    %v1504 = vpack.c.b16 %v1464, %v1460
    %v1505 = vpack.c.b16 %v1465, %v1461
    %v1506 = vpack.c.b16 %v1466, %v1462
    %v1507 = vpack.c.b16 %v1467, %v1463
    %v1508 = vpack.c.b16 %v1472, %v1468
    %v1509 = vpack.c.b16 %v1473, %v1469
    %v1510 = vpack.c.b16 %v1474, %v1470
    %v1511 = vpack.c.b16 %v1475, %v1471
    %v1512 = vpack.c.b16 %v1480, %v1476
    %v1513 = vpack.c.b16 %v1481, %v1477
    %v1514 = vpack.c.b16 %v1482, %v1478
    %v1515 = vpack.c.b16 %v1483, %v1479
    %1548 = vmatprep.subr.bf16.mxu0 %v1485
    %1549 = vmatpush1.bf16.msra.mxu0 %v1484
    %1550 = vmatprep.subr.bf16.mxu0 %v1489
    %1551 = vmatpush1.bf16.msra.mxu0 %v1488
    %1552 = vmatprep.subr.bf16.mxu0 %v1493
    %1553 = vmatpush1.bf16.msra.mxu0 %v1492
    %1554 = vmatprep.subr.bf16.mxu0 %v1497
    %1555 = vmatpush1.bf16.msra.mxu0 %v1496
    %1556 = vmatprep.subr.bf16.mxu0 %v1501
    %1557 = vmatpush1.bf16.msra.mxu0 %v1500
    %1558 = vmatprep.subr.bf16.mxu0 %v1505
    %1559 = vmatpush1.bf16.msra.mxu0 %v1504
    %1560 = vmatprep.subr.bf16.mxu0 %v1509
    %1561 = vmatpush1.bf16.msra.mxu0 %v1508
    %1562 = vmatprep.subr.bf16.mxu0 %v1513
    %1563 = vmatpush1.bf16.msra.mxu0 %v1512
    %1564 = vmatprep.subr.bf16.mxu0 0
    %1565 = vmatpush1.bf16.msra.mxu0 0
    %1566 = vmatprep.subr.bf16.mxu0 0
    %1567 = vmatpush1.bf16.msra.mxu0 0
    %1568 = vmatprep.subr.bf16.mxu0 0
    %1569 = vmatpush1.bf16.msra.mxu0 0
    %1570 = vmatprep.subr.bf16.mxu0 0
    %1571 = vmatpush1.bf16.msra.mxu0 0
    %1572 = vmatprep.subr.bf16.mxu0 0
    %1573 = vmatpush1.bf16.msra.mxu0 0
    %1574 = vmatprep.subr.bf16.mxu0 0
    %1575 = vmatpush1.bf16.msra.mxu0 0
    %1576 = vmatprep.subr.bf16.mxu0 0
    %1577 = vmatpush1.bf16.msra.mxu0 0
    %1578 = vmatprep.subr.bf16.mxu0 0
    %1579 = vmatpush1.bf16.msra.mxu0 0
    %1580 = vmatprep.mubr.bf16.mxu0 0
    %1581 = vmatmul.mubr.bf16.gmra.mrb[0].mxu0 %v1330
    %v1582 = vpop.f32.mrb[0].mxu0
    %v1583 = vadd.f32 %v1371, %v1582
    %v1584 = vpop.f32.mrb[0].mxu0
    %v1585 = vpop.f32.mrb[0].mxu0
    %v1586 = vadd.f32 %v1371, %v1585
    %v1587 = vpop.f32.mrb[0].mxu0
    %v1588 = vadd.f32 %v1375, %v1587
    %1589 = vmatprep.mubr.bf16.mxu0 0
    %1590 = vmatmul.mubr.bf16.gmra.mrb[0].mxu0 %v1331
    %v1591 = vpop.f32.mrb[0].mxu0
    %v1592 = vadd.f32 %v1371, %v1591
    %v1593 = vpop.f32.mrb[0].mxu0
    %v1594 = vadd.f32 %v1375, %v1593
    %v1595 = vpop.f32.mrb[0].mxu0
    %v1596 = vadd.f32 %v1371, %v1595
    %v1597 = vpop.f32.mrb[0].mxu0
    %v1598 = vadd.f32 %v1375, %v1597
    %1599 = vmatprep.mubr.bf16.mxu0 0
    %1600 = vmatmul.mubr.bf16.gmra.mrb[0].mxu0 %v1332
    %v1601 = vpop.f32.mrb[0].mxu0
    %v1602 = vadd.f32 %v1371, %v1601
    %v1603 = vpop.f32.mrb[0].mxu0
    %v1604 = vadd.f32 %v1375, %v1603
    %v1605 = vpop.f32.mrb[0].mxu0
    %v1606 = vadd.f32 %v1371, %v1605
    %v1607 = vpop.f32.mrb[0].mxu0
    %v1608 = vadd.f32 %v1375, %v1607
    %1609 = vmatprep.mubr.bf16.mxu0 0
    %1610 = vmatmul.mubr.bf16.gmra.mrb[0].mxu0 %v1333
    %v1611 = vpop.f32.mrb[0].mxu0
    %v1612 = vadd.f32 %v1371, %v1611
    %v1613 = vpop.f32.mrb[0].mxu0
    %v1614 = vadd.f32 %v1375, %v1613
    %v1615 = vpop.f32.mrb[0].mxu0
    %v1616 = vadd.f32 %v1371, %v1615
    %v1617 = vpop.f32.mrb[0].mxu0
    %v1618 = vadd.f32 %v1375, %v1617
    %1619 = vdwg.mxu0
    %1620 = vmatprep.subr.bf16.mxu0 %v1487
    %1621 = vmatpush1.bf16.msra.mxu0 %v1486
    %1622 = vmatprep.subr.bf16.mxu0 %v1491
    %1623 = vmatpush1.bf16.msra.mxu0 %v1490
    %1624 = vmatprep.subr.bf16.mxu0 %v1495
    %1625 = vmatpush1.bf16.msra.mxu0 %v1494
    %1626 = vmatprep.subr.bf16.mxu0 %v1499
    %1627 = vmatpush1.bf16.msra.mxu0 %v1498
    %1628 = vmatprep.subr.bf16.mxu0 %v1503
    %1629 = vmatpush1.bf16.msra.mxu0 %v1502
    %1630 = vmatprep.subr.bf16.mxu0 %v1507
    %1631 = vmatpush1.bf16.msra.mxu0 %v1506
    %1632 = vmatprep.subr.bf16.mxu0 %v1511
    %1633 = vmatpush1.bf16.msra.mxu0 %v1510
    %1634 = vmatprep.subr.bf16.mxu0 %v1515
    %1635 = vmatpush1.bf16.msra.mxu0 %v1514
    %1636 = vmatprep.subr.bf16.mxu0 0
    %1637 = vmatpush1.bf16.msra.mxu0 0
    %1638 = vmatprep.subr.bf16.mxu0 0
    %1639 = vmatpush1.bf16.msra.mxu0 0
    %1640 = vmatprep.subr.bf16.mxu0 0
    %1641 = vmatpush1.bf16.msra.mxu0 0
    %1642 = vmatprep.subr.bf16.mxu0 0
    %1643 = vmatpush1.bf16.msra.mxu0 0
    %1644 = vmatprep.subr.bf16.mxu0 0
    %1645 = vmatpush1.bf16.msra.mxu0 0
    %1646 = vmatprep.subr.bf16.mxu0 0
    %1647 = vmatpush1.bf16.msra.mxu0 0
    %1648 = vmatprep.subr.bf16.mxu0 0
    %1649 = vmatpush1.bf16.msra.mxu0 0
    %1650 = vmatprep.subr.bf16.mxu0 0
    %1651 = vmatpush1.bf16.msra.mxu0 0
    %1652 = vmatprep.mubr.bf16.mxu0 0
    %1653 = vmatmul.mubr.bf16.gmra.mrb[0].mxu0 %v1330
    %v1654 = vpop.f32.mrb[0].mxu0
    %v1655 = vadd.f32 %v1379, %v1654
    %v1656 = vpop.f32.mrb[0].mxu0
    %v1657 = vadd.f32 %v1383, %v1656
    %v1658 = vpop.f32.mrb[0].mxu0
    %v1659 = vadd.f32 %v1379, %v1658
    %v1660 = vpop.f32.mrb[0].mxu0
    %v1661 = vadd.f32 %v1383, %v1660
    %1662 = vmatprep.mubr.bf16.mxu0 0
    %1663 = vmatmul.mubr.bf16.gmra.mrb[0].mxu0 %v1331
    %v1664 = vpop.f32.mrb[0].mxu0
    %v1665 = vadd.f32 %v1379, %v1664
    %v1666 = vpop.f32.mrb[0].mxu0
    %v1667 = vadd.f32 %v1383, %v1666
    %v1668 = vpop.f32.mrb[0].mxu0
    %v1669 = vadd.f32 %v1379, %v1668
    %v1670 = vpop.f32.mrb[0].mxu0
    %v1671 = vadd.f32 %v1383, %v1670
    %1672 = vmatprep.mubr.bf16.mxu0 0
    %1673 = vmatmul.mubr.bf16.gmra.mrb[0].mxu0 %v1332
    %v1674 = vpop.f32.mrb[0].mxu0
    %v1675 = vadd.f32 %v1379, %v1674
    %v1676 = vpop.f32.mrb[0].mxu0
    %v1677 = vadd.f32 %v1383, %v1676
    %v1678 = vpop.f32.mrb[0].mxu0
    %v1679 = vadd.f32 %v1379, %v1678
    %v1680 = vpop.f32.mrb[0].mxu0
    %v1681 = vadd.f32 %v1383, %v1680
    %1682 = vmatprep.mubr.bf16.mxu0 0
    %1683 = vmatmul.mubr.bf16.gmra.mrb[0].mxu0 %v1333
    %v1684 = vpop.f32.mrb[0].mxu0
    %v1685 = vadd.f32 %v1379, %v1684
    %v1686 = vpop.f32.mrb[0].mxu0
    %v1687 = vadd.f32 %v1383, %v1686
    %v1688 = vpop.f32.mrb[0].mxu0
    %v1689 = vadd.f32 %v1379, %v1688
    %v1690 = vpop.f32.mrb[0].mxu0
    %v1691 = vadd.f32 %v1383, %v1690
    %1692 = vdwg.mxu0
    %v1693 = vld [vmem:[#allocation7] sm:$0xff]
    %v1694 = vld [vmem:[#allocation7 + $0x8] sm:$0xff]
    %v1695 = vld [vmem:[#allocation7 + $0x10] sm:$0xff]
    %v1696 = vld [vmem:[#allocation7 + $0x18] sm:$0xff]
    %v1697 = vld [vmem:[#allocation7 + $0x20] sm:$0xff]
    %v1698 = vld [vmem:[#allocation7 + $0x28] sm:$0xff]
    %v1699 = vld [vmem:[#allocation7 + $0x30] sm:$0xff]
    %v1700 = vld [vmem:[#allocation7 + $0x38] sm:$0xff]
    %v1701 = vld [vmem:[#allocation7 + $0x40] sm:$0xff]
    %v1702 = vld [vmem:[#allocation7 + $0x48] sm:$0xff]
    %v1703 = vld [vmem:[#allocation7 + $0x50] sm:$0xff]
    %v1704 = vld [vmem:[#allocation7 + $0x58] sm:$0xff]
    %v1705 = vld [vmem:[#allocation7 + $0x60] sm:$0xff]
    %v1706 = vld [vmem:[#allocation7 + $0x68] sm:$0xff]
    %v1707 = vld [vmem:[#allocation7 + $0x70] sm:$0xff]
    %v1708 = vld [vmem:[#allocation7 + $0x78] sm:$0xff]
    %v1709 = vld [vmem:[#allocation7 + $0x80] sm:$0xff]
    %v1710 = vld [vmem:[#allocation7 + $0x88] sm:$0xff]
    %v1711 = vld [vmem:[#allocation7 + $0x90] sm:$0xff]
    %v1712 = vld [vmem:[#allocation7 + $0x98] sm:$0xff]
    %v1713 = vld [vmem:[#allocation7 + $0xa0] sm:$0xff]
    %v1714 = vld [vmem:[#allocation7 + $0xa8] sm:$0xff]
    %v1715 = vld [vmem:[#allocation7 + $0xb0] sm:$0xff]
    %v1716 = vld [vmem:[#allocation7 + $0xb8] sm:$0xff]
    %v1717 = vld [vmem:[#allocation7 + $0xc0] sm:$0xff]
    %v1718 = vld [vmem:[#allocation7 + $0xc8] sm:$0xff]
    %v1719 = vld [vmem:[#allocation7 + $0xd0] sm:$0xff]
    %v1720 = vld [vmem:[#allocation7 + $0xd8] sm:$0xff]
    %v1721 = vld [vmem:[#allocation7 + $0xe0] sm:$0xff]
    %v1722 = vld [vmem:[#allocation7 + $0xe8] sm:$0xff]
    %v1723 = vld [vmem:[#allocation7 + $0xf0] sm:$0xff]
    %v1724 = vld [vmem:[#allocation7 + $0xf8] sm:$0xff]
    %v1725 = vxor.u32 %v1583, 2147483648
    %v1726 = vxor.u32 %v1655, 2147483648
    %v1727 = vmul.f32 %v1725, 1.442695
    %v1728 = vpow.pop %v1727
    %v1729 = vmul.f32 %v1726, 1.442695
    %v1730 = vpow.pop %v1729
    %v1731 = vadd.f32 %v1728, 1.0
    %v1732 = vadd.f32 %v1730, 1.0
    %v1733 = vrcp.pop %v1731
    %v1734 = vmul.f32 1.0, %v1733
    %v1735 = vrcp.pop %v1732
    %v1736 = vmul.f32 1.0, %v1735
    %v1737 = vtanh.pop %v1657
    %v1738 = vmul.f32 %v1734, %v1737
    %v1739 = vtanh.pop %v1738
    %v1740 = vmul.f32 %v1736, %v1739
    %v1741 = vpack.c.bf16 %v1740, %v1740
    %v1774 = vunpack.c.l.b16 %v1693
    %v1775 = vunpack.c.h.b16 %v1693
    %v1776 = vunpack.c.l.b16 %v1694
    %v1777 = vunpack.c.h.b16 %v1694
    %v1778 = vunpack.c.l.b16 %v1695
    %v1779 = vunpack.c.h.b16 %v1695
    %v1780 = vunpack.c.l.b16 %v1696
    %v1781 = vunpack.c.h.b16 %v1696
    %v1782 = vunpack.c.l.b16 %v1697
    %v1783 = vunpack.c.h.b16 %v1697
    %v1784 = vunpack.c.l.b16 %v1698
    %v1785 = vunpack.c.h.b16 %v1698
    %v1786 = vunpack.c.l.b16 %v1699
    %v1787 = vunpack.c.h.b16 %v1699
    %v1788 = vunpack.c.l.b16 %v1700
    %v1789 = vunpack.c.h.b16 %v1700
    %v1790 = vunpack.c.l.b16 %v1701
    %v1791 = vunpack.c.h.b16 %v1701
    %v1792 = vunpack.c.l.b16 %v1702
    %v1793 = vunpack.c.h.b16 %v1702
    %v1794 = vunpack.c.l.b16 %v1703
    %v1795 = vunpack.c.h.b16 %v1703
    %v1796 = vunpack.c.l.b16 %v1704
    %v1797 = vunpack.c.h.b16 %v1704
    %v1798 = vunpack.c.l.b16 %v1705
    %v1799 = vunpack.c.h.b16 %v1705
    %v1800 = vunpack.c.l.b16 %v1706
    %v1801 = vunpack.c.h.b16 %v1706
    %v1802 = vunpack.c.l.b16 %v1707
    %v1803 = vunpack.c.h.b16 %v1707
    %v1804 = vunpack.c.l.b16 %v1708
    %v1805 = vunpack.c.h.b16 %v1708
    %v1806 = vunpack.c.l.b16 %v1709
    %v1807 = vunpack.c.h.b16 %v1709
    %v1808 = vunpack.c.l.b16 %v1710
    %v1809 = vunpack.c.h.b16 %v1710
    %v1810 = vunpack.c.l.b16 %v1711
    %v1811 = vunpack.c.h.b16 %v1711
    %v1812 = vunpack.c.l.b16 %v1712
    %v1813 = vunpack.c.h.b16 %v1712
    %v1814 = vunpack.c.l.b16 %v1713
    %v1815 = vunpack.c.h.b16 %v1713
    %v1816 = vunpack.c.l.b16 %v1714
    %v1817 = vunpack.c.h.b16 %v1714
    %v1818 = vunpack.c.l.b16 %v1715
    %v1819 = vunpack.c.h.b16 %v1715
    %v1820 = vunpack.c.l.b16 %v1716
    %v1821 = vunpack.c.h.b16 %v1716
    %v1822 = vunpack.c.l.b16 %v1717
    %v1823 = vunpack.c.h.b16 %v1717
    %v1824 = vunpack.c.l.b16 %v1718
    %v1825 = vunpack.c.h.b16 %v1718
    %v1826 = vunpack.c.l.b16 %v1719
    %v1827 = vunpack.c.h.b16 %v1719
    %v1828 = vunpack.c.l.b16 %v1720
    %v1829 = vunpack.c.h.b16 %v1720
    %v1830 = vunpack.c.l.b16 %v1721
    %v1831 = vunpack.c.h.b16 %v1721
    %v1832 = vunpack.c.l.b16 %v1722
    %v1833 = vunpack.c.h.b16 %v1722
    %v1834 = vunpack.c.l.b16 %v1723
    %v1835 = vunpack.c.h.b16 %v1723
    %v1836 = vunpack.c.l.b16 %v1724
    %v1837 = vunpack.c.h.b16 %v1724
    %v1838 = vpack.c.b16 %v1778, %v1774
    %v1839 = vpack.c.b16 %v1779, %v1775
    %v1840 = vpack.c.b16 %v1780, %v1776
    %v1841 = vpack.c.b16 %v1781, %v1777
    %v1842 = vpack.c.b16 %v1786, %v1782
    %v1843 = vpack.c.b16 %v1787, %v1783
    %v1844 = vpack.c.b16 %v1788, %v1784
    %v1845 = vpack.c.b16 %v1789, %v1785
    %v1846 = vpack.c.b16 %v1794, %v1790
    %v1847 = vpack.c.b16 %v1795, %v1791
    %v1848 = vpack.c.b16 %v1796, %v1792
    %v1849 = vpack.c.b16 %v1797, %v1793
    %v1850 = vpack.c.b16 %v1802, %v1798
    %v1851 = vpack.c.b16 %v1803, %v1799
    %v1852 = vpack.c.b16 %v1804, %v1800
    %v1853 = vpack.c.b16 %v1805, %v1801
    %v1854 = vpack.c.b16 %v1810, %v1806
    %v1855 = vpack.c.b16 %v1811, %v1807
    %v1856 = vpack.c.b16 %v1812, %v1808
    %v1857 = vpack.c.b16 %v1813, %v1809
    %v1858 = vpack.c.b16 %v1818, %v1814
    %v1859 = vpack.c.b16 %v1819, %v1815
    %v1860 = vpack.c.b16 %v1820, %v1816
    %v1861 = vpack.c.b16 %v1821, %v1817
    %v1862 = vpack.c.b16 %v1826, %v1822
    %v1863 = vpack.c.b16 %v1827, %v1823
    %v1864 = vpack.c.b16 %v1828, %v1824
    %v1865 = vpack.c.b16 %v1829, %v1825
    %v1866 = vpack.c.b16 %v1834, %v1830
    %v1867 = vpack.c.b16 %v1835, %v1831
    %v1868 = vpack.c.b16 %v1836, %v1832
    %v1869 = vpack.c.b16 %v1837, %v1833
    %1902 = vmatprep.subr.bf16.mxu0 %v1839
    %1903 = vmatpush1.bf16.msra.mxu0 %v1838
    %1904 = vmatprep.subr.bf16.mxu0 %v1843
    %1905 = vmatpush1.bf16.msra.mxu0 %v1842
    %1906 = vmatprep.subr.bf16.mxu0 %v1847
    %1907 = vmatpush1.bf16.msra.mxu0 %v1846
    %1908 = vmatprep.subr.bf16.mxu0 %v1851
    %1909 = vmatpush1.bf16.msra.mxu0 %v1850
    %1910 = vmatprep.subr.bf16.mxu0 %v1855
    %1911 = vmatpush1.bf16.msra.mxu0 %v1854
    %1912 = vmatprep.subr.bf16.mxu0 %v1859
    %1913 = vmatpush1.bf16.msra.mxu0 %v1858
    %1914 = vmatprep.subr.bf16.mxu0 %v1863
    %1915 = vmatpush1.bf16.msra.mxu0 %v1862
    %1916 = vmatprep.subr.bf16.mxu0 %v1867
    %1917 = vmatpush1.bf16.msra.mxu0 %v1866
    %1918 = vmatprep.subr.bf16.mxu0 0
    %1919 = vmatpush1.bf16.msra.mxu0 0
    %1920 = vmatprep.subr.bf16.mxu0 0
    %1921 = vmatpush1.bf16.msra.mxu0 0
    %1922 = vmatprep.subr.bf16.mxu0 0
    %1923 = vmatpush1.bf16.msra.mxu0 0
    %1924 = vmatprep.subr.bf16.mxu0 0
    %1925 = vmatpush1.bf16.msra.mxu0 0
    %1926 = vmatprep.subr.bf16.mxu0 0
    %1927 = vmatpush1.bf16.msra.mxu0 0
    %1928 = vmatprep.subr.bf16.mxu0 0
    %1929 = vmatpush1.bf16.msra.mxu0 0
    %1930 = vmatprep.subr.bf16.mxu0 0
    %1931 = vmatpush1.bf16.msra.mxu0 0
    %1932 = vmatprep.subr.bf16.mxu0 0
    %1933 = vmatpush1.bf16.msra.mxu0 0
    %1934 = vmatprep.mubr.bf16.mxu0 0
    %1935 = vmatmul.mubr.bf16.gmra.mrb[0].mxu0 %v1741
    %v1936 = vpop.f32.mrb[0].mxu0
    %v1937 = vadd.f32 0.0, %v1936
    %v1938 = vpop.f32.mrb[0].mxu0
    %v1939 = vadd.f32 0.0, %v1938
    %v1940 = vpop.f32.mrb[0].mxu0
    %v1941 = vpop.f32.mrb[0].mxu0
    %1942 = vdwg.mxu0
    %1943 = vmatprep.subr.bf16.mxu0 %v1841
    %1944 = vmatpush1.bf16.msra.mxu0 %v1840
    %1945 = vmatprep.subr.bf16.mxu0 %v1845
    %1946 = vmatpush1.bf16.msra.mxu0 %v1844
    %1947 = vmatprep.subr.bf16.mxu0 %v1849
    %1948 = vmatpush1.bf16.msra.mxu0 %v1848
    %1949 = vmatprep.subr.bf16.mxu0 %v1853
    %1950 = vmatpush1.bf16.msra.mxu0 %v1852
    %1951 = vmatprep.subr.bf16.mxu0 %v1857
    %1952 = vmatpush1.bf16.msra.mxu0 %v1856
    %1953 = vmatprep.subr.bf16.mxu0 %v1861
    %1954 = vmatpush1.bf16.msra.mxu0 %v1860
    %1955 = vmatprep.subr.bf16.mxu0 %v1865
    %1956 = vmatpush1.bf16.msra.mxu0 %v1864
    %1957 = vmatprep.subr.bf16.mxu0 %v1869
    %1958 = vmatpush1.bf16.msra.mxu0 %v1868
    %1959 = vmatprep.subr.bf16.mxu0 0
    %1960 = vmatpush1.bf16.msra.mxu0 0
    %1961 = vmatprep.subr.bf16.mxu0 0
    %1962 = vmatpush1.bf16.msra.mxu0 0
    %1963 = vmatprep.subr.bf16.mxu0 0
    %1964 = vmatpush1.bf16.msra.mxu0 0
    %1965 = vmatprep.subr.bf16.mxu0 0
    %1966 = vmatpush1.bf16.msra.mxu0 0
    %1967 = vmatprep.subr.bf16.mxu0 0
    %1968 = vmatpush1.bf16.msra.mxu0 0
    %1969 = vmatprep.subr.bf16.mxu0 0
    %1970 = vmatpush1.bf16.msra.mxu0 0
    %1971 = vmatprep.subr.bf16.mxu0 0
    %1972 = vmatpush1.bf16.msra.mxu0 0
    %1973 = vmatprep.subr.bf16.mxu0 0
    %1974 = vmatpush1.bf16.msra.mxu0 0
    %1975 = vmatprep.mubr.bf16.mxu0 0
    %1976 = vmatmul.mubr.bf16.gmra.mrb[0].mxu0 %v1741
    %v1977 = vpop.f32.mrb[0].mxu0
    %v1978 = vadd.f32 0.0, %v1977
    %v1979 = vpop.f32.mrb[0].mxu0
    %v1980 = vadd.f32 0.0, %v1979
    %v1981 = vpop.f32.mrb[0].mxu0
    %v1982 = vpop.f32.mrb[0].mxu0
    %1983 = vdwg.mxu0
    %v1984 = vadd.f32 %v1586, %v1937
    %v1985 = vadd.f32 %v1588, %v1939
    %v1986 = vadd.f32 %v1659, %v1978
    %v1987 = vadd.f32 %v1661, %v1980
    %v1988 = vxor.u32 %v1984, 2147483648
    %v1989 = vxor.u32 %v1985, 2147483648
    %v1990 = vxor.u32 %v1986, 2147483648
    %v1991 = vmul.f32 %v1988, 1.442695
    %v1992 = vpow.pop %v1991
    %v1993 = vmul.f32 %v1989, 1.442695
    %v1994 = vpow.pop %v1993
    %v1995 = vmul.f32 %v1990, 1.442695
    %v1996 = vpow.pop %v1995
    %v1997 = vadd.f32 %v1992, 1.0
    %v1998 = vadd.f32 %v1994, 1.0
    %v1999 = vadd.f32 %v1996, 1.0
    %v2000 = vrcp.pop %v1997
    %v2001 = vmul.f32 1.0, %v2000
    %v2002 = vrcp.pop %v1998
    %v2003 = vmul.f32 1.0, %v2002
    %v2004 = vrcp.pop %v1999
    %v2005 = vmul.f32 1.0, %v2004
    %v2006 = vtanh.pop %v1987
    %v2007 = vmul.f32 %v2003, %v1738
    %v2008 = vmul.f32 %v2001, %v2006
    %v2009 = vadd.f32 %v2007, %v2008
    %v2010 = vtanh.pop %v2009
    %v2011 = vmul.f32 %v2005, %v2010
    %v2012 = vpack.c.bf16 %v2011, %v2011
    %2013 = vmatprep.subr.bf16.mxu0 %v1839
    %2014 = vmatpush1.bf16.msra.mxu0 %v1838
    %2015 = vmatprep.subr.bf16.mxu0 %v1843
    %2016 = vmatpush1.bf16.msra.mxu0 %v1842
    %2017 = vmatprep.subr.bf16.mxu0 %v1847
    %2018 = vmatpush1.bf16.msra.mxu0 %v1846
    %2019 = vmatprep.subr.bf16.mxu0 %v1851
    %2020 = vmatpush1.bf16.msra.mxu0 %v1850
    %2021 = vmatprep.subr.bf16.mxu0 %v1855
    %2022 = vmatpush1.bf16.msra.mxu0 %v1854
    %2023 = vmatprep.subr.bf16.mxu0 %v1859
    %2024 = vmatpush1.bf16.msra.mxu0 %v1858
    %2025 = vmatprep.subr.bf16.mxu0 %v1863
    %2026 = vmatpush1.bf16.msra.mxu0 %v1862
    %2027 = vmatprep.subr.bf16.mxu0 %v1867
    %2028 = vmatpush1.bf16.msra.mxu0 %v1866
    %2029 = vmatprep.subr.bf16.mxu0 0
    %2030 = vmatpush1.bf16.msra.mxu0 0
    %2031 = vmatprep.subr.bf16.mxu0 0
    %2032 = vmatpush1.bf16.msra.mxu0 0
    %2033 = vmatprep.subr.bf16.mxu0 0
    %2034 = vmatpush1.bf16.msra.mxu0 0
    %2035 = vmatprep.subr.bf16.mxu0 0
    %2036 = vmatpush1.bf16.msra.mxu0 0
    %2037 = vmatprep.subr.bf16.mxu0 0
    %2038 = vmatpush1.bf16.msra.mxu0 0
    %2039 = vmatprep.subr.bf16.mxu0 0
    %2040 = vmatpush1.bf16.msra.mxu0 0
    %2041 = vmatprep.subr.bf16.mxu0 0
    %2042 = vmatpush1.bf16.msra.mxu0 0
    %2043 = vmatprep.subr.bf16.mxu0 0
    %2044 = vmatpush1.bf16.msra.mxu0 0
    %2045 = vmatprep.mubr.bf16.mxu0 0
    %2046 = vmatmul.mubr.bf16.gmra.mrb[0].mxu0 %v2012
    %v2047 = vpop.f32.mrb[0].mxu0
    %v2048 = vadd.f32 0.0, %v2047
    %v2049 = vpop.f32.mrb[0].mxu0
    %v2050 = vadd.f32 0.0, %v2049
    %v2051 = vpop.f32.mrb[0].mxu0
    %v2052 = vpop.f32.mrb[0].mxu0
    %2053 = vdwg.mxu0
    %2054 = vmatprep.subr.bf16.mxu0 %v1841
    %2055 = vmatpush1.bf16.msra.mxu0 %v1840
    %2056 = vmatprep.subr.bf16.mxu0 %v1845
    %2057 = vmatpush1.bf16.msra.mxu0 %v1844
    %2058 = vmatprep.subr.bf16.mxu0 %v1849
    %2059 = vmatpush1.bf16.msra.mxu0 %v1848
    %2060 = vmatprep.subr.bf16.mxu0 %v1853
    %2061 = vmatpush1.bf16.msra.mxu0 %v1852
    %2062 = vmatprep.subr.bf16.mxu0 %v1857
    %2063 = vmatpush1.bf16.msra.mxu0 %v1856
    %2064 = vmatprep.subr.bf16.mxu0 %v1861
    %2065 = vmatpush1.bf16.msra.mxu0 %v1860
    %2066 = vmatprep.subr.bf16.mxu0 %v1865
    %2067 = vmatpush1.bf16.msra.mxu0 %v1864
    %2068 = vmatprep.subr.bf16.mxu0 %v1869
    %2069 = vmatpush1.bf16.msra.mxu0 %v1868
    %2070 = vmatprep.subr.bf16.mxu0 0
    %2071 = vmatpush1.bf16.msra.mxu0 0
    %2072 = vmatprep.subr.bf16.mxu0 0
    %2073 = vmatpush1.bf16.msra.mxu0 0
    %2074 = vmatprep.subr.bf16.mxu0 0
    %2075 = vmatpush1.bf16.msra.mxu0 0
    %2076 = vmatprep.subr.bf16.mxu0 0
    %2077 = vmatpush1.bf16.msra.mxu0 0
    %2078 = vmatprep.subr.bf16.mxu0 0
    %2079 = vmatpush1.bf16.msra.mxu0 0
    %2080 = vmatprep.subr.bf16.mxu0 0
    %2081 = vmatpush1.bf16.msra.mxu0 0
    %2082 = vmatprep.subr.bf16.mxu0 0
    %2083 = vmatpush1.bf16.msra.mxu0 0
    %2084 = vmatprep.subr.bf16.mxu0 0
    %2085 = vmatpush1.bf16.msra.mxu0 0
    %2086 = vmatprep.mubr.bf16.mxu0 0
    %2087 = vmatmul.mubr.bf16.gmra.mrb[0].mxu0 %v2012
    %v2088 = vpop.f32.mrb[0].mxu0
    %v2089 = vadd.f32 0.0, %v2088
    %v2090 = vpop.f32.mrb[0].mxu0
    %v2091 = vadd.f32 0.0, %v2090
    %v2092 = vpop.f32.mrb[0].mxu0
    %v2093 = vpop.f32.mrb[0].mxu0
    %2094 = vdwg.mxu0
    %v2095 = vadd.f32 %v1592, %v2048
    %v2096 = vadd.f32 %v1594, %v2050
    %v2097 = vadd.f32 %v1665, %v2089
    %v2098 = vadd.f32 %v1667, %v2091
    %v2099 = vxor.u32 %v2095, 2147483648
    %v2100 = vxor.u32 %v2096, 2147483648
    %v2101 = vxor.u32 %v2097, 2147483648
    %v2102 = vmul.f32 %v2099, 1.442695
    %v2103 = vpow.pop %v2102
    %v2104 = vmul.f32 %v2100, 1.442695
    %v2105 = vpow.pop %v2104
    %v2106 = vmul.f32 %v2101, 1.442695
    %v2107 = vpow.pop %v2106
    %v2108 = vadd.f32 %v2103, 1.0
    %v2109 = vadd.f32 %v2105, 1.0
    %v2110 = vadd.f32 %v2107, 1.0
    %v2111 = vrcp.pop %v2108
    %v2112 = vmul.f32 1.0, %v2111
    %v2113 = vrcp.pop %v2109
    %v2114 = vmul.f32 1.0, %v2113
    %v2115 = vrcp.pop %v2110
    %v2116 = vmul.f32 1.0, %v2115
    %v2117 = vtanh.pop %v2098
    %v2118 = vmul.f32 %v2114, %v2009
    %v2119 = vmul.f32 %v2112, %v2117
    %v2120 = vadd.f32 %v2118, %v2119
    %v2121 = vtanh.pop %v2120
    %v2122 = vmul.f32 %v2116, %v2121
    %v2123 = vpack.c.bf16 %v2122, %v2122
    %2124 = vmatprep.subr.bf16.mxu0 %v1839
    %2125 = vmatpush1.bf16.msra.mxu0 %v1838
    %2126 = vmatprep.subr.bf16.mxu0 %v1843
    %2127 = vmatpush1.bf16.msra.mxu0 %v1842
    %2128 = vmatprep.subr.bf16.mxu0 %v1847
    %2129 = vmatpush1.bf16.msra.mxu0 %v1846
    %2130 = vmatprep.subr.bf16.mxu0 %v1851
    %2131 = vmatpush1.bf16.msra.mxu0 %v1850
    %2132 = vmatprep.subr.bf16.mxu0 %v1855
    %2133 = vmatpush1.bf16.msra.mxu0 %v1854
    %2134 = vmatprep.subr.bf16.mxu0 %v1859
    %2135 = vmatpush1.bf16.msra.mxu0 %v1858
    %2136 = vmatprep.subr.bf16.mxu0 %v1863
    %2137 = vmatpush1.bf16.msra.mxu0 %v1862
    %2138 = vmatprep.subr.bf16.mxu0 %v1867
    %2139 = vmatpush1.bf16.msra.mxu0 %v1866
    %2140 = vmatprep.subr.bf16.mxu0 0
    %2141 = vmatpush1.bf16.msra.mxu0 0
    %2142 = vmatprep.subr.bf16.mxu0 0
    %2143 = vmatpush1.bf16.msra.mxu0 0
    %2144 = vmatprep.subr.bf16.mxu0 0
    %2145 = vmatpush1.bf16.msra.mxu0 0
    %2146 = vmatprep.subr.bf16.mxu0 0
    %2147 = vmatpush1.bf16.msra.mxu0 0
    %2148 = vmatprep.subr.bf16.mxu0 0
    %2149 = vmatpush1.bf16.msra.mxu0 0
    %2150 = vmatprep.subr.bf16.mxu0 0
    %2151 = vmatpush1.bf16.msra.mxu0 0
    %2152 = vmatprep.subr.bf16.mxu0 0
    %2153 = vmatpush1.bf16.msra.mxu0 0
    %2154 = vmatprep.subr.bf16.mxu0 0
    %2155 = vmatpush1.bf16.msra.mxu0 0
    %2156 = vmatprep.mubr.bf16.mxu0 0
    %2157 = vmatmul.mubr.bf16.gmra.mrb[0].mxu0 %v2123
    %v2158 = vpop.f32.mrb[0].mxu0
    %v2159 = vadd.f32 0.0, %v2158
    %v2160 = vpop.f32.mrb[0].mxu0
    %v2161 = vadd.f32 0.0, %v2160
    %v2162 = vpop.f32.mrb[0].mxu0
    %v2163 = vpop.f32.mrb[0].mxu0
    %2164 = vdwg.mxu0
    %2165 = vmatprep.subr.bf16.mxu0 %v1841
    %2166 = vmatpush1.bf16.msra.mxu0 %v1840
    %2167 = vmatprep.subr.bf16.mxu0 %v1845
    %2168 = vmatpush1.bf16.msra.mxu0 %v1844
    %2169 = vmatprep.subr.bf16.mxu0 %v1849
    %2170 = vmatpush1.bf16.msra.mxu0 %v1848
    %2171 = vmatprep.subr.bf16.mxu0 %v1853
    %2172 = vmatpush1.bf16.msra.mxu0 %v1852
    %2173 = vmatprep.subr.bf16.mxu0 %v1857
    %2174 = vmatpush1.bf16.msra.mxu0 %v1856
    %2175 = vmatprep.subr.bf16.mxu0 %v1861
    %2176 = vmatpush1.bf16.msra.mxu0 %v1860
    %2177 = vmatprep.subr.bf16.mxu0 %v1865
    %2178 = vmatpush1.bf16.msra.mxu0 %v1864
    %2179 = vmatprep.subr.bf16.mxu0 %v1869
    %2180 = vmatpush1.bf16.msra.mxu0 %v1868
    %2181 = vmatprep.subr.bf16.mxu0 0
    %2182 = vmatpush1.bf16.msra.mxu0 0
    %2183 = vmatprep.subr.bf16.mxu0 0
    %2184 = vmatpush1.bf16.msra.mxu0 0
    %2185 = vmatprep.subr.bf16.mxu0 0
    %2186 = vmatpush1.bf16.msra.mxu0 0
    %2187 = vmatprep.subr.bf16.mxu0 0
    %2188 = vmatpush1.bf16.msra.mxu0 0
    %2189 = vmatprep.subr.bf16.mxu0 0
    %2190 = vmatpush1.bf16.msra.mxu0 0
    %2191 = vmatprep.subr.bf16.mxu0 0
    %2192 = vmatpush1.bf16.msra.mxu0 0
    %2193 = vmatprep.subr.bf16.mxu0 0
    %2194 = vmatpush1.bf16.msra.mxu0 0
    %2195 = vmatprep.subr.bf16.mxu0 0
    %2196 = vmatpush1.bf16.msra.mxu0 0
    %2197 = vmatprep.mubr.bf16.mxu0 0
    %2198 = vmatmul.mubr.bf16.gmra.mrb[0].mxu0 %v2123
    %v2199 = vpop.f32.mrb[0].mxu0
    %v2200 = vadd.f32 0.0, %v2199
    %v2201 = vpop.f32.mrb[0].mxu0
    %v2202 = vadd.f32 0.0, %v2201
    %v2203 = vpop.f32.mrb[0].mxu0
    %v2204 = vpop.f32.mrb[0].mxu0
    %2205 = vdwg.mxu0
    %v2206 = vadd.f32 %v1596, %v2159
    %v2207 = vadd.f32 %v1598, %v2161
    %v2208 = vadd.f32 %v1669, %v2200
    %v2209 = vadd.f32 %v1671, %v2202
    %v2210 = vxor.u32 %v2206, 2147483648
    %v2211 = vxor.u32 %v2207, 2147483648
    %v2212 = vxor.u32 %v2208, 2147483648
    %v2213 = vmul.f32 %v2210, 1.442695
    %v2214 = vpow.pop %v2213
    %v2215 = vmul.f32 %v2211, 1.442695
    %v2216 = vpow.pop %v2215
    %v2217 = vmul.f32 %v2212, 1.442695
    %v2218 = vpow.pop %v2217
    %v2219 = vadd.f32 %v2214, 1.0
    %v2220 = vadd.f32 %v2216, 1.0
    %v2221 = vadd.f32 %v2218, 1.0
    %v2222 = vrcp.pop %v2219
    %v2223 = vmul.f32 1.0, %v2222
    %v2224 = vrcp.pop %v2220
    %v2225 = vmul.f32 1.0, %v2224
    %v2226 = vrcp.pop %v2221
    %v2227 = vmul.f32 1.0, %v2226
    %v2228 = vtanh.pop %v2209
    %v2229 = vmul.f32 %v2225, %v2120
    %v2230 = vmul.f32 %v2223, %v2228
    %v2231 = vadd.f32 %v2229, %v2230
    %v2232 = vtanh.pop %v2231
    %v2233 = vmul.f32 %v2227, %v2232
    %v2234 = vpack.c.bf16 %v2233, %v2233
    %2235 = vmatprep.subr.bf16.mxu0 %v1839
    %2236 = vmatpush1.bf16.msra.mxu0 %v1838
    %2237 = vmatprep.subr.bf16.mxu0 %v1843
    %2238 = vmatpush1.bf16.msra.mxu0 %v1842
    %2239 = vmatprep.subr.bf16.mxu0 %v1847
    %2240 = vmatpush1.bf16.msra.mxu0 %v1846
    %2241 = vmatprep.subr.bf16.mxu0 %v1851
    %2242 = vmatpush1.bf16.msra.mxu0 %v1850
    %2243 = vmatprep.subr.bf16.mxu0 %v1855
    %2244 = vmatpush1.bf16.msra.mxu0 %v1854
    %2245 = vmatprep.subr.bf16.mxu0 %v1859
    %2246 = vmatpush1.bf16.msra.mxu0 %v1858
    %2247 = vmatprep.subr.bf16.mxu0 %v1863
    %2248 = vmatpush1.bf16.msra.mxu0 %v1862
    %2249 = vmatprep.subr.bf16.mxu0 %v1867
    %2250 = vmatpush1.bf16.msra.mxu0 %v1866
    %2251 = vmatprep.subr.bf16.mxu0 0
    %2252 = vmatpush1.bf16.msra.mxu0 0
    %2253 = vmatprep.subr.bf16.mxu0 0
    %2254 = vmatpush1.bf16.msra.mxu0 0
    %2255 = vmatprep.subr.bf16.mxu0 0
    %2256 = vmatpush1.bf16.msra.mxu0 0
    %2257 = vmatprep.subr.bf16.mxu0 0
    %2258 = vmatpush1.bf16.msra.mxu0 0
    %2259 = vmatprep.subr.bf16.mxu0 0
    %2260 = vmatpush1.bf16.msra.mxu0 0
    %2261 = vmatprep.subr.bf16.mxu0 0
    %2262 = vmatpush1.bf16.msra.mxu0 0
    %2263 = vmatprep.subr.bf16.mxu0 0
    %2264 = vmatpush1.bf16.msra.mxu0 0
    %2265 = vmatprep.subr.bf16.mxu0 0
    %2266 = vmatpush1.bf16.msra.mxu0 0
    %2267 = vmatprep.mubr.bf16.mxu0 0
    %2268 = vmatmul.mubr.bf16.gmra.mrb[0].mxu0 %v2234
    %v2269 = vpop.f32.mrb[0].mxu0
    %v2270 = vadd.f32 0.0, %v2269
    %v2271 = vpop.f32.mrb[0].mxu0
    %v2272 = vadd.f32 0.0, %v2271
    %v2273 = vpop.f32.mrb[0].mxu0
    %v2274 = vpop.f32.mrb[0].mxu0
    %2275 = vdwg.mxu0
    %2276 = vmatprep.subr.bf16.mxu0 %v1841
    %2277 = vmatpush1.bf16.msra.mxu0 %v1840
    %2278 = vmatprep.subr.bf16.mxu0 %v1845
    %2279 = vmatpush1.bf16.msra.mxu0 %v1844
    %2280 = vmatprep.subr.bf16.mxu0 %v1849
    %2281 = vmatpush1.bf16.msra.mxu0 %v1848
    %2282 = vmatprep.subr.bf16.mxu0 %v1853
    %2283 = vmatpush1.bf16.msra.mxu0 %v1852
    %2284 = vmatprep.subr.bf16.mxu0 %v1857
    %2285 = vmatpush1.bf16.msra.mxu0 %v1856
    %2286 = vmatprep.subr.bf16.mxu0 %v1861
    %2287 = vmatpush1.bf16.msra.mxu0 %v1860
    %2288 = vmatprep.subr.bf16.mxu0 %v1865
    %2289 = vmatpush1.bf16.msra.mxu0 %v1864
    %2290 = vmatprep.subr.bf16.mxu0 %v1869
    %2291 = vmatpush1.bf16.msra.mxu0 %v1868
    %2292 = vmatprep.subr.bf16.mxu0 0
    %2293 = vmatpush1.bf16.msra.mxu0 0
    %2294 = vmatprep.subr.bf16.mxu0 0
    %2295 = vmatpush1.bf16.msra.mxu0 0
    %2296 = vmatprep.subr.bf16.mxu0 0
    %2297 = vmatpush1.bf16.msra.mxu0 0
    %2298 = vmatprep.subr.bf16.mxu0 0
    %2299 = vmatpush1.bf16.msra.mxu0 0
    %2300 = vmatprep.subr.bf16.mxu0 0
    %2301 = vmatpush1.bf16.msra.mxu0 0
    %2302 = vmatprep.subr.bf16.mxu0 0
    %2303 = vmatpush1.bf16.msra.mxu0 0
    %2304 = vmatprep.subr.bf16.mxu0 0
    %2305 = vmatpush1.bf16.msra.mxu0 0
    %2306 = vmatprep.subr.bf16.mxu0 0
    %2307 = vmatpush1.bf16.msra.mxu0 0
    %2308 = vmatprep.mubr.bf16.mxu0 0
    %2309 = vmatmul.mubr.bf16.gmra.mrb[0].mxu0 %v2234
    %v2310 = vpop.f32.mrb[0].mxu0
    %v2311 = vadd.f32 0.0, %v2310
    %v2312 = vpop.f32.mrb[0].mxu0
    %v2313 = vadd.f32 0.0, %v2312
    %v2314 = vpop.f32.mrb[0].mxu0
    %v2315 = vpop.f32.mrb[0].mxu0
    %2316 = vdwg.mxu0
    %v2317 = vadd.f32 %v1602, %v2270
    %v2318 = vadd.f32 %v1604, %v2272
    %v2319 = vadd.f32 %v1675, %v2311
    %v2320 = vadd.f32 %v1677, %v2313
    %v2321 = vxor.u32 %v2317, 2147483648
    %v2322 = vxor.u32 %v2318, 2147483648
    %v2323 = vxor.u32 %v2319, 2147483648
    %v2324 = vmul.f32 %v2321, 1.442695
    %v2325 = vpow.pop %v2324
    %v2326 = vmul.f32 %v2322, 1.442695
    %v2327 = vpow.pop %v2326
    %v2328 = vmul.f32 %v2323, 1.442695
    %v2329 = vpow.pop %v2328
    %v2330 = vadd.f32 %v2325, 1.0
    %v2331 = vadd.f32 %v2327, 1.0
    %v2332 = vadd.f32 %v2329, 1.0
    %v2333 = vrcp.pop %v2330
    %v2334 = vmul.f32 1.0, %v2333
    %v2335 = vrcp.pop %v2331
    %v2336 = vmul.f32 1.0, %v2335
    %v2337 = vrcp.pop %v2332
    %v2338 = vmul.f32 1.0, %v2337
    %v2339 = vtanh.pop %v2320
    %v2340 = vmul.f32 %v2336, %v2231
    %v2341 = vmul.f32 %v2334, %v2339
    %v2342 = vadd.f32 %v2340, %v2341
    %v2343 = vtanh.pop %v2342
    %v2344 = vmul.f32 %v2338, %v2343
    %v2345 = vpack.c.bf16 %v2344, %v2344
    %2346 = vmatprep.subr.bf16.mxu0 %v1839
    %2347 = vmatpush1.bf16.msra.mxu0 %v1838
    %2348 = vmatprep.subr.bf16.mxu0 %v1843
    %2349 = vmatpush1.bf16.msra.mxu0 %v1842
    %2350 = vmatprep.subr.bf16.mxu0 %v1847
    %2351 = vmatpush1.bf16.msra.mxu0 %v1846
    %2352 = vmatprep.subr.bf16.mxu0 %v1851
    %2353 = vmatpush1.bf16.msra.mxu0 %v1850
    %2354 = vmatprep.subr.bf16.mxu0 %v1855
    %2355 = vmatpush1.bf16.msra.mxu0 %v1854
    %2356 = vmatprep.subr.bf16.mxu0 %v1859
    %2357 = vmatpush1.bf16.msra.mxu0 %v1858
    %2358 = vmatprep.subr.bf16.mxu0 %v1863
    %2359 = vmatpush1.bf16.msra.mxu0 %v1862
    %2360 = vmatprep.subr.bf16.mxu0 %v1867
    %2361 = vmatpush1.bf16.msra.mxu0 %v1866
    %2362 = vmatprep.subr.bf16.mxu0 0
    %2363 = vmatpush1.bf16.msra.mxu0 0
    %2364 = vmatprep.subr.bf16.mxu0 0
    %2365 = vmatpush1.bf16.msra.mxu0 0
    %2366 = vmatprep.subr.bf16.mxu0 0
    %2367 = vmatpush1.bf16.msra.mxu0 0
    %2368 = vmatprep.subr.bf16.mxu0 0
    %2369 = vmatpush1.bf16.msra.mxu0 0
    %2370 = vmatprep.subr.bf16.mxu0 0
    %2371 = vmatpush1.bf16.msra.mxu0 0
    %2372 = vmatprep.subr.bf16.mxu0 0
    %2373 = vmatpush1.bf16.msra.mxu0 0
    %2374 = vmatprep.subr.bf16.mxu0 0
    %2375 = vmatpush1.bf16.msra.mxu0 0
    %2376 = vmatprep.subr.bf16.mxu0 0
    %2377 = vmatpush1.bf16.msra.mxu0 0
    %2378 = vmatprep.mubr.bf16.mxu0 0
    %2379 = vmatmul.mubr.bf16.gmra.mrb[0].mxu0 %v2345
    %v2380 = vpop.f32.mrb[0].mxu0
    %v2381 = vadd.f32 0.0, %v2380
    %v2382 = vpop.f32.mrb[0].mxu0
    %v2383 = vadd.f32 0.0, %v2382
    %v2384 = vpop.f32.mrb[0].mxu0
    %v2385 = vpop.f32.mrb[0].mxu0
    %2386 = vdwg.mxu0
    %2387 = vmatprep.subr.bf16.mxu0 %v1841
    %2388 = vmatpush1.bf16.msra.mxu0 %v1840
    %2389 = vmatprep.subr.bf16.mxu0 %v1845
    %2390 = vmatpush1.bf16.msra.mxu0 %v1844
    %2391 = vmatprep.subr.bf16.mxu0 %v1849
    %2392 = vmatpush1.bf16.msra.mxu0 %v1848
    %2393 = vmatprep.subr.bf16.mxu0 %v1853
    %2394 = vmatpush1.bf16.msra.mxu0 %v1852
    %2395 = vmatprep.subr.bf16.mxu0 %v1857
    %2396 = vmatpush1.bf16.msra.mxu0 %v1856
    %2397 = vmatprep.subr.bf16.mxu0 %v1861
    %2398 = vmatpush1.bf16.msra.mxu0 %v1860
    %2399 = vmatprep.subr.bf16.mxu0 %v1865
    %2400 = vmatpush1.bf16.msra.mxu0 %v1864
    %2401 = vmatprep.subr.bf16.mxu0 %v1869
    %2402 = vmatpush1.bf16.msra.mxu0 %v1868
    %2403 = vmatprep.subr.bf16.mxu0 0
    %2404 = vmatpush1.bf16.msra.mxu0 0
    %2405 = vmatprep.subr.bf16.mxu0 0
    %2406 = vmatpush1.bf16.msra.mxu0 0
    %2407 = vmatprep.subr.bf16.mxu0 0
    %2408 = vmatpush1.bf16.msra.mxu0 0
    %2409 = vmatprep.subr.bf16.mxu0 0
    %2410 = vmatpush1.bf16.msra.mxu0 0
    %2411 = vmatprep.subr.bf16.mxu0 0
    %2412 = vmatpush1.bf16.msra.mxu0 0
    %2413 = vmatprep.subr.bf16.mxu0 0
    %2414 = vmatpush1.bf16.msra.mxu0 0
    %2415 = vmatprep.subr.bf16.mxu0 0
    %2416 = vmatpush1.bf16.msra.mxu0 0
    %2417 = vmatprep.subr.bf16.mxu0 0
    %2418 = vmatpush1.bf16.msra.mxu0 0
    %2419 = vmatprep.mubr.bf16.mxu0 0
    %2420 = vmatmul.mubr.bf16.gmra.mrb[0].mxu0 %v2345
    %v2421 = vpop.f32.mrb[0].mxu0
    %v2422 = vadd.f32 0.0, %v2421
    %v2423 = vpop.f32.mrb[0].mxu0
    %v2424 = vadd.f32 0.0, %v2423
    %v2425 = vpop.f32.mrb[0].mxu0
    %v2426 = vpop.f32.mrb[0].mxu0
    %2427 = vdwg.mxu0
    %v2428 = vadd.f32 %v1606, %v2381
    %v2429 = vadd.f32 %v1608, %v2383
    %v2430 = vadd.f32 %v1679, %v2422
    %v2431 = vadd.f32 %v1681, %v2424
    %v2432 = vxor.u32 %v2428, 2147483648
    %v2433 = vxor.u32 %v2429, 2147483648
    %v2434 = vxor.u32 %v2430, 2147483648
    %v2435 = vmul.f32 %v2432, 1.442695
    %v2436 = vpow.pop %v2435
    %v2437 = vmul.f32 %v2433, 1.442695
    %v2438 = vpow.pop %v2437
    %v2439 = vmul.f32 %v2434, 1.442695
    %v2440 = vpow.pop %v2439
    %v2441 = vadd.f32 %v2436, 1.0
    %v2442 = vadd.f32 %v2438, 1.0
    %v2443 = vadd.f32 %v2440, 1.0
    %v2444 = vrcp.pop %v2441
    %v2445 = vmul.f32 1.0, %v2444
    %v2446 = vrcp.pop %v2442
    %v2447 = vmul.f32 1.0, %v2446
    %v2448 = vrcp.pop %v2443
    %v2449 = vmul.f32 1.0, %v2448
    %v2450 = vtanh.pop %v2431
    %v2451 = vmul.f32 %v2447, %v2342
    %v2452 = vmul.f32 %v2445, %v2450
    %v2453 = vadd.f32 %v2451, %v2452
    %v2454 = vtanh.pop %v2453
    %v2455 = vmul.f32 %v2449, %v2454
    %v2456 = vpack.c.bf16 %v2455, %v2455
    %2457 = vmatprep.subr.bf16.mxu0 %v1839
    %2458 = vmatpush1.bf16.msra.mxu0 %v1838
    %2459 = vmatprep.subr.bf16.mxu0 %v1843
    %2460 = vmatpush1.bf16.msra.mxu0 %v1842
    %2461 = vmatprep.subr.bf16.mxu0 %v1847
    %2462 = vmatpush1.bf16.msra.mxu0 %v1846
    %2463 = vmatprep.subr.bf16.mxu0 %v1851
    %2464 = vmatpush1.bf16.msra.mxu0 %v1850
    %2465 = vmatprep.subr.bf16.mxu0 %v1855
    %2466 = vmatpush1.bf16.msra.mxu0 %v1854
    %2467 = vmatprep.subr.bf16.mxu0 %v1859
    %2468 = vmatpush1.bf16.msra.mxu0 %v1858
    %2469 = vmatprep.subr.bf16.mxu0 %v1863
    %2470 = vmatpush1.bf16.msra.mxu0 %v1862
    %2471 = vmatprep.subr.bf16.mxu0 %v1867
    %2472 = vmatpush1.bf16.msra.mxu0 %v1866
    %2473 = vmatprep.subr.bf16.mxu0 0
    %2474 = vmatpush1.bf16.msra.mxu0 0
    %2475 = vmatprep.subr.bf16.mxu0 0
    %2476 = vmatpush1.bf16.msra.mxu0 0
    %2477 = vmatprep.subr.bf16.mxu0 0
    %2478 = vmatpush1.bf16.msra.mxu0 0
    %2479 = vmatprep.subr.bf16.mxu0 0
    %2480 = vmatpush1.bf16.msra.mxu0 0
    %2481 = vmatprep.subr.bf16.mxu0 0
    %2482 = vmatpush1.bf16.msra.mxu0 0
    %2483 = vmatprep.subr.bf16.mxu0 0
    %2484 = vmatpush1.bf16.msra.mxu0 0
    %2485 = vmatprep.subr.bf16.mxu0 0
    %2486 = vmatpush1.bf16.msra.mxu0 0
    %2487 = vmatprep.subr.bf16.mxu0 0
    %2488 = vmatpush1.bf16.msra.mxu0 0
    %2489 = vmatprep.mubr.bf16.mxu0 0
    %2490 = vmatmul.mubr.bf16.gmra.mrb[0].mxu0 %v2456
    %v2491 = vpop.f32.mrb[0].mxu0
    %v2492 = vadd.f32 0.0, %v2491
    %v2493 = vpop.f32.mrb[0].mxu0
    %v2494 = vadd.f32 0.0, %v2493
    %v2495 = vpop.f32.mrb[0].mxu0
    %v2496 = vpop.f32.mrb[0].mxu0
    %2497 = vdwg.mxu0
    %2498 = vmatprep.subr.bf16.mxu0 %v1841
    %2499 = vmatpush1.bf16.msra.mxu0 %v1840
    %2500 = vmatprep.subr.bf16.mxu0 %v1845
    %2501 = vmatpush1.bf16.msra.mxu0 %v1844
    %2502 = vmatprep.subr.bf16.mxu0 %v1849
    %2503 = vmatpush1.bf16.msra.mxu0 %v1848
    %2504 = vmatprep.subr.bf16.mxu0 %v1853
    %2505 = vmatpush1.bf16.msra.mxu0 %v1852
    %2506 = vmatprep.subr.bf16.mxu0 %v1857
    %2507 = vmatpush1.bf16.msra.mxu0 %v1856
    %2508 = vmatprep.subr.bf16.mxu0 %v1861
    %2509 = vmatpush1.bf16.msra.mxu0 %v1860
    %2510 = vmatprep.subr.bf16.mxu0 %v1865
    %2511 = vmatpush1.bf16.msra.mxu0 %v1864
    %2512 = vmatprep.subr.bf16.mxu0 %v1869
    %2513 = vmatpush1.bf16.msra.mxu0 %v1868
    %2514 = vmatprep.subr.bf16.mxu0 0
    %2515 = vmatpush1.bf16.msra.mxu0 0
    %2516 = vmatprep.subr.bf16.mxu0 0
    %2517 = vmatpush1.bf16.msra.mxu0 0
    %2518 = vmatprep.subr.bf16.mxu0 0
    %2519 = vmatpush1.bf16.msra.mxu0 0
    %2520 = vmatprep.subr.bf16.mxu0 0
    %2521 = vmatpush1.bf16.msra.mxu0 0
    %2522 = vmatprep.subr.bf16.mxu0 0
    %2523 = vmatpush1.bf16.msra.mxu0 0
    %2524 = vmatprep.subr.bf16.mxu0 0
    %2525 = vmatpush1.bf16.msra.mxu0 0
    %2526 = vmatprep.subr.bf16.mxu0 0
    %2527 = vmatpush1.bf16.msra.mxu0 0
    %2528 = vmatprep.subr.bf16.mxu0 0
    %2529 = vmatpush1.bf16.msra.mxu0 0
    %2530 = vmatprep.mubr.bf16.mxu0 0
    %2531 = vmatmul.mubr.bf16.gmra.mrb[0].mxu0 %v2456
    %v2532 = vpop.f32.mrb[0].mxu0
    %v2533 = vadd.f32 0.0, %v2532
    %v2534 = vpop.f32.mrb[0].mxu0
    %v2535 = vadd.f32 0.0, %v2534
    %v2536 = vpop.f32.mrb[0].mxu0
    %v2537 = vpop.f32.mrb[0].mxu0
    %2538 = vdwg.mxu0
    %v2539 = vadd.f32 %v1612, %v2492
    %v2540 = vadd.f32 %v1614, %v2494
    %v2541 = vadd.f32 %v1685, %v2533
    %v2542 = vadd.f32 %v1687, %v2535
    %v2543 = vxor.u32 %v2539, 2147483648
    %v2544 = vxor.u32 %v2540, 2147483648
    %v2545 = vxor.u32 %v2541, 2147483648
    %v2546 = vmul.f32 %v2543, 1.442695
    %v2547 = vpow.pop %v2546
    %v2548 = vmul.f32 %v2544, 1.442695
    %v2549 = vpow.pop %v2548
    %v2550 = vmul.f32 %v2545, 1.442695
    %v2551 = vpow.pop %v2550
    %v2552 = vadd.f32 %v2547, 1.0
    %v2553 = vadd.f32 %v2549, 1.0
    %v2554 = vadd.f32 %v2551, 1.0
    %v2555 = vrcp.pop %v2552
    %v2556 = vmul.f32 1.0, %v2555
    %v2557 = vrcp.pop %v2553
    %v2558 = vmul.f32 1.0, %v2557
    %v2559 = vrcp.pop %v2554
    %v2560 = vmul.f32 1.0, %v2559
    %v2561 = vtanh.pop %v2542
    %v2562 = vmul.f32 %v2558, %v2453
    %v2563 = vmul.f32 %v2556, %v2561
    %v2564 = vadd.f32 %v2562, %v2563
    %v2565 = vtanh.pop %v2564
    %v2566 = vmul.f32 %v2560, %v2565
    %v2567 = vpack.c.bf16 %v2566, %v2566
    %2568 = vmatprep.subr.bf16.mxu0 %v1839
    %2569 = vmatpush1.bf16.msra.mxu0 %v1838
    %2570 = vmatprep.subr.bf16.mxu0 %v1843
    %2571 = vmatpush1.bf16.msra.mxu0 %v1842
    %2572 = vmatprep.subr.bf16.mxu0 %v1847
    %2573 = vmatpush1.bf16.msra.mxu0 %v1846
    %2574 = vmatprep.subr.bf16.mxu0 %v1851
    %2575 = vmatpush1.bf16.msra.mxu0 %v1850
    %2576 = vmatprep.subr.bf16.mxu0 %v1855
    %2577 = vmatpush1.bf16.msra.mxu0 %v1854
    %2578 = vmatprep.subr.bf16.mxu0 %v1859
    %2579 = vmatpush1.bf16.msra.mxu0 %v1858
    %2580 = vmatprep.subr.bf16.mxu0 %v1863
    %2581 = vmatpush1.bf16.msra.mxu0 %v1862
    %2582 = vmatprep.subr.bf16.mxu0 %v1867
    %2583 = vmatpush1.bf16.msra.mxu0 %v1866
    %2584 = vmatprep.subr.bf16.mxu0 0
    %2585 = vmatpush1.bf16.msra.mxu0 0
    %2586 = vmatprep.subr.bf16.mxu0 0
    %2587 = vmatpush1.bf16.msra.mxu0 0
    %2588 = vmatprep.subr.bf16.mxu0 0
    %2589 = vmatpush1.bf16.msra.mxu0 0
    %2590 = vmatprep.subr.bf16.mxu0 0
    %2591 = vmatpush1.bf16.msra.mxu0 0
    %2592 = vmatprep.subr.bf16.mxu0 0
    %2593 = vmatpush1.bf16.msra.mxu0 0
    %2594 = vmatprep.subr.bf16.mxu0 0
    %2595 = vmatpush1.bf16.msra.mxu0 0
    %2596 = vmatprep.subr.bf16.mxu0 0
    %2597 = vmatpush1.bf16.msra.mxu0 0
    %2598 = vmatprep.subr.bf16.mxu0 0
    %2599 = vmatpush1.bf16.msra.mxu0 0
    %2600 = vmatprep.mubr.bf16.mxu0 0
    %2601 = vmatmul.mubr.bf16.gmra.mrb[0].mxu0 %v2567
    %v2602 = vpop.f32.mrb[0].mxu0
    %v2603 = vadd.f32 0.0, %v2602
    %v2604 = vpop.f32.mrb[0].mxu0
    %v2605 = vadd.f32 0.0, %v2604
    %v2606 = vpop.f32.mrb[0].mxu0
    %v2607 = vpop.f32.mrb[0].mxu0
    %2608 = vdwg.mxu0
    %2609 = vmatprep.subr.bf16.mxu0 %v1841
    %2610 = vmatpush1.bf16.msra.mxu0 %v1840
    %2611 = vmatprep.subr.bf16.mxu0 %v1845
    %2612 = vmatpush1.bf16.msra.mxu0 %v1844
    %2613 = vmatprep.subr.bf16.mxu0 %v1849
    %2614 = vmatpush1.bf16.msra.mxu0 %v1848
    %2615 = vmatprep.subr.bf16.mxu0 %v1853
    %2616 = vmatpush1.bf16.msra.mxu0 %v1852
    %2617 = vmatprep.subr.bf16.mxu0 %v1857
    %2618 = vmatpush1.bf16.msra.mxu0 %v1856
    %2619 = vmatprep.subr.bf16.mxu0 %v1861
    %2620 = vmatpush1.bf16.msra.mxu0 %v1860
    %2621 = vmatprep.subr.bf16.mxu0 %v1865
    %2622 = vmatpush1.bf16.msra.mxu0 %v1864
    %2623 = vmatprep.subr.bf16.mxu0 %v1869
    %2624 = vmatpush1.bf16.msra.mxu0 %v1868
    %2625 = vmatprep.subr.bf16.mxu0 0
    %2626 = vmatpush1.bf16.msra.mxu0 0
    %2627 = vmatprep.subr.bf16.mxu0 0
    %2628 = vmatpush1.bf16.msra.mxu0 0
    %2629 = vmatprep.subr.bf16.mxu0 0
    %2630 = vmatpush1.bf16.msra.mxu0 0
    %2631 = vmatprep.subr.bf16.mxu0 0
    %2632 = vmatpush1.bf16.msra.mxu0 0
    %2633 = vmatprep.subr.bf16.mxu0 0
    %2634 = vmatpush1.bf16.msra.mxu0 0
    %2635 = vmatprep.subr.bf16.mxu0 0
    %2636 = vmatpush1.bf16.msra.mxu0 0
    %2637 = vmatprep.subr.bf16.mxu0 0
    %2638 = vmatpush1.bf16.msra.mxu0 0
    %2639 = vmatprep.subr.bf16.mxu0 0
    %2640 = vmatpush1.bf16.msra.mxu0 0
    %2641 = vmatprep.mubr.bf16.mxu0 0
    %2642 = vmatmul.mubr.bf16.gmra.mrb[0].mxu0 %v2567
    %v2643 = vpop.f32.mrb[0].mxu0
    %v2644 = vadd.f32 0.0, %v2643
    %v2645 = vpop.f32.mrb[0].mxu0
    %v2646 = vadd.f32 0.0, %v2645
    %v2647 = vpop.f32.mrb[0].mxu0
    %v2648 = vpop.f32.mrb[0].mxu0
    %2649 = vdwg.mxu0
    %v2650 = vadd.f32 %v1616, %v2603
    %v2651 = vadd.f32 %v1618, %v2605
    %v2652 = vadd.f32 %v1689, %v2644
    %v2653 = vadd.f32 %v1691, %v2646
    %v2654 = vxor.u32 %v2650, 2147483648
    %v2655 = vxor.u32 %v2651, 2147483648
    %v2656 = vxor.u32 %v2652, 2147483648
    %v2657 = vmul.f32 %v2654, 1.442695
    %v2658 = vpow.pop %v2657
    %v2659 = vmul.f32 %v2655, 1.442695
    %v2660 = vpow.pop %v2659
    %v2661 = vmul.f32 %v2656, 1.442695
    %v2662 = vpow.pop %v2661
    %v2663 = vadd.f32 %v2658, 1.0
    %v2664 = vadd.f32 %v2660, 1.0
    %v2665 = vadd.f32 %v2662, 1.0
    %v2666 = vrcp.pop %v2663
    %v2667 = vmul.f32 1.0, %v2666
    %v2668 = vrcp.pop %v2664
    %v2669 = vmul.f32 1.0, %v2668
    %v2670 = vrcp.pop %v2665
    %v2671 = vmul.f32 1.0, %v2670
    %v2672 = vtanh.pop %v2653
    %v2673 = vmul.f32 %v2669, %v2564
    %v2674 = vmul.f32 %v2667, %v2672
    %v2675 = vadd.f32 %v2673, %v2674
    %v2676 = vtanh.pop %v2675
    %v2677 = vmul.f32 %v2671, %v2676
    %s2678 = scalar_lea.vmem %s10, 8
    %2679 = vst [vmem:[%s2678] sm:$0xff] %v2677
    %s2680 = scalar_lea.vmem %s11, 8
    %2681 = vst [vmem:[%s2680] sm:$0xff] %v2675
    %v2682 = vpack.c.bf16 %v2677, %v2677
    %v2683 = vld [vmem:[%s7] sm:$0xf]
    %v2684 = vld [vmem:[%s7 + $0x4] sm:$0xf]
    %v2685 = vld [vmem:[%s7 + $0x8] sm:$0xf]
    %v2686 = vld [vmem:[%s7 + $0xc] sm:$0xf]
    %v2687 = vld [vmem:[%s7 + $0x10] sm:$0xf]
    %v2688 = vld [vmem:[%s7 + $0x14] sm:$0xf]
    %v2689 = vld [vmem:[%s7 + $0x18] sm:$0xf]
    %v2690 = vld [vmem:[%s7 + $0x1c] sm:$0xf]
    %v2691 = vld [vmem:[%s7 + $0x20] sm:$0xf]
    %v2692 = vld [vmem:[%s7 + $0x24] sm:$0xf]
    %v2693 = vld [vmem:[%s7 + $0x28] sm:$0xf]
    %v2694 = vld [vmem:[%s7 + $0x2c] sm:$0xf]
    %v2695 = vld [vmem:[%s7 + $0x30] sm:$0xf]
    %v2696 = vld [vmem:[%s7 + $0x34] sm:$0xf]
    %v2697 = vld [vmem:[%s7 + $0x38] sm:$0xf]
    %v2698 = vld [vmem:[%s7 + $0x3c] sm:$0xf]
    %v2699 = vld [vmem:[%s8] sm:$0x1]
    %v2701 = vlaneseq
    %v2702 = vshrl.u32 %v2701, 7
    %v2703 = vsub.s32 0, %v2702
    %v2704 = vrot.slane %v2699, %v2703
    %v2722 = vunpack.c.l.b16 %v2683
    %v2723 = vunpack.c.l.b16 %v2684
    %v2724 = vunpack.c.l.b16 %v2685
    %v2725 = vunpack.c.l.b16 %v2686
    %v2726 = vunpack.c.l.b16 %v2687
    %v2727 = vunpack.c.l.b16 %v2688
    %v2728 = vunpack.c.l.b16 %v2689
    %v2729 = vunpack.c.l.b16 %v2690
    %v2730 = vunpack.c.l.b16 %v2691
    %v2731 = vunpack.c.l.b16 %v2692
    %v2732 = vunpack.c.l.b16 %v2693
    %v2733 = vunpack.c.l.b16 %v2694
    %v2734 = vunpack.c.l.b16 %v2695
    %v2735 = vunpack.c.l.b16 %v2696
    %v2736 = vunpack.c.l.b16 %v2697
    %v2737 = vunpack.c.l.b16 %v2698
    %v2738 = vpack.c.b16 %v2723, %v2722
    %v2739 = vpack.c.b16 %v2725, %v2724
    %v2740 = vpack.c.b16 %v2727, %v2726
    %v2741 = vpack.c.b16 %v2729, %v2728
    %v2742 = vpack.c.b16 %v2731, %v2730
    %v2743 = vpack.c.b16 %v2733, %v2732
    %v2744 = vpack.c.b16 %v2735, %v2734
    %v2745 = vpack.c.b16 %v2737, %v2736
    %2754 = vmatprep.subr.bf16.mxu0 0
    %2755 = vmatpush1.bf16.msra.mxu0 %v2738
    %2756 = vmatprep.subr.bf16.mxu0 0
    %2757 = vmatpush1.bf16.msra.mxu0 %v2739
    %2758 = vmatprep.subr.bf16.mxu0 0
    %2759 = vmatpush1.bf16.msra.mxu0 %v2740
    %2760 = vmatprep.subr.bf16.mxu0 0
    %2761 = vmatpush1.bf16.msra.mxu0 %v2741
    %2762 = vmatprep.subr.bf16.mxu0 0
    %2763 = vmatpush1.bf16.msra.mxu0 %v2742
    %2764 = vmatprep.subr.bf16.mxu0 0
    %2765 = vmatpush1.bf16.msra.mxu0 %v2743
    %2766 = vmatprep.subr.bf16.mxu0 0
    %2767 = vmatpush1.bf16.msra.mxu0 %v2744
    %2768 = vmatprep.subr.bf16.mxu0 0
    %2769 = vmatpush1.bf16.msra.mxu0 %v2745
    %2770 = vmatprep.subr.bf16.mxu0 0
    %2771 = vmatpush1.bf16.msra.mxu0 0
    %2772 = vmatprep.subr.bf16.mxu0 0
    %2773 = vmatpush1.bf16.msra.mxu0 0
    %2774 = vmatprep.subr.bf16.mxu0 0
    %2775 = vmatpush1.bf16.msra.mxu0 0
    %2776 = vmatprep.subr.bf16.mxu0 0
    %2777 = vmatpush1.bf16.msra.mxu0 0
    %2778 = vmatprep.subr.bf16.mxu0 0
    %2779 = vmatpush1.bf16.msra.mxu0 0
    %2780 = vmatprep.subr.bf16.mxu0 0
    %2781 = vmatpush1.bf16.msra.mxu0 0
    %2782 = vmatprep.subr.bf16.mxu0 0
    %2783 = vmatpush1.bf16.msra.mxu0 0
    %2784 = vmatprep.subr.bf16.mxu0 0
    %2785 = vmatpush1.bf16.msra.mxu0 0
    %2786 = vmatprep.mubr.bf16.mxu0 0
    %2787 = vmatmul.mubr.bf16.gmra.mrb[0].mxu0 %v2682
    %v2788 = vpop.f32.mrb[0].mxu0
    %v2789 = vadd.f32 %v2704, %v2788
    %v2790 = vpop.f32.mrb[0].mxu0
    %v2791 = vpop.f32.mrb[0].mxu0
    %v2792 = vpop.f32.mrb[0].mxu0
    %2793 = vdwg.mxu0
    %2794 = vst [vmem:[%s9] sm:$0xff] %v2789
    // Predicated region
    $region54: #{_forward_full_impl.1} parent=1 // pred_check
      _
    $region55: #{_forward_full_impl.1} parent=1 // pred_check_branch
      %2796 = sbr.rel (0) target = $region57
    $region56: #{_forward_full_impl.1} parent=1 // pred_region
      _
    $region57: #{_forward_full_impl.1} parent=1 // pred_fallthru
      _
    // Predicated region
    $region58: #{_forward_full_impl.1} parent=1 // pred_check
      _
    $region59: #{_forward_full_impl.1} parent=1 // pred_check_branch
      %2798 = sbr.rel (0) target = $region61
    $region60: #{_forward_full_impl.1} parent=1 // pred_region
      _
    $region61: #{_forward_full_impl.1} parent=1 // pred_fallthru
      _
    // Predicated region
    $region62: #{_forward_full_impl.1} parent=1 // pred_check
      _
    $region63: #{_forward_full_impl.1} parent=1 // pred_check_branch
      %2800 = sbr.rel (0) target = $region65
    $region64: #{_forward_full_impl.1} parent=1 // pred_region
      _
    $region65: #{_forward_full_impl.1} parent=1 // pred_fallthru
      _
    // Predicated region
    $region66: #{_forward_full_impl.1} parent=1 // pred_check
      _
    $region67: #{_forward_full_impl.1} parent=1 // pred_check_branch
      %2802 = sbr.rel (0) target = $region69
    $region68: #{_forward_full_impl.1} parent=1 // pred_region
      _
    $region69: #{_forward_full_impl.1} parent=1 // pred_fallthru
      _
    // Predicated region
    $region70: #{_forward_full_impl.1} parent=1 // pred_check
      _
    $region71: #{_forward_full_impl.1} parent=1 // pred_check_branch
      %2804 = sbr.rel (0) target = $region73
    $region72: #{_forward_full_impl.1} parent=1 // pred_region
      _
    $region73: #{_forward_full_impl.1} parent=1 // pred_fallthru
      _
    // Predicated region
    $region74: #{_forward_full_impl.1} parent=1 // pred_check
      _
    $region75: #{_forward_full_impl.1} parent=1 // pred_check_branch
      %2806 = sbr.rel (0) target = $region77
    $region76: #{_forward_full_impl.1} parent=1 // pred_region
      _
    $region77: #{_forward_full_impl.1} parent=1 // pred_fallthru
      _
    %2807 = vsyncpa [#allocation4], 1
    %2808 = vsyncpa [#allocation6], 1
    %2809 = vsyncpa [#allocation9], 1

</llo_original>
